<compile_context>
chip_gen: v5e
topology: v5e:2x2
jax: 0.10.0
libtpu: 0.0.40
codegen_flags: <defaults>
</compile_context>

<pallas_src>
import functools

import jax
import jax.numpy as jnp
from jax.experimental import pallas as pl
from jax.experimental.pallas import tpu as pltpu


# ------------------------- padded (lane-dense) sizes -------------------------
C1_PAD = 128   # conv1 out channels 20  -> 128
C2_PAD = 128   # conv2 out channels 50  -> 128
K1_PAD = 32    # conv1 im2col K   25    -> 32
K2_PAD = 512   # conv2 im2col K   500   -> 512
F1_PAD = 512   # fc1 out          500   -> 512
NC_PAD = 128   # logits           nc    -> 128


def _round_up(a, b):
    return (a + b - 1) // b * b


# ------------------------------ Pallas kernels -------------------------------

def _conv_block_kernel(cols_ref, w_ref, b_ref, pool_ref, am_ref, *, eps):
    """Fused conv (im2col matmul) + bias + ReLU + 2x2 maxpool + attention map.

    cols_ref: (1, 4, Np, K)   4 = 2x2 pool-window element, Np = pooled positions
    w_ref:    (K, C)          lane-dense padded weights
    b_ref:    (1, C)
    pool_ref: (1, Np, C)      pooled feature map (padded channels stay 0)
    am_ref:   (1, Np, 1)      spatial attention map (L2-normalized over space)
    """
    Np = pool_ref.shape[1]
    K = w_ref.shape[0]

    cols = cols_ref[...].reshape(4 * Np, K)
    y = jnp.dot(cols, w_ref[...], preferred_element_type=jnp.float32)   # (4Np, C)
    y = jnp.maximum(y + b_ref[...], 0.0)                                # bias + ReLU

    # 2x2 max-pool == elementwise max over the 4 contiguous row blocks.
    p = jnp.maximum(jnp.maximum(y[0:Np], y[Np:2 * Np]),
                    jnp.maximum(y[2 * Np:3 * Np], y[3 * Np:4 * Np]))    # (Np, C)
    pool_ref[...] = p.reshape(pool_ref.shape).astype(pool_ref.dtype)

    # attention map: sum_c p^2 (p == 2, padded channels are zero), then divide by
    # the L2 norm over the spatial positions.
    am = jnp.sum(p * p, axis=-1, keepdims=True)                         # (Np, 1)
    nrm = jnp.sqrt(jnp.sum(am * am, axis=0, keepdims=True))             # (1, 1)
    am_ref[...] = (am / (nrm + eps)).reshape(am_ref.shape).astype(am_ref.dtype)


def conv_block_pallas(cols, w, b, *, eps=1e-6):
    """cols: (N, 4, Np, K); w: (K, C); b: (1, C) -> pooled (N, Np, C), am (N, Np, 1)."""
    N, _four, Np, K = cols.shape
    C = w.shape[1]
    kern = functools.partial(_conv_block_kernel, eps=eps)
    return pl.pallas_call(
        kern,
        grid=(N,),
        in_specs=[
            pl.BlockSpec((1, 4, Np, K), lambda n: (n, 0, 0, 0)),
            pl.BlockSpec((K, C), lambda n: (0, 0)),
            pl.BlockSpec((1, C), lambda n: (0, 0)),
        ],
        out_specs=(
            pl.BlockSpec((1, Np, C), lambda n: (n, 0, 0)),
            pl.BlockSpec((1, Np, 1), lambda n: (n, 0, 0)),
        ),
        out_shape=(
            jax.ShapeDtypeStruct((N, Np, C), jnp.float32),
            jax.ShapeDtypeStruct((N, Np, 1), jnp.float32),
        ),
        compiler_params=pltpu.CompilerParams(
            dimension_semantics=("parallel",),
            vmem_limit_bytes=32 * 1024 * 1024),
    )(cols, w, b)


def _linear_kernel(x_ref, w_ref, b_ref, o_ref, *, apply_relu):
    acc = jnp.dot(x_ref[...], w_ref[...], preferred_element_type=jnp.float32)
    acc = acc + b_ref[...]
    if apply_relu:
        acc = jnp.maximum(acc, 0.0)
    o_ref[...] = acc.astype(o_ref.dtype)


def linear_pallas(x, w, b, *, relu, tile_m=256):
    """relu?(x @ w + b). x:(M,K) w:(K,N) b:(1,N); K, N already lane-dense."""
    M, K = x.shape
    Kw, Nout = w.shape
    assert K == Kw and b.shape == (1, Nout)
    tm = min(tile_m, _round_up(M, 8))
    Mp = _round_up(M, tm)
    if Mp != M:
        x = jnp.pad(x, ((0, Mp - M), (0, 0)))
    kern = functools.partial(_linear_kernel, apply_relu=relu)
    out = pl.pallas_call(
        kern,
        grid=(Mp // tm,),
        in_specs=[
            pl.BlockSpec((tm, K), lambda i: (i, 0)),
            pl.BlockSpec((K, Nout), lambda i: (0, 0)),
            pl.BlockSpec((1, Nout), lambda i: (0, 0)),
        ],
        out_specs=pl.BlockSpec((tm, Nout), lambda i: (i, 0)),
        out_shape=jax.ShapeDtypeStruct((Mp, Nout), jnp.float32),
        compiler_params=pltpu.CompilerParams(
            dimension_semantics=("parallel",),
            vmem_limit_bytes=32 * 1024 * 1024),
    )(x, w, b)
    return out[:M]


# -------------------------------- host glue ----------------------------------

def im2col_pooled(x, kh=5, kw=5):
    """x: (N,H,W,C) NHWC -> cols (N, 4, Hp*Wp, C*kh*kw).

    Axis 1 indexes the 2x2 pool-window element e = dh*2+dw, axis 2 the pooled
    output position p = i*Wp + j, and features are ordered (c, kh, kw) to match
    PyTorch (Cout, Cin, KH, KW) weights flattened and transposed."""
    N, H, W, C = x.shape
    Ho, Wo = H - kh + 1, W - kw + 1
    Hp, Wp = Ho // 2, Wo // 2
    pats = jnp.stack([x[:, i:i + Ho, j:j + Wo, :] for i in range(kh) for j in range(kw)],
                     axis=-1)                                   # (N, Ho, Wo, C, kh*kw)
    pats = pats.reshape(N, Ho, Wo, C * kh * kw)
    pats = pats.reshape(N, Hp, 2, Wp, 2, C * kh * kw)           # (N, i, dh, j, dw, K)
    pats = pats.transpose(0, 2, 4, 1, 3, 5)                     # (N, dh, dw, i, j, K)
    return pats.reshape(N, 4, Hp * Wp, C * kh * kw), (Hp, Wp)


def init_raw_params(key, num_classes):
    """PyTorch-shaped parameters (used by the pure-JAX reference)."""
    ks = jax.random.split(key, 8)

    def nrm(k, shape, fan_in):
        return jax.random.normal(k, shape, dtype=jnp.float32) / jnp.sqrt(fan_in)

    return {
        "conv1_w": nrm(ks[0], (20, 1, 5, 5), 25.0),
        "conv1_b": nrm(ks[1], (20,), 25.0),
        "conv2_w": nrm(ks[2], (50, 20, 5, 5), 500.0),
        "conv2_b": nrm(ks[3], (50,), 500.0),
        "fc1_w": nrm(ks[4], (500, 800), 800.0),     # (out, in), in-order (c, h, w)
        "fc1_b": nrm(ks[5], (500,), 800.0),
        "fc2_w": nrm(ks[6], (num_classes, 500), 500.0),
        "fc2_b": nrm(ks[7], (num_classes,), 500.0),
    }


def prepare_params(R, num_classes):
    """Pad weights to lane-dense shapes; fold the NCHW flatten permutation into wf1."""
    w1 = R["conv1_w"].reshape(20, 25).T                            # (25, 20)
    w1 = jnp.pad(w1, ((0, K1_PAD - 25), (0, C1_PAD - 20)))          # (32, 128)
    b1 = jnp.pad(R["conv1_b"], (0, C1_PAD - 20)).reshape(1, C1_PAD)

    w2 = R["conv2_w"].reshape(50, 500).T                           # (500, 50)
    w2 = jnp.pad(w2, ((0, K2_PAD - 500), (0, C2_PAD - 50)))         # (512, 128)
    b2 = jnp.pad(R["conv2_b"], (0, C2_PAD - 50)).reshape(1, C2_PAD)

    # fc1: PyTorch input order is (c, h, w); our flat activation is (h, w, c_pad).
    wf1 = R["fc1_w"].T.reshape(50, 4, 4, 500)                      # (c, h, w, out)
    wf1 = jnp.transpose(wf1, (1, 2, 0, 3))                          # (h, w, c, out)
    wf1 = jnp.pad(wf1, ((0, 0), (0, 0), (0, C2_PAD - 50), (0, F1_PAD - 500)))
    wf1 = wf1.reshape(4 * 4 * C2_PAD, F1_PAD)                       # (2048, 512)
    bf1 = jnp.pad(R["fc1_b"], (0, F1_PAD - 500)).reshape(1, F1_PAD)

    wf2 = jnp.pad(R["fc2_w"].T, ((0, F1_PAD - 500), (0, NC_PAD - num_classes)))
    bf2 = jnp.pad(R["fc2_b"], (0, NC_PAD - num_classes)).reshape(1, NC_PAD)

    return {"w1": w1, "b1": b1, "w2": w2, "b2": b2,
            "wf1": wf1, "bf1": bf1, "wf2": wf2, "bf2": bf2}


def cnn_forward(x_nchw, P, num_classes, latent=False):
    N = x_nchw.shape[0]
    x = jnp.transpose(x_nchw, (0, 2, 3, 1))                        # (N, 28, 28, 1)

    # conv1 + relu + maxpool + attention map (single fused kernel)
    cols1, (h1, w1) = im2col_pooled(x)                             # (N, 4, 144, 25)
    cols1 = jnp.pad(cols1, ((0, 0), (0, 0), (0, 0), (0, K1_PAD - 25)))
    pool1, am1 = conv_block_pallas(cols1, P["w1"], P["b1"])        # (N,144,128),(N,144,1)
    am1 = am1.reshape(N, 1, h1, w1)                                # (N, 1, 12, 12)

    # conv2 + relu + maxpool + attention map
    x2 = pool1.reshape(N, h1, w1, C1_PAD)[..., :20]                # real 20 channels
    cols2, (h2, w2) = im2col_pooled(x2)                            # (N, 4, 16, 500)
    cols2 = jnp.pad(cols2, ((0, 0), (0, 0), (0, 0), (0, K2_PAD - 500)))
    pool2, am2 = conv_block_pallas(cols2, P["w2"], P["b2"])        # (N,16,128),(N,16,1)
    am2 = am2.reshape(N, 1, h2, w2)                                # (N, 1, 4, 4)

    # FC layers (flatten permutation already folded into wf1; padded dims are zero)
    flat = pool2.reshape(N, 4 * 4 * C2_PAD)                        # (N, 2048)
    f1 = linear_pallas(flat, P["wf1"], P["bf1"], relu=True)        # (N, 512)
    logits = linear_pallas(f1, P["wf2"], P["bf2"], relu=False)[:, :num_classes]

    if latent:
        return am1, am2, jnp.zeros([1]), jnp.zeros([1]), logits
    return logits


# ----------------------------- pure-JAX reference ----------------------------

def reference_forward(x_nchw, R, latent=False):
    dn = ("NCHW", "OIHW", "NCHW")

    def pool2(y):
        n, c, h, w = y.shape
        return jnp.max(y.reshape(n, c, h // 2, 2, w // 2, 2), axis=(3, 5))

    def attn(fm, p=2, eps=1e-6):
        am = jnp.sum(jnp.abs(fm) ** p, axis=1, keepdims=True)
        nrm = jnp.sqrt(jnp.sum(am * am, axis=(2, 3), keepdims=True))
        return am / (nrm + eps)

    y = jax.lax.conv_general_dilated(x_nchw, R["conv1_w"], (1, 1), "VALID",
                                     dimension_numbers=dn)
    y = jnp.maximum(y + R["conv1_b"][None, :, None, None], 0.0)
    y = pool2(y)
    am1 = attn(y)
    y = jax.lax.conv_general_dilated(y, R["conv2_w"], (1, 1), "VALID",
                                     dimension_numbers=dn)
    y = jnp.maximum(y + R["conv2_b"][None, :, None, None], 0.0)
    y = pool2(y)
    am2 = attn(y)
    flat = y.reshape(y.shape[0], 4 * 4 * 50)
    f1 = jnp.maximum(flat @ R["fc1_w"].T + R["fc1_b"], 0.0)
    logits = f1 @ R["fc2_w"].T + R["fc2_b"]
    if latent:
        return am1, am2, logits
    return logits


if __name__ == "__main__":
    num_classes = 10
    key = jax.random.PRNGKey(0)
    kx, kp = jax.random.split(key)
    # MNIST-shaped input: (batch=2, channels=1, 28, 28) — required by the 4*4*50 flatten.
    x = jax.random.normal(kx, (2, 1, 28, 28), dtype=jnp.float32)
    raw = init_raw_params(kp, num_classes)
    params = prepare_params(raw, num_classes)

    fwd = jax.jit(cnn_forward, static_argnames=("num_classes", "latent"))
    logits = jax.block_until_ready(fwd(x, params, num_classes=num_classes))
    assert logits.shape == (2, num_classes)
    assert bool(jnp.all(jnp.isfinite(logits)))

    ref_logits = reference_forward(x, raw)
    assert bool(jnp.allclose(logits, ref_logits, rtol=2e-2, atol=2e-2)), "logits mismatch"

    am1, am2, z1, z2, logits2 = fwd(x, params, num_classes=num_classes, latent=True)
    jax.block_until_ready((am1, am2, logits2))
    assert am1.shape == (2, 1, 12, 12) and am2.shape == (2, 1, 4, 4)
    ref_am1, ref_am2, _ = reference_forward(x, raw, latent=True)
    assert bool(jnp.allclose(am1, ref_am1, rtol=2e-2, atol=2e-2)), "am1 mismatch"
    assert bool(jnp.allclose(am2, ref_am2, rtol=2e-2, atol=2e-2)), "am2 mismatch"
    assert bool(jnp.allclose(logits2, ref_logits, rtol=2e-2, atol=2e-2))

    print("KERNEL_OK")
</pallas_src>

<mosaic_0001>
module attributes {stable_mosaic.version = 11 : i64} {
  func.func @_conv_block_kernel(%arg0: i32, %arg1: memref<1x4x144x32xf32, #tpu.memory_space<vmem>>, %arg2: memref<32x128xf32, #tpu.memory_space<vmem>>, %arg3: memref<1x128xf32, #tpu.memory_space<vmem>>, %arg4: memref<1x144x128xf32, #tpu.memory_space<vmem>>, %arg5: memref<1x144x1xf32, #tpu.memory_space<vmem>>) attributes {dimension_semantics = [#tpu.dimension_semantics<parallel>], iteration_bounds = array<i64: 2>, scalar_prefetch = 0 : i64, scratch_operands = 0 : i64, tpu.core_type = #tpu.core_type<tc>, window_params = [{transform_indices = @transform_0, window_bounds = array<i64: 1, 4, 144, 32>}, {pipeline_mode = #tpu.pipeline_mode<synchronous>, transform_indices = @transform_1, window_bounds = array<i64: 32, 128>}, {pipeline_mode = #tpu.pipeline_mode<synchronous>, transform_indices = @transform_2, window_bounds = array<i64: 1, 128>}, {transform_indices = @transform_3, window_bounds = array<i64: 1, 144, 128>}, {transform_indices = @transform_4, window_bounds = array<i64: 1, 144, 1>}]} {
    %c0 = arith.constant 0 : index
    %c0_0 = arith.constant 0 : index
    %c0_1 = arith.constant 0 : index
    %c0_2 = arith.constant 0 : index
    %0 = vector.load %arg1[%c0, %c0_0, %c0_1, %c0_2] : memref<1x4x144x32xf32, #tpu.memory_space<vmem>>, vector<1x4x144x32xf32>
    %1 = vector.shape_cast %0 : vector<1x4x144x32xf32> to vector<576x32xf32>
    %c0_3 = arith.constant 0 : index
    %c0_4 = arith.constant 0 : index
    %2 = vector.load %arg2[%c0_3, %c0_4] : memref<32x128xf32, #tpu.memory_space<vmem>>, vector<32x128xf32>
    %cst = arith.constant dense<0.000000e+00> : vector<576x128xf32>
    %3 = tpu.matmul %1, %2, %cst {dimension_numbers = #tpu.dot_dimension_numbers<[1], [0], [0], [1], [0, 0, 1, 1], [], []>} : vector<576x32xf32>, vector<32x128xf32>, vector<576x128xf32> -> vector<576x128xf32>
    %c0_5 = arith.constant 0 : index
    %c0_6 = arith.constant 0 : index
    %4 = vector.load %arg3[%c0_5, %c0_6] : memref<1x128xf32, #tpu.memory_space<vmem>>, vector<1x128xf32>
    %5 = vector.broadcast %4 : vector<1x128xf32> to vector<576x128xf32>
    %6 = arith.addf %3, %5 : vector<576x128xf32>
    %cst_7 = arith.constant 0.000000e+00 : f32
    %7 = vector.broadcast %cst_7 : f32 to vector<576x128xf32>
    %8 = arith.maximumf %6, %7 : vector<576x128xf32>
    %9 = vector.extract_strided_slice %8 {offsets = [0, 0], sizes = [144, 128], strides = [1, 1]} : vector<576x128xf32> to vector<144x128xf32>
    %10 = vector.extract_strided_slice %8 {offsets = [144, 0], sizes = [144, 128], strides = [1, 1]} : vector<576x128xf32> to vector<144x128xf32>
    %11 = arith.maximumf %9, %10 : vector<144x128xf32>
    %12 = vector.extract_strided_slice %8 {offsets = [288, 0], sizes = [144, 128], strides = [1, 1]} : vector<576x128xf32> to vector<144x128xf32>
    %13 = vector.extract_strided_slice %8 {offsets = [432, 0], sizes = [144, 128], strides = [1, 1]} : vector<576x128xf32> to vector<144x128xf32>
    %14 = arith.maximumf %12, %13 : vector<144x128xf32>
    %15 = arith.maximumf %11, %14 : vector<144x128xf32>
    %16 = vector.shape_cast %15 : vector<144x128xf32> to vector<1x144x128xf32>
    %c0_8 = arith.constant 0 : index
    %c0_9 = arith.constant 0 : index
    %c0_10 = arith.constant 0 : index
    %17 = vector.load %arg4[%c0_8, %c0_9, %c0_10] : memref<1x144x128xf32, #tpu.memory_space<vmem>>, vector<1x144x128xf32>
    tpu.vector_store %arg4[%c0_8, %c0_9, %c0_10], %16 {strides = array<i32>} : memref<1x144x128xf32, #tpu.memory_space<vmem>>, vector<1x144x128xf32>,
    %18 = arith.mulf %15, %15 : vector<144x128xf32>
    %cst_11 = arith.constant dense<0.000000e+00> : vector<144xf32>
    %19 = vector.multi_reduction <add>, %18, %cst_11 [1] : vector<144x128xf32> to vector<144xf32>
    %20 = vector.shape_cast %19 : vector<144xf32> to vector<144x1xf32>
    %21 = arith.mulf %20, %20 : vector<144x1xf32>
    %cst_12 = arith.constant dense<0.000000e+00> : vector<1xf32>
    %22 = vector.multi_reduction <add>, %21, %cst_12 [0] : vector<144x1xf32> to vector<1xf32>
    %23 = vector.shape_cast %22 : vector<1xf32> to vector<1x1xf32>
    %24 = math.sqrt %23 : vector<1x1xf32>
    %cst_13 = arith.constant 9.99999997E-7 : f32
    %25 = vector.broadcast %cst_13 : f32 to vector<1x1xf32>
    %26 = arith.addf %24, %25 : vector<1x1xf32>
    %27 = vector.broadcast %26 : vector<1x1xf32> to vector<144x1xf32>
    %28 = arith.divf %20, %27 : vector<144x1xf32>
    %29 = vector.shape_cast %28 : vector<144x1xf32> to vector<1x144x1xf32>
    %c0_14 = arith.constant 0 : index
    %c0_15 = arith.constant 0 : index
    %c0_16 = arith.constant 0 : index
    %30 = vector.load %arg5[%c0_14, %c0_15, %c0_16] : memref<1x144x1xf32, #tpu.memory_space<vmem>>, vector<1x144x1xf32>
    tpu.vector_store %arg5[%c0_14, %c0_15, %c0_16], %29 {strides = array<i32>} : memref<1x144x1xf32, #tpu.memory_space<vmem>>, vector<1x144x1xf32>,
    return
  }
  func.func @transform_0(%arg0: i32) -> (i32, i32, i32, i32) {
    %c0_i32 = arith.constant 0 : i32
    %c0_i32_0 = arith.constant 0 : i32
    %c0_i32_1 = arith.constant 0 : i32
    %c0_i32_2 = arith.constant 0 : i32
    return %arg0, %c0_i32, %c0_i32_0, %c0_i32_1 : i32, i32, i32, i32
  }
  func.func @transform_1(%arg0: i32) -> (i32, i32) {
    %c0_i32 = arith.constant 0 : i32
    %c0_i32_0 = arith.constant 0 : i32
    %c0_i32_1 = arith.constant 0 : i32
    return %c0_i32, %c0_i32_0 : i32, i32
  }
  func.func @transform_2(%arg0: i32) -> (i32, i32) {
    %c0_i32 = arith.constant 0 : i32
    %c0_i32_0 = arith.constant 0 : i32
    %c0_i32_1 = arith.constant 0 : i32
    return %c0_i32, %c0_i32_0 : i32, i32
  }
  func.func @transform_3(%arg0: i32) -> (i32, i32, i32) {
    %c0_i32 = arith.constant 0 : i32
    %c0_i32_0 = arith.constant 0 : i32
    %c0_i32_1 = arith.constant 0 : i32
    return %arg0, %c0_i32, %c0_i32_0 : i32, i32, i32
  }
  func.func @transform_4(%arg0: i32) -> (i32, i32, i32) {
    %c0_i32 = arith.constant 0 : i32
    %c0_i32_0 = arith.constant 0 : i32
    %c0_i32_1 = arith.constant 0 : i32
    return %arg0, %c0_i32, %c0_i32_0 : i32, i32, i32
  }
}

module attributes {stable_mosaic.version = 11 : i64} {
  func.func @_conv_block_kernel(%arg0: i32, %arg1: memref<1x4x16x512xf32, #tpu.memory_space<vmem>>, %arg2: memref<512x128xf32, #tpu.memory_space<vmem>>, %arg3: memref<1x128xf32, #tpu.memory_space<vmem>>, %arg4: memref<1x16x128xf32, #tpu.memory_space<vmem>>, %arg5: memref<1x16x1xf32, #tpu.memory_space<vmem>>) attributes {dimension_semantics = [#tpu.dimension_semantics<parallel>], iteration_bounds = array<i64: 2>, scalar_prefetch = 0 : i64, scratch_operands = 0 : i64, tpu.core_type = #tpu.core_type<tc>, window_params = [{transform_indices = @transform_0, window_bounds = array<i64: 1, 4, 16, 512>}, {pipeline_mode = #tpu.pipeline_mode<synchronous>, transform_indices = @transform_1, window_bounds = array<i64: 512, 128>}, {pipeline_mode = #tpu.pipeline_mode<synchronous>, transform_indices = @transform_2, window_bounds = array<i64: 1, 128>}, {transform_indices = @transform_3, window_bounds = array<i64: 1, 16, 128>}, {transform_indices = @transform_4, window_bounds = array<i64: 1, 16, 1>}]} {
    %c0 = arith.constant 0 : index
    %c0_0 = arith.constant 0 : index
    %c0_1 = arith.constant 0 : index
    %c0_2 = arith.constant 0 : index
    %0 = vector.load %arg1[%c0, %c0_0, %c0_1, %c0_2] : memref<1x4x16x512xf32, #tpu.memory_space<vmem>>, vector<1x4x16x512xf32>
    %1 = vector.shape_cast %0 : vector<1x4x16x512xf32> to vector<64x512xf32>
    %c0_3 = arith.constant 0 : index
    %c0_4 = arith.constant 0 : index
    %2 = vector.load %arg2[%c0_3, %c0_4] : memref<512x128xf32, #tpu.memory_space<vmem>>, vector<512x128xf32>
    %cst = arith.constant dense<0.000000e+00> : vector<64x128xf32>
    %3 = tpu.matmul %1, %2, %cst {dimension_numbers = #tpu.dot_dimension_numbers<[1], [0], [0], [1], [0, 0, 1, 1], [], []>} : vector<64x512xf32>, vector<512x128xf32>, vector<64x128xf32> -> vector<64x128xf32>
    %c0_5 = arith.constant 0 : index
    %c0_6 = arith.constant 0 : index
    %4 = vector.load %arg3[%c0_5, %c0_6] : memref<1x128xf32, #tpu.memory_space<vmem>>, vector<1x128xf32>
    %5 = vector.broadcast %4 : vector<1x128xf32> to vector<64x128xf32>
    %6 = arith.addf %3, %5 : vector<64x128xf32>
    %cst_7 = arith.constant 0.000000e+00 : f32
    %7 = vector.broadcast %cst_7 : f32 to vector<64x128xf32>
    %8 = arith.maximumf %6, %7 : vector<64x128xf32>
    %9 = vector.extract_strided_slice %8 {offsets = [0, 0], sizes = [16, 128], strides = [1, 1]} : vector<64x128xf32> to vector<16x128xf32>
    %10 = vector.extract_strided_slice %8 {offsets = [16, 0], sizes = [16, 128], strides = [1, 1]} : vector<64x128xf32> to vector<16x128xf32>
    %11 = arith.maximumf %9, %10 : vector<16x128xf32>
    %12 = vector.extract_strided_slice %8 {offsets = [32, 0], sizes = [16, 128], strides = [1, 1]} : vector<64x128xf32> to vector<16x128xf32>
    %13 = vector.extract_strided_slice %8 {offsets = [48, 0], sizes = [16, 128], strides = [1, 1]} : vector<64x128xf32> to vector<16x128xf32>
    %14 = arith.maximumf %12, %13 : vector<16x128xf32>
    %15 = arith.maximumf %11, %14 : vector<16x128xf32>
    %16 = vector.shape_cast %15 : vector<16x128xf32> to vector<1x16x128xf32>
    %c0_8 = arith.constant 0 : index
    %c0_9 = arith.constant 0 : index
    %c0_10 = arith.constant 0 : index
    %17 = vector.load %arg4[%c0_8, %c0_9, %c0_10] : memref<1x16x128xf32, #tpu.memory_space<vmem>>, vector<1x16x128xf32>
    tpu.vector_store %arg4[%c0_8, %c0_9, %c0_10], %16 {strides = array<i32>} : memref<1x16x128xf32, #tpu.memory_space<vmem>>, vector<1x16x128xf32>,
    %18 = arith.mulf %15, %15 : vector<16x128xf32>
    %cst_11 = arith.constant dense<0.000000e+00> : vector<16xf32>
    %19 = vector.multi_reduction <add>, %18, %cst_11 [1] : vector<16x128xf32> to vector<16xf32>
    %20 = vector.shape_cast %19 : vector<16xf32> to vector<16x1xf32>
    %21 = arith.mulf %20, %20 : vector<16x1xf32>
    %cst_12 = arith.constant dense<0.000000e+00> : vector<1xf32>
    %22 = vector.multi_reduction <add>, %21, %cst_12 [0] : vector<16x1xf32> to vector<1xf32>
    %23 = vector.shape_cast %22 : vector<1xf32> to vector<1x1xf32>
    %24 = math.sqrt %23 : vector<1x1xf32>
    %cst_13 = arith.constant 9.99999997E-7 : f32
    %25 = vector.broadcast %cst_13 : f32 to vector<1x1xf32>
    %26 = arith.addf %24, %25 : vector<1x1xf32>
    %27 = vector.broadcast %26 : vector<1x1xf32> to vector<16x1xf32>
    %28 = arith.divf %20, %27 : vector<16x1xf32>
    %29 = vector.shape_cast %28 : vector<16x1xf32> to vector<1x16x1xf32>
    %c0_14 = arith.constant 0 : index
    %c0_15 = arith.constant 0 : index
    %c0_16 = arith.constant 0 : index
    %30 = vector.load %arg5[%c0_14, %c0_15, %c0_16] : memref<1x16x1xf32, #tpu.memory_space<vmem>>, vector<1x16x1xf32>
    tpu.vector_store %arg5[%c0_14, %c0_15, %c0_16], %29 {strides = array<i32>} : memref<1x16x1xf32, #tpu.memory_space<vmem>>, vector<1x16x1xf32>,
    return
  }
  func.func @transform_0(%arg0: i32) -> (i32, i32, i32, i32) {
    %c0_i32 = arith.constant 0 : i32
    %c0_i32_0 = arith.constant 0 : i32
    %c0_i32_1 = arith.constant 0 : i32
    %c0_i32_2 = arith.constant 0 : i32
    return %arg0, %c0_i32, %c0_i32_0, %c0_i32_1 : i32, i32, i32, i32
  }
  func.func @transform_1(%arg0: i32) -> (i32, i32) {
    %c0_i32 = arith.constant 0 : i32
    %c0_i32_0 = arith.constant 0 : i32
    %c0_i32_1 = arith.constant 0 : i32
    return %c0_i32, %c0_i32_0 : i32, i32
  }
  func.func @transform_2(%arg0: i32) -> (i32, i32) {
    %c0_i32 = arith.constant 0 : i32
    %c0_i32_0 = arith.constant 0 : i32
    %c0_i32_1 = arith.constant 0 : i32
    return %c0_i32, %c0_i32_0 : i32, i32
  }
  func.func @transform_3(%arg0: i32) -> (i32, i32, i32) {
    %c0_i32 = arith.constant 0 : i32
    %c0_i32_0 = arith.constant 0 : i32
    %c0_i32_1 = arith.constant 0 : i32
    return %arg0, %c0_i32, %c0_i32_0 : i32, i32, i32
  }
  func.func @transform_4(%arg0: i32) -> (i32, i32, i32) {
    %c0_i32 = arith.constant 0 : i32
    %c0_i32_0 = arith.constant 0 : i32
    %c0_i32_1 = arith.constant 0 : i32
    return %arg0, %c0_i32, %c0_i32_0 : i32, i32, i32
  }
}

module attributes {stable_mosaic.version = 11 : i64} {
  func.func @_linear_kernel(%arg0: i32, %arg1: memref<8x2048xf32, #tpu.memory_space<vmem>>, %arg2: memref<2048x512xf32, #tpu.memory_space<vmem>>, %arg3: memref<1x512xf32, #tpu.memory_space<vmem>>, %arg4: memref<8x512xf32, #tpu.memory_space<vmem>>) attributes {dimension_semantics = [#tpu.dimension_semantics<parallel>], iteration_bounds = array<i64: 1>, scalar_prefetch = 0 : i64, scratch_operands = 0 : i64, tpu.core_type = #tpu.core_type<tc>, window_params = [{transform_indices = @transform_0, window_bounds = array<i64: 8, 2048>}, {pipeline_mode = #tpu.pipeline_mode<synchronous>, transform_indices = @transform_1, window_bounds = array<i64: 2048, 512>}, {pipeline_mode = #tpu.pipeline_mode<synchronous>, transform_indices = @transform_2, window_bounds = array<i64: 1, 512>}, {transform_indices = @transform_3, window_bounds = array<i64: 8, 512>}]} {
    %c0 = arith.constant 0 : index
    %c0_0 = arith.constant 0 : index
    %0 = vector.load %arg1[%c0, %c0_0] : memref<8x2048xf32, #tpu.memory_space<vmem>>, vector<8x2048xf32>
    %c0_1 = arith.constant 0 : index
    %c0_2 = arith.constant 0 : index
    %1 = vector.load %arg2[%c0_1, %c0_2] : memref<2048x512xf32, #tpu.memory_space<vmem>>, vector<2048x512xf32>
    %cst = arith.constant dense<0.000000e+00> : vector<8x512xf32>
    %2 = tpu.matmul %0, %1, %cst {dimension_numbers = #tpu.dot_dimension_numbers<[1], [0], [0], [1], [0, 0, 1, 1], [], []>} : vector<8x2048xf32>, vector<2048x512xf32>, vector<8x512xf32> -> vector<8x512xf32>
    %c0_3 = arith.constant 0 : index
    %c0_4 = arith.constant 0 : index
    %3 = vector.load %arg3[%c0_3, %c0_4] : memref<1x512xf32, #tpu.memory_space<vmem>>, vector<1x512xf32>
    %4 = vector.broadcast %3 : vector<1x512xf32> to vector<8x512xf32>
    %5 = arith.addf %2, %4 : vector<8x512xf32>
    %cst_5 = arith.constant 0.000000e+00 : f32
    %6 = vector.broadcast %cst_5 : f32 to vector<8x512xf32>
    %7 = arith.maximumf %5, %6 : vector<8x512xf32>
    %c0_6 = arith.constant 0 : index
    %c0_7 = arith.constant 0 : index
    %8 = vector.load %arg4[%c0_6, %c0_7] : memref<8x512xf32, #tpu.memory_space<vmem>>, vector<8x512xf32>
    tpu.vector_store %arg4[%c0_6, %c0_7], %7 {strides = array<i32>} : memref<8x512xf32, #tpu.memory_space<vmem>>, vector<8x512xf32>,
    return
  }
  func.func @transform_0(%arg0: i32) -> (i32, i32) {
    %c0_i32 = arith.constant 0 : i32
    %c0_i32_0 = arith.constant 0 : i32
    return %arg0, %c0_i32 : i32, i32
  }
  func.func @transform_1(%arg0: i32) -> (i32, i32) {
    %c0_i32 = arith.constant 0 : i32
    %c0_i32_0 = arith.constant 0 : i32
    %c0_i32_1 = arith.constant 0 : i32
    return %c0_i32, %c0_i32_0 : i32, i32
  }
  func.func @transform_2(%arg0: i32) -> (i32, i32) {
    %c0_i32 = arith.constant 0 : i32
    %c0_i32_0 = arith.constant 0 : i32
    %c0_i32_1 = arith.constant 0 : i32
    return %c0_i32, %c0_i32_0 : i32, i32
  }
  func.func @transform_3(%arg0: i32) -> (i32, i32) {
    %c0_i32 = arith.constant 0 : i32
    %c0_i32_0 = arith.constant 0 : i32
    return %arg0, %c0_i32 : i32, i32
  }
}

module attributes {stable_mosaic.version = 11 : i64} {
  func.func @_linear_kernel(%arg0: i32, %arg1: memref<8x512xf32, #tpu.memory_space<vmem>>, %arg2: memref<512x128xf32, #tpu.memory_space<vmem>>, %arg3: memref<1x128xf32, #tpu.memory_space<vmem>>, %arg4: memref<8x128xf32, #tpu.memory_space<vmem>>) attributes {dimension_semantics = [#tpu.dimension_semantics<parallel>], iteration_bounds = array<i64: 1>, scalar_prefetch = 0 : i64, scratch_operands = 0 : i64, tpu.core_type = #tpu.core_type<tc>, window_params = [{transform_indices = @transform_0, window_bounds = array<i64: 8, 512>}, {pipeline_mode = #tpu.pipeline_mode<synchronous>, transform_indices = @transform_1, window_bounds = array<i64: 512, 128>}, {pipeline_mode = #tpu.pipeline_mode<synchronous>, transform_indices = @transform_2, window_bounds = array<i64: 1, 128>}, {transform_indices = @transform_3, window_bounds = array<i64: 8, 128>}]} {
    %c0 = arith.constant 0 : index
    %c0_0 = arith.constant 0 : index
    %0 = vector.load %arg1[%c0, %c0_0] : memref<8x512xf32, #tpu.memory_space<vmem>>, vector<8x512xf32>
    %c0_1 = arith.constant 0 : index
    %c0_2 = arith.constant 0 : index
    %1 = vector.load %arg2[%c0_1, %c0_2] : memref<512x128xf32, #tpu.memory_space<vmem>>, vector<512x128xf32>
    %cst = arith.constant dense<0.000000e+00> : vector<8x128xf32>
    %2 = tpu.matmul %0, %1, %cst {dimension_numbers = #tpu.dot_dimension_numbers<[1], [0], [0], [1], [0, 0, 1, 1], [], []>} : vector<8x512xf32>, vector<512x128xf32>, vector<8x128xf32> -> vector<8x128xf32>
    %c0_3 = arith.constant 0 : index
    %c0_4 = arith.constant 0 : index
    %3 = vector.load %arg3[%c0_3, %c0_4] : memref<1x128xf32, #tpu.memory_space<vmem>>, vector<1x128xf32>
    %4 = vector.broadcast %3 : vector<1x128xf32> to vector<8x128xf32>
    %5 = arith.addf %2, %4 : vector<8x128xf32>
    %c0_5 = arith.constant 0 : index
    %c0_6 = arith.constant 0 : index
    %6 = vector.load %arg4[%c0_5, %c0_6] : memref<8x128xf32, #tpu.memory_space<vmem>>, vector<8x128xf32>
    tpu.vector_store %arg4[%c0_5, %c0_6], %5 {strides = array<i32>} : memref<8x128xf32, #tpu.memory_space<vmem>>, vector<8x128xf32>,
    return
  }
  func.func @transform_0(%arg0: i32) -> (i32, i32) {
    %c0_i32 = arith.constant 0 : i32
    %c0_i32_0 = arith.constant 0 : i32
    return %arg0, %c0_i32 : i32, i32
  }
  func.func @transform_1(%arg0: i32) -> (i32, i32) {
    %c0_i32 = arith.constant 0 : i32
    %c0_i32_0 = arith.constant 0 : i32
    %c0_i32_1 = arith.constant 0 : i32
    return %c0_i32, %c0_i32_0 : i32, i32
  }
  func.func @transform_2(%arg0: i32) -> (i32, i32) {
    %c0_i32 = arith.constant 0 : i32
    %c0_i32_0 = arith.constant 0 : i32
    %c0_i32_1 = arith.constant 0 : i32
    return %c0_i32, %c0_i32_0 : i32, i32
  }
  func.func @transform_3(%arg0: i32) -> (i32, i32) {
    %c0_i32 = arith.constant 0 : i32
    %c0_i32_0 = arith.constant 0 : i32
    return %arg0, %c0_i32 : i32, i32
  }
}

</mosaic_0001>

<llo_original>
// kernel: cnn_forward.4
$region0: #{cnn_forward.4}
  #allocation0 [shape = 'u32[]', space=smem, size = 0x4, offset = 0x4, fixed_abs, tag = 'smem constant byte address 0x4 - core index']
  #allocation1 [shape = 'u32[72,128]{1,0:T(1,128)}', space=vmem, size = 0x9000, scoped, tag = 'internal scratch']
  %s0 = inlined_call_operand.vmem [shape: f32[2,4,144,32], index: 0, kind: input, shape index: {}]
  %s1 = inlined_call_operand.vmem [shape: f32[32,128], index: 1, kind: input, shape index: {}]
  %s2 = inlined_call_operand.vmem [shape: f32[1,128], index: 2, kind: input, shape index: {}]
  %s3 = inlined_call_operand.vmem [shape: f32[2,144,128], index: 3, kind: output, shape index: {0}]
  %s4 = inlined_call_operand.hbm [shape: f32[2,144,1], index: 4, kind: output, shape index: {1}]
  %5 = xla_tuple %s3, %s4
  %s6 = sld [smem:[#allocation0]]
  $region53: #{cnn_forward.4} parent=0
    _
  %s8 = ssub.s32 1, %s6
  %s9 = scalar_select 0, %s8, %s6
  $region1: #{cnn_forward.4} parent=0
    #allocation2 [shape = 'u8[147456]{0}', space=vmem, size = 0x24000, scoped, tag = 'output window, operand 1']
    #allocation3 [shape = 's32[2]{0}', space=sflag, size = 0x8, scoped, tag = 'scoped memory for cnn_forward.4']
    %10 = vsyncpa [#allocation3], 0
    %s11 = scalar_lea.sflag [#allocation3], 1
    %12 = vsyncpa %s11, 0
    loop: start=0, step=1, limit=4
    $region2: #{cnn_forward.4} parent=1 // loop_pre_header
      _
    $region3: #{cnn_forward.4} parent=1 // loop_header
      %s14 = sphi 0, %s18
      %p15 = scmp.ge.s32.totalorder %s14, 4
      %s24 = sphi 0, %s26
      %s27 = sphi 0, %s24
      %s28 = sphi 0, %s27
      %s44 = sphi 0, %s28
      %s48 = sphi 0, %s48
      %s50 = sphi 0, %s48
      %s51 = sphi 0, %s50
      %s65 = sphi 0, %s51
      %s69 = sphi 0, %s69
      %s71 = sphi 0, %s69
      %s72 = sphi 0, %s71
      %s86 = sphi 0, %s72
      %s92 = sphi 0, %s94
      %s95 = sphi 0, %s92
      %s96 = sphi 0, %s95
      %s112 = sphi 0, %s96
      %s118 = sphi 0, %s120
      %s121 = sphi 0, %s118
      %s122 = sphi 0, %s121
      %s138 = sphi 0, %s122
    $region4: #{cnn_forward.4} parent=1 // loop_header_branch
      %17 = sbr.rel (%p15) target = $region8
    $region5: #{cnn_forward.4} parent=1 // loop_body
      %s19 = ssub.s32 %s14, 1
      %s20 = ssub.s32 %s14, 2
      %s21 = sadd.s32 %s14, 1
      %s22 = ssub.s32 %s14, %s21
      %p23 = scmp.eq.s32.totalorder %s22, 0
      %s25 = sadd.s32 %s24, 1
      %s26 = scalar_select %p23, %s24, %s25
      %p29 = pneg %p23
      %p30 = scmp.eq.s32.totalorder %s14, 1
      %p31 = por %p29, %p30
      %p32 = scmp.ne.s32.totalorder %s24, %s27
      %p33 = scmp.eq.s32.totalorder %s14, 0
      %p34 = por %p32, %p33
      %p35 = scmp.ne.s32.totalorder %s24, %s27
      %p36 = scmp.eq.s32.totalorder %s19, 1
      %p37 = por %p35, %p36
      %p38 = scmp.ne.s32.totalorder %s27, %s28
      %p39 = scmp.eq.s32.totalorder %s19, 0
      %p40 = por %p38, %p39
      %p41 = scmp.ne.s32.totalorder %s27, %s28
      %p42 = scmp.eq.s32.totalorder %s20, 1
      %p43 = por %p41, %p42
      %p45 = scmp.ne.s32.totalorder %s28, %s44
      %p46 = scmp.eq.s32.totalorder %s20, 0
      %p47 = por %p45, %p46
      %s49 = sadd.s32 %s48, 1
      %p52 = scmp.eq.s32.totalorder %s14, 1
      %p53 = scmp.ne.s32.totalorder %s48, %s50
      %p54 = scmp.eq.s32.totalorder %s14, 0
      %p55 = por %p53, %p54
      %p56 = scmp.ne.s32.totalorder %s48, %s50
      %p57 = scmp.eq.s32.totalorder %s19, 1
      %p58 = por %p56, %p57
      %p59 = scmp.ne.s32.totalorder %s50, %s51
      %p60 = scmp.eq.s32.totalorder %s19, 0
      %p61 = por %p59, %p60
      %p62 = scmp.ne.s32.totalorder %s50, %s51
      %p63 = scmp.eq.s32.totalorder %s20, 1
      %p64 = por %p62, %p63
      %p66 = scmp.ne.s32.totalorder %s51, %s65
      %p67 = scmp.eq.s32.totalorder %s20, 0
      %p68 = por %p66, %p67
      %s70 = sadd.s32 %s69, 1
      %p73 = scmp.eq.s32.totalorder %s14, 1
      %p74 = scmp.ne.s32.totalorder %s69, %s71
      %p75 = scmp.eq.s32.totalorder %s14, 0
      %p76 = por %p74, %p75
      %p77 = scmp.ne.s32.totalorder %s69, %s71
      %p78 = scmp.eq.s32.totalorder %s19, 1
      %p79 = por %p77, %p78
      %p80 = scmp.ne.s32.totalorder %s71, %s72
      %p81 = scmp.eq.s32.totalorder %s19, 0
      %p82 = por %p80, %p81
      %p83 = scmp.ne.s32.totalorder %s71, %s72
      %p84 = scmp.eq.s32.totalorder %s20, 1
      %p85 = por %p83, %p84
      %p87 = scmp.ne.s32.totalorder %s72, %s86
      %p88 = scmp.eq.s32.totalorder %s20, 0
      %p89 = por %p87, %p88
      %s90 = ssub.s32 %s14, %s21
      %p91 = scmp.eq.s32.totalorder %s90, 0
      %s93 = sadd.s32 %s92, 1
      %s94 = scalar_select %p91, %s92, %s93
      %p97 = pneg %p91
      %p98 = scmp.eq.s32.totalorder %s14, 1
      %p99 = por %p97, %p98
      %p100 = scmp.ne.s32.totalorder %s92, %s95
      %p101 = scmp.eq.s32.totalorder %s14, 0
      %p102 = por %p100, %p101
      %p103 = scmp.ne.s32.totalorder %s92, %s95
      %p104 = scmp.eq.s32.totalorder %s19, 1
      %p105 = por %p103, %p104
      %p106 = scmp.ne.s32.totalorder %s95, %s96
      %p107 = scmp.eq.s32.totalorder %s19, 0
      %p108 = por %p106, %p107
      %p109 = scmp.ne.s32.totalorder %s95, %s96
      %p110 = scmp.eq.s32.totalorder %s20, 1
      %p111 = por %p109, %p110
      %p113 = scmp.ne.s32.totalorder %s96, %s112
      %p114 = scmp.eq.s32.totalorder %s20, 0
      %p115 = por %p113, %p114
      %s116 = ssub.s32 %s14, %s21
      %p117 = scmp.eq.s32.totalorder %s116, 0
      %s119 = sadd.s32 %s118, 1
      %s120 = scalar_select %p117, %s118, %s119
      %p123 = pneg %p117
      %p124 = scmp.eq.s32.totalorder %s14, 1
      %p125 = por %p123, %p124
      %p126 = scmp.ne.s32.totalorder %s118, %s121
      %p127 = scmp.eq.s32.totalorder %s14, 0
      %p128 = por %p126, %p127
      %p129 = scmp.ne.s32.totalorder %s118, %s121
      %p130 = scmp.eq.s32.totalorder %s19, 1
      %p131 = por %p129, %p130
      %p132 = scmp.ne.s32.totalorder %s121, %s122
      %p133 = scmp.eq.s32.totalorder %s19, 0
      %p134 = por %p132, %p133
      %p135 = scmp.ne.s32.totalorder %s121, %s122
      %p136 = scmp.eq.s32.totalorder %s20, 1
      %p137 = por %p135, %p136
      %p139 = scmp.ne.s32.totalorder %s122, %s138
      %p140 = scmp.eq.s32.totalorder %s20, 0
      %p141 = por %p139, %p140
      %p142 = scmp.le.s32.totalorder 1, %s14
      %p143 = scmp.lt.s32.totalorder %s14, 3
      %p144 = pnand %p142, %p143
      %p145 = pneg %p144
      // Predicated region
      $region9: #{cnn_forward.4} parent=5 // pred_check
        _
      $region10: #{cnn_forward.4} parent=5 // pred_check_branch
        %147 = sbr.rel (%p144) target = $region12
      $region11: #{cnn_forward.4} parent=5 // pred_region
        %s148 = ssub.s32 %s14, 1
        // Predicated region
        $region13: #{cnn_forward.4} parent=11 // pred_check
          %p149 = pneg %p61
        $region14: #{cnn_forward.4} parent=11 // pred_check_branch
          %151 = sbr.rel (%p149) target = $region16
        $region15: #{cnn_forward.4} parent=11 // pred_region
          _
        $region16: #{cnn_forward.4} parent=11 // pred_fallthru
          _
        // Predicated region
        $region17: #{cnn_forward.4} parent=11 // pred_check
          %p152 = pneg %p82
        $region18: #{cnn_forward.4} parent=11 // pred_check_branch
          %154 = sbr.rel (%p152) target = $region20
        $region19: #{cnn_forward.4} parent=11 // pred_region
          _
        $region20: #{cnn_forward.4} parent=11 // pred_fallthru
          _
      $region12: #{cnn_forward.4} parent=5 // pred_fallthru
        _
      %p155 = scmp.lt.s32.totalorder %s14, 2
      // Predicated region
      $region21: #{cnn_forward.4} parent=5 // pred_check
        %p156 = pneg %p155
      $region22: #{cnn_forward.4} parent=5 // pred_check_branch
        %158 = sbr.rel (%p156) target = $region24
      $region23: #{cnn_forward.4} parent=5 // pred_region
        // Predicated region
        $region25: #{cnn_forward.4} parent=23 // pred_check
          %p159 = pneg %p34
        $region26: #{cnn_forward.4} parent=23 // pred_check_branch
          %161 = sbr.rel (%p159) target = $region28
        $region27: #{cnn_forward.4} parent=23 // pred_region
          %p162 = scmp.lt.s32.totalorder %s14, 1
          %s163 = scalar_select %p162, %s14, 1
          %s164 = smul.addr %s163, 72
          %s165 = smul.addr %s164, 8
          %s166 = scalar_lea.vmem %s0, %s165
        $region28: #{cnn_forward.4} parent=23 // pred_fallthru
          _
      $region24: #{cnn_forward.4} parent=5 // pred_fallthru
        _
      %p167 = scmp.le.s32.totalorder 1, %s14
      %p168 = scmp.lt.s32.totalorder %s14, 3
      %p169 = pnand %p167, %p168
      %p170 = pneg %p169
      // Predicated region
      $region29: #{cnn_forward.4} parent=5 // pred_check
        _
      $region30: #{cnn_forward.4} parent=5 // pred_check_branch
        %172 = sbr.rel (%p169) target = $region32
      $region31: #{cnn_forward.4} parent=5 // pred_region
        %s173 = ssub.s32 %s14, 1
        %p174 = scmp.lt.s32.totalorder %s19, 1
        %s175 = scalar_select %p174, %s19, 1
        %s176 = smul.addr %s175, 72
        %s177 = smul.addr %s176, 8
        %s178 = scalar_lea.vmem %s0, %s177
        %p179 = pneg %p40
        %p180 = pneg %p37
        %p181 = pneg %p61
        %p182 = pneg %p58
        %p183 = pneg %p82
        %p184 = pneg %p79
        %p185 = pneg %p108
        %p186 = pneg %p105
        %p187 = scmp.lt.s32.totalorder %s19, 1
        %s188 = scalar_select %p187, %s19, 1
        %s189 = smul.addr %s188, 18
        %s190 = smul.addr %s189, 8
        %s191 = scalar_lea.vmem %s3, %s190
        %p192 = pneg %p134
        %p193 = pneg %p131
        %s194 = sand.u32 %s121, 1
        %s195 = scalar_lea.sflag [#allocation3], %s194
        %s196 = sand.u32 %s121, 1
        %s197 = smul.addr %s196, 144
        %s198 = scalar_lea.vmem [#allocation2], %s197
        %p199 = scmp.lt.s32.totalorder %s19, 1
        %s200 = scalar_select %p199, %s19, 1
        %s201 = smul.addr %s200, 72
        %s202 = smul.addr %s201, 8
        %s203 = scalar_lea.vmem %s0, %s202
        %p204 = scmp.lt.s32.totalorder %s19, 1
        %s205 = scalar_select %p204, %s19, 1
        %s206 = smul.addr %s205, 18
        %s207 = smul.addr %s206, 8
        %s208 = scalar_lea.vmem %s3, %s207
        %v209 = vld [vmem:[%s203] sm:$0xff]
        %v210 = vld [vmem:[%s203 + $0x8] sm:$0xff]
        %v211 = vld [vmem:[%s203 + $0x10] sm:$0xff]
        %v212 = vld [vmem:[%s203 + $0x18] sm:$0xff]
        %v213 = vld [vmem:[%s203 + $0x20] sm:$0xff]
        %v214 = vld [vmem:[%s203 + $0x28] sm:$0xff]
        %v215 = vld [vmem:[%s203 + $0x30] sm:$0xff]
        %v216 = vld [vmem:[%s203 + $0x38] sm:$0xff]
        %v217 = vld [vmem:[%s203 + $0x40] sm:$0xff]
        %v218 = vld [vmem:[%s203 + $0x48] sm:$0xff]
        %v219 = vld [vmem:[%s203 + $0x50] sm:$0xff]
        %v220 = vld [vmem:[%s203 + $0x58] sm:$0xff]
        %v221 = vld [vmem:[%s203 + $0x60] sm:$0xff]
        %v222 = vld [vmem:[%s203 + $0x68] sm:$0xff]
        %v223 = vld [vmem:[%s203 + $0x70] sm:$0xff]
        %v224 = vld [vmem:[%s203 + $0x78] sm:$0xff]
        %v225 = vld [vmem:[%s203 + $0x80] sm:$0xff]
        %v226 = vld [vmem:[%s203 + $0x88] sm:$0xff]
        %v227 = vld [vmem:[%s203 + $0x90] sm:$0xff]
        %v228 = vld [vmem:[%s203 + $0x98] sm:$0xff]
        %v229 = vld [vmem:[%s203 + $0xa0] sm:$0xff]
        %v230 = vld [vmem:[%s203 + $0xa8] sm:$0xff]
        %v231 = vld [vmem:[%s203 + $0xb0] sm:$0xff]
        %v232 = vld [vmem:[%s203 + $0xb8] sm:$0xff]
        %v233 = vld [vmem:[%s203 + $0xc0] sm:$0xff]
        %v234 = vld [vmem:[%s203 + $0xc8] sm:$0xff]
        %v235 = vld [vmem:[%s203 + $0xd0] sm:$0xff]
        %v236 = vld [vmem:[%s203 + $0xd8] sm:$0xff]
        %v237 = vld [vmem:[%s203 + $0xe0] sm:$0xff]
        %v238 = vld [vmem:[%s203 + $0xe8] sm:$0xff]
        %v239 = vld [vmem:[%s203 + $0xf0] sm:$0xff]
        %v240 = vld [vmem:[%s203 + $0xf8] sm:$0xff]
        %v241 = vld [vmem:[%s203 + $0x100] sm:$0xff]
        %v242 = vld [vmem:[%s203 + $0x108] sm:$0xff]
        %v243 = vld [vmem:[%s203 + $0x110] sm:$0xff]
        %v244 = vld [vmem:[%s203 + $0x118] sm:$0xff]
        %v245 = vld [vmem:[%s203 + $0x120] sm:$0xff]
        %v246 = vld [vmem:[%s203 + $0x128] sm:$0xff]
        %v247 = vld [vmem:[%s203 + $0x130] sm:$0xff]
        %v248 = vld [vmem:[%s203 + $0x138] sm:$0xff]
        %v249 = vld [vmem:[%s203 + $0x140] sm:$0xff]
        %v250 = vld [vmem:[%s203 + $0x148] sm:$0xff]
        %v251 = vld [vmem:[%s203 + $0x150] sm:$0xff]
        %v252 = vld [vmem:[%s203 + $0x158] sm:$0xff]
        %v253 = vld [vmem:[%s203 + $0x160] sm:$0xff]
        %v254 = vld [vmem:[%s203 + $0x168] sm:$0xff]
        %v255 = vld [vmem:[%s203 + $0x170] sm:$0xff]
        %v256 = vld [vmem:[%s203 + $0x178] sm:$0xff]
        %v257 = vld [vmem:[%s203 + $0x180] sm:$0xff]
        %v258 = vld [vmem:[%s203 + $0x188] sm:$0xff]
        %v259 = vld [vmem:[%s203 + $0x190] sm:$0xff]
        %v260 = vld [vmem:[%s203 + $0x198] sm:$0xff]
        %v261 = vld [vmem:[%s203 + $0x1a0] sm:$0xff]
        %v262 = vld [vmem:[%s203 + $0x1a8] sm:$0xff]
        %v263 = vld [vmem:[%s203 + $0x1b0] sm:$0xff]
        %v264 = vld [vmem:[%s203 + $0x1b8] sm:$0xff]
        %v265 = vld [vmem:[%s203 + $0x1c0] sm:$0xff]
        %v266 = vld [vmem:[%s203 + $0x1c8] sm:$0xff]
        %v267 = vld [vmem:[%s203 + $0x1d0] sm:$0xff]
        %v268 = vld [vmem:[%s203 + $0x1d8] sm:$0xff]
        %v269 = vld [vmem:[%s203 + $0x1e0] sm:$0xff]
        %v270 = vld [vmem:[%s203 + $0x1e8] sm:$0xff]
        %v271 = vld [vmem:[%s203 + $0x1f0] sm:$0xff]
        %v272 = vld [vmem:[%s203 + $0x1f8] sm:$0xff]
        %v273 = vld [vmem:[%s203 + $0x200] sm:$0xff]
        %v274 = vld [vmem:[%s203 + $0x208] sm:$0xff]
        %v275 = vld [vmem:[%s203 + $0x210] sm:$0xff]
        %v276 = vld [vmem:[%s203 + $0x218] sm:$0xff]
        %v277 = vld [vmem:[%s203 + $0x220] sm:$0xff]
        %v278 = vld [vmem:[%s203 + $0x228] sm:$0xff]
        %v279 = vld [vmem:[%s203 + $0x230] sm:$0xff]
        %v280 = vld [vmem:[%s203 + $0x238] sm:$0xff]
        %v281 = vld [vmem:[%s1] sm:$0xff]
        %v282 = vld [vmem:[%s1 + $0x8] sm:$0xff]
        %v283 = vld [vmem:[%s1 + $0x10] sm:$0xff]
        %v284 = vld [vmem:[%s1 + $0x18] sm:$0xff]
        %v285 = vld [vmem:[%s2] sm:$0x1]
        %v287 = vperm.slane %v285, 0
        %vm289 = vcmask 261120
        %v291 = vsel %vm289, %v209, 0
        %v294 = vsel %vm289, %v210, 0
        %v297 = vsel %vm289, %v211, 0
        %v300 = vsel %vm289, %v212, 0
        %v303 = vsel %vm289, %v213, 0
        %v306 = vsel %vm289, %v214, 0
        %v309 = vsel %vm289, %v215, 0
        %v312 = vsel %vm289, %v216, 0
        %v315 = vsel %vm289, %v217, 0
        %v318 = vsel %vm289, %v218, 0
        %v321 = vsel %vm289, %v219, 0
        %v324 = vsel %vm289, %v220, 0
        %v327 = vsel %vm289, %v221, 0
        %v330 = vsel %vm289, %v222, 0
        %v333 = vsel %vm289, %v223, 0
        %v336 = vsel %vm289, %v224, 0
        %v339 = vsel %vm289, %v225, 0
        %v342 = vsel %vm289, %v226, 0
        %v345 = vsel %vm289, %v227, 0
        %v348 = vsel %vm289, %v228, 0
        %v351 = vsel %vm289, %v229, 0
        %v354 = vsel %vm289, %v230, 0
        %v357 = vsel %vm289, %v231, 0
        %v360 = vsel %vm289, %v232, 0
        %v363 = vsel %vm289, %v233, 0
        %v366 = vsel %vm289, %v234, 0
        %v369 = vsel %vm289, %v235, 0
        %v372 = vsel %vm289, %v236, 0
        %v375 = vsel %vm289, %v237, 0
        %v378 = vsel %vm289, %v238, 0
        %v381 = vsel %vm289, %v239, 0
        %v384 = vsel %vm289, %v240, 0
        %v387 = vsel %vm289, %v241, 0
        %v390 = vsel %vm289, %v242, 0
        %v393 = vsel %vm289, %v243, 0
        %v396 = vsel %vm289, %v244, 0
        %v399 = vsel %vm289, %v245, 0
        %v402 = vsel %vm289, %v246, 0
        %v405 = vsel %vm289, %v247, 0
        %v408 = vsel %vm289, %v248, 0
        %v411 = vsel %vm289, %v249, 0
        %v414 = vsel %vm289, %v250, 0
        %v417 = vsel %vm289, %v251, 0
        %v420 = vsel %vm289, %v252, 0
        %v423 = vsel %vm289, %v253, 0
        %v426 = vsel %vm289, %v254, 0
        %v429 = vsel %vm289, %v255, 0
        %v432 = vsel %vm289, %v256, 0
        %v435 = vsel %vm289, %v257, 0
        %v438 = vsel %vm289, %v258, 0
        %v441 = vsel %vm289, %v259, 0
        %v444 = vsel %vm289, %v260, 0
        %v447 = vsel %vm289, %v261, 0
        %v450 = vsel %vm289, %v262, 0
        %v453 = vsel %vm289, %v263, 0
        %v456 = vsel %vm289, %v264, 0
        %v459 = vsel %vm289, %v265, 0
        %v462 = vsel %vm289, %v266, 0
        %v465 = vsel %vm289, %v267, 0
        %v468 = vsel %vm289, %v268, 0
        %v471 = vsel %vm289, %v269, 0
        %v474 = vsel %vm289, %v270, 0
        %v477 = vsel %vm289, %v271, 0
        %v480 = vsel %vm289, %v272, 0
        %v483 = vsel %vm289, %v273, 0
        %v486 = vsel %vm289, %v274, 0
        %v489 = vsel %vm289, %v275, 0
        %v492 = vsel %vm289, %v276, 0
        %v495 = vsel %vm289, %v277, 0
        %v498 = vsel %vm289, %v278, 0
        %v501 = vsel %vm289, %v279, 0
        %v504 = vsel %vm289, %v280, 0
        %506 = vmatpush.msra.mxu0 0.0
        %507 = vmatpush.msra.mxu0 0.0
        %508 = vmatpush.msra.mxu0 0.0
        %509 = vmatpush.msra.mxu0 0.0
        %510 = vmatpush.msra.mxu0 0.0
        %511 = vmatpush.msra.mxu0 0.0
        %512 = vmatpush.msra.mxu0 0.0
        %513 = vmatpush.msra.mxu0 0.0
        %514 = vmatpush.msra.mxu0 0.0
        %515 = vmatpush.msra.mxu0 0.0
        %516 = vmatpush.msra.mxu0 0.0
        %517 = vmatpush.msra.mxu0 0.0
        %518 = vmatpush.msra.mxu0 %v284
        %519 = vmatpush.msra.mxu0 %v283
        %520 = vmatpush.msra.mxu0 %v282
        %521 = vmatpush.msra.mxu0 %v281
        %522 = vmatmul.f32.gmra.mxu0 %v291
        %v523 = vpop.f32.mrf.mxu0
        %v524 = vadd.f32 %v287, %v523
        %525 = vmatmul.f32.gmra.mxu0 %v294
        %v526 = vpop.f32.mrf.mxu0
        %v527 = vadd.f32 %v287, %v526
        %528 = vmatmul.f32.gmra.mxu0 %v297
        %v529 = vpop.f32.mrf.mxu0
        %v530 = vadd.f32 %v287, %v529
        %531 = vmatmul.f32.gmra.mxu0 %v300
        %v532 = vpop.f32.mrf.mxu0
        %v533 = vadd.f32 %v287, %v532
        %534 = vmatmul.f32.gmra.mxu0 %v303
        %v535 = vpop.f32.mrf.mxu0
        %v536 = vadd.f32 %v287, %v535
        %537 = vmatmul.f32.gmra.mxu0 %v306
        %v538 = vpop.f32.mrf.mxu0
        %v539 = vadd.f32 %v287, %v538
        %540 = vmatmul.f32.gmra.mxu0 %v309
        %v541 = vpop.f32.mrf.mxu0
        %v542 = vadd.f32 %v287, %v541
        %543 = vmatmul.f32.gmra.mxu0 %v312
        %v544 = vpop.f32.mrf.mxu0
        %v545 = vadd.f32 %v287, %v544
        %546 = vmatmul.f32.gmra.mxu0 %v315
        %v547 = vpop.f32.mrf.mxu0
        %v548 = vadd.f32 %v287, %v547
        %549 = vmatmul.f32.gmra.mxu0 %v318
        %v550 = vpop.f32.mrf.mxu0
        %v551 = vadd.f32 %v287, %v550
        %552 = vmatmul.f32.gmra.mxu0 %v321
        %v553 = vpop.f32.mrf.mxu0
        %v554 = vadd.f32 %v287, %v553
        %555 = vmatmul.f32.gmra.mxu0 %v324
        %v556 = vpop.f32.mrf.mxu0
        %v557 = vadd.f32 %v287, %v556
        %558 = vmatmul.f32.gmra.mxu0 %v327
        %v559 = vpop.f32.mrf.mxu0
        %v560 = vadd.f32 %v287, %v559
        %561 = vmatmul.f32.gmra.mxu0 %v330
        %v562 = vpop.f32.mrf.mxu0
        %v563 = vadd.f32 %v287, %v562
        %564 = vmatmul.f32.gmra.mxu0 %v333
        %v565 = vpop.f32.mrf.mxu0
        %v566 = vadd.f32 %v287, %v565
        %567 = vmatmul.f32.gmra.mxu0 %v336
        %v568 = vpop.f32.mrf.mxu0
        %v569 = vadd.f32 %v287, %v568
        %570 = vmatmul.f32.gmra.mxu0 %v339
        %v571 = vpop.f32.mrf.mxu0
        %v572 = vadd.f32 %v287, %v571
        %573 = vmatmul.f32.gmra.mxu0 %v342
        %v574 = vpop.f32.mrf.mxu0
        %v575 = vadd.f32 %v287, %v574
        %576 = vmatmul.f32.gmra.mxu0 %v345
        %v577 = vpop.f32.mrf.mxu0
        %v578 = vadd.f32 %v287, %v577
        %579 = vmatmul.f32.gmra.mxu0 %v348
        %v580 = vpop.f32.mrf.mxu0
        %v581 = vadd.f32 %v287, %v580
        %582 = vmatmul.f32.gmra.mxu0 %v351
        %v583 = vpop.f32.mrf.mxu0
        %v584 = vadd.f32 %v287, %v583
        %585 = vmatmul.f32.gmra.mxu0 %v354
        %v586 = vpop.f32.mrf.mxu0
        %v587 = vadd.f32 %v287, %v586
        %588 = vmatmul.f32.gmra.mxu0 %v357
        %v589 = vpop.f32.mrf.mxu0
        %v590 = vadd.f32 %v287, %v589
        %591 = vmatmul.f32.gmra.mxu0 %v360
        %v592 = vpop.f32.mrf.mxu0
        %v593 = vadd.f32 %v287, %v592
        %594 = vmatmul.f32.gmra.mxu0 %v363
        %v595 = vpop.f32.mrf.mxu0
        %v596 = vadd.f32 %v287, %v595
        %597 = vmatmul.f32.gmra.mxu0 %v366
        %v598 = vpop.f32.mrf.mxu0
        %v599 = vadd.f32 %v287, %v598
        %600 = vmatmul.f32.gmra.mxu0 %v369
        %v601 = vpop.f32.mrf.mxu0
        %v602 = vadd.f32 %v287, %v601
        %603 = vmatmul.f32.gmra.mxu0 %v372
        %v604 = vpop.f32.mrf.mxu0
        %v605 = vadd.f32 %v287, %v604
        %606 = vmatmul.f32.gmra.mxu0 %v375
        %v607 = vpop.f32.mrf.mxu0
        %v608 = vadd.f32 %v287, %v607
        %609 = vmatmul.f32.gmra.mxu0 %v378
        %v610 = vpop.f32.mrf.mxu0
        %v611 = vadd.f32 %v287, %v610
        %612 = vmatmul.f32.gmra.mxu0 %v381
        %v613 = vpop.f32.mrf.mxu0
        %v614 = vadd.f32 %v287, %v613
        %615 = vmatmul.f32.gmra.mxu0 %v384
        %v616 = vpop.f32.mrf.mxu0
        %v617 = vadd.f32 %v287, %v616
        %618 = vmatmul.f32.gmra.mxu0 %v387
        %v619 = vpop.f32.mrf.mxu0
        %v620 = vadd.f32 %v287, %v619
        %621 = vmatmul.f32.gmra.mxu0 %v390
        %v622 = vpop.f32.mrf.mxu0
        %v623 = vadd.f32 %v287, %v622
        %624 = vmatmul.f32.gmra.mxu0 %v393
        %v625 = vpop.f32.mrf.mxu0
        %v626 = vadd.f32 %v287, %v625
        %627 = vmatmul.f32.gmra.mxu0 %v396
        %v628 = vpop.f32.mrf.mxu0
        %v629 = vadd.f32 %v287, %v628
        %630 = vmatmul.f32.gmra.mxu0 %v399
        %v631 = vpop.f32.mrf.mxu0
        %v632 = vadd.f32 %v287, %v631
        %633 = vmatmul.f32.gmra.mxu0 %v402
        %v634 = vpop.f32.mrf.mxu0
        %v635 = vadd.f32 %v287, %v634
        %636 = vmatmul.f32.gmra.mxu0 %v405
        %v637 = vpop.f32.mrf.mxu0
        %v638 = vadd.f32 %v287, %v637
        %639 = vmatmul.f32.gmra.mxu0 %v408
        %v640 = vpop.f32.mrf.mxu0
        %v641 = vadd.f32 %v287, %v640
        %642 = vmatmul.f32.gmra.mxu0 %v411
        %v643 = vpop.f32.mrf.mxu0
        %v644 = vadd.f32 %v287, %v643
        %645 = vmatmul.f32.gmra.mxu0 %v414
        %v646 = vpop.f32.mrf.mxu0
        %v647 = vadd.f32 %v287, %v646
        %648 = vmatmul.f32.gmra.mxu0 %v417
        %v649 = vpop.f32.mrf.mxu0
        %v650 = vadd.f32 %v287, %v649
        %651 = vmatmul.f32.gmra.mxu0 %v420
        %v652 = vpop.f32.mrf.mxu0
        %v653 = vadd.f32 %v287, %v652
        %654 = vmatmul.f32.gmra.mxu0 %v423
        %v655 = vpop.f32.mrf.mxu0
        %v656 = vadd.f32 %v287, %v655
        %657 = vmatmul.f32.gmra.mxu0 %v426
        %v658 = vpop.f32.mrf.mxu0
        %v659 = vadd.f32 %v287, %v658
        %660 = vmatmul.f32.gmra.mxu0 %v429
        %v661 = vpop.f32.mrf.mxu0
        %v662 = vadd.f32 %v287, %v661
        %663 = vmatmul.f32.gmra.mxu0 %v432
        %v664 = vpop.f32.mrf.mxu0
        %v665 = vadd.f32 %v287, %v664
        %666 = vmatmul.f32.gmra.mxu0 %v435
        %v667 = vpop.f32.mrf.mxu0
        %v668 = vadd.f32 %v287, %v667
        %669 = vmatmul.f32.gmra.mxu0 %v438
        %v670 = vpop.f32.mrf.mxu0
        %v671 = vadd.f32 %v287, %v670
        %672 = vmatmul.f32.gmra.mxu0 %v441
        %v673 = vpop.f32.mrf.mxu0
        %v674 = vadd.f32 %v287, %v673
        %675 = vmatmul.f32.gmra.mxu0 %v444
        %v676 = vpop.f32.mrf.mxu0
        %v677 = vadd.f32 %v287, %v676
        %678 = vmatmul.f32.gmra.mxu0 %v447
        %v679 = vpop.f32.mrf.mxu0
        %v680 = vadd.f32 %v287, %v679
        %681 = vmatmul.f32.gmra.mxu0 %v450
        %v682 = vpop.f32.mrf.mxu0
        %v683 = vadd.f32 %v287, %v682
        %684 = vmatmul.f32.gmra.mxu0 %v453
        %v685 = vpop.f32.mrf.mxu0
        %v686 = vadd.f32 %v287, %v685
        %687 = vmatmul.f32.gmra.mxu0 %v456
        %v688 = vpop.f32.mrf.mxu0
        %v689 = vadd.f32 %v287, %v688
        %690 = vmatmul.f32.gmra.mxu0 %v459
        %v691 = vpop.f32.mrf.mxu0
        %v692 = vadd.f32 %v287, %v691
        %693 = vmatmul.f32.gmra.mxu0 %v462
        %v694 = vpop.f32.mrf.mxu0
        %v695 = vadd.f32 %v287, %v694
        %696 = vmatmul.f32.gmra.mxu0 %v465
        %v697 = vpop.f32.mrf.mxu0
        %v698 = vadd.f32 %v287, %v697
        %699 = vmatmul.f32.gmra.mxu0 %v468
        %v700 = vpop.f32.mrf.mxu0
        %v701 = vadd.f32 %v287, %v700
        %702 = vmatmul.f32.gmra.mxu0 %v471
        %v703 = vpop.f32.mrf.mxu0
        %v704 = vadd.f32 %v287, %v703
        %705 = vmatmul.f32.gmra.mxu0 %v474
        %v706 = vpop.f32.mrf.mxu0
        %v707 = vadd.f32 %v287, %v706
        %708 = vmatmul.f32.gmra.mxu0 %v477
        %v709 = vpop.f32.mrf.mxu0
        %v710 = vadd.f32 %v287, %v709
        %711 = vmatmul.f32.gmra.mxu0 %v480
        %v712 = vpop.f32.mrf.mxu0
        %v713 = vadd.f32 %v287, %v712
        %714 = vmatmul.f32.gmra.mxu0 %v483
        %v715 = vpop.f32.mrf.mxu0
        %v716 = vadd.f32 %v287, %v715
        %717 = vmatmul.f32.gmra.mxu0 %v486
        %v718 = vpop.f32.mrf.mxu0
        %v719 = vadd.f32 %v287, %v718
        %720 = vmatmul.f32.gmra.mxu0 %v489
        %v721 = vpop.f32.mrf.mxu0
        %v722 = vadd.f32 %v287, %v721
        %723 = vmatmul.f32.gmra.mxu0 %v492
        %v724 = vpop.f32.mrf.mxu0
        %v725 = vadd.f32 %v287, %v724
        %726 = vmatmul.f32.gmra.mxu0 %v495
        %v727 = vpop.f32.mrf.mxu0
        %v728 = vadd.f32 %v287, %v727
        %729 = vmatmul.f32.gmra.mxu0 %v498
        %v730 = vpop.f32.mrf.mxu0
        %v731 = vadd.f32 %v287, %v730
        %732 = vmatmul.f32.gmra.mxu0 %v501
        %v733 = vpop.f32.mrf.mxu0
        %v734 = vadd.f32 %v287, %v733
        %735 = vmatmul.f32.gmra.mxu0 %v504
        %v736 = vpop.f32.mrf.mxu0
        %v737 = vadd.f32 %v287, %v736
        %738 = vdwg.mxu0
        %v739 = vmax.f32 %v524, 0.0
        %v740 = vmax.f32 %v527, 0.0
        %v741 = vmax.f32 %v530, 0.0
        %v742 = vmax.f32 %v533, 0.0
        %v743 = vmax.f32 %v536, 0.0
        %v744 = vmax.f32 %v539, 0.0
        %v745 = vmax.f32 %v542, 0.0
        %v746 = vmax.f32 %v545, 0.0
        %v747 = vmax.f32 %v548, 0.0
        %v748 = vmax.f32 %v551, 0.0
        %v749 = vmax.f32 %v554, 0.0
        %v750 = vmax.f32 %v557, 0.0
        %v751 = vmax.f32 %v560, 0.0
        %v752 = vmax.f32 %v563, 0.0
        %v753 = vmax.f32 %v566, 0.0
        %v754 = vmax.f32 %v569, 0.0
        %v755 = vmax.f32 %v572, 0.0
        %v756 = vmax.f32 %v575, 0.0
        %v757 = vmax.f32 %v578, 0.0
        %v758 = vmax.f32 %v581, 0.0
        %v759 = vmax.f32 %v584, 0.0
        %v760 = vmax.f32 %v587, 0.0
        %v761 = vmax.f32 %v590, 0.0
        %v762 = vmax.f32 %v593, 0.0
        %v763 = vmax.f32 %v596, 0.0
        %v764 = vmax.f32 %v599, 0.0
        %v765 = vmax.f32 %v602, 0.0
        %v766 = vmax.f32 %v605, 0.0
        %v767 = vmax.f32 %v608, 0.0
        %v768 = vmax.f32 %v611, 0.0
        %v769 = vmax.f32 %v614, 0.0
        %v770 = vmax.f32 %v617, 0.0
        %v771 = vmax.f32 %v620, 0.0
        %v772 = vmax.f32 %v623, 0.0
        %v773 = vmax.f32 %v626, 0.0
        %v774 = vmax.f32 %v629, 0.0
        %v775 = vmax.f32 %v632, 0.0
        %v776 = vmax.f32 %v635, 0.0
        %v777 = vmax.f32 %v638, 0.0
        %v778 = vmax.f32 %v641, 0.0
        %v779 = vmax.f32 %v644, 0.0
        %v780 = vmax.f32 %v647, 0.0
        %v781 = vmax.f32 %v650, 0.0
        %v782 = vmax.f32 %v653, 0.0
        %v783 = vmax.f32 %v656, 0.0
        %v784 = vmax.f32 %v659, 0.0
        %v785 = vmax.f32 %v662, 0.0
        %v786 = vmax.f32 %v665, 0.0
        %v787 = vmax.f32 %v668, 0.0
        %v788 = vmax.f32 %v671, 0.0
        %v789 = vmax.f32 %v674, 0.0
        %v790 = vmax.f32 %v677, 0.0
        %v791 = vmax.f32 %v680, 0.0
        %v792 = vmax.f32 %v683, 0.0
        %v793 = vmax.f32 %v686, 0.0
        %v794 = vmax.f32 %v689, 0.0
        %v795 = vmax.f32 %v692, 0.0
        %v796 = vmax.f32 %v695, 0.0
        %v797 = vmax.f32 %v698, 0.0
        %v798 = vmax.f32 %v701, 0.0
        %v799 = vmax.f32 %v704, 0.0
        %v800 = vmax.f32 %v707, 0.0
        %v801 = vmax.f32 %v710, 0.0
        %v802 = vmax.f32 %v713, 0.0
        %v803 = vmax.f32 %v716, 0.0
        %v804 = vmax.f32 %v719, 0.0
        %v805 = vmax.f32 %v722, 0.0
        %v806 = vmax.f32 %v725, 0.0
        %v807 = vmax.f32 %v728, 0.0
        %v808 = vmax.f32 %v731, 0.0
        %v809 = vmax.f32 %v734, 0.0
        %v810 = vmax.f32 %v737, 0.0
        %v811 = vmax.f32 %v739, %v757
        %v812 = vmax.f32 %v740, %v758
        %v813 = vmax.f32 %v741, %v759
        %v814 = vmax.f32 %v742, %v760
        %v815 = vmax.f32 %v743, %v761
        %v816 = vmax.f32 %v744, %v762
        %v817 = vmax.f32 %v745, %v763
        %v818 = vmax.f32 %v746, %v764
        %v819 = vmax.f32 %v747, %v765
        %v820 = vmax.f32 %v748, %v766
        %v821 = vmax.f32 %v749, %v767
        %v822 = vmax.f32 %v750, %v768
        %v823 = vmax.f32 %v751, %v769
        %v824 = vmax.f32 %v752, %v770
        %v825 = vmax.f32 %v753, %v771
        %v826 = vmax.f32 %v754, %v772
        %v827 = vmax.f32 %v755, %v773
        %v828 = vmax.f32 %v756, %v774
        %v829 = vmax.f32 %v775, %v793
        %v830 = vmax.f32 %v776, %v794
        %v831 = vmax.f32 %v777, %v795
        %v832 = vmax.f32 %v778, %v796
        %v833 = vmax.f32 %v779, %v797
        %v834 = vmax.f32 %v780, %v798
        %v835 = vmax.f32 %v781, %v799
        %v836 = vmax.f32 %v782, %v800
        %v837 = vmax.f32 %v783, %v801
        %v838 = vmax.f32 %v784, %v802
        %v839 = vmax.f32 %v785, %v803
        %v840 = vmax.f32 %v786, %v804
        %v841 = vmax.f32 %v787, %v805
        %v842 = vmax.f32 %v788, %v806
        %v843 = vmax.f32 %v789, %v807
        %v844 = vmax.f32 %v790, %v808
        %v845 = vmax.f32 %v791, %v809
        %v846 = vmax.f32 %v792, %v810
        %v847 = vmax.f32 %v811, %v829
        %v848 = vmax.f32 %v812, %v830
        %v849 = vmax.f32 %v813, %v831
        %v850 = vmax.f32 %v814, %v832
        %v851 = vmax.f32 %v815, %v833
        %v852 = vmax.f32 %v816, %v834
        %v853 = vmax.f32 %v817, %v835
        %v854 = vmax.f32 %v818, %v836
        %v855 = vmax.f32 %v819, %v837
        %v856 = vmax.f32 %v820, %v838
        %v857 = vmax.f32 %v821, %v839
        %v858 = vmax.f32 %v822, %v840
        %v859 = vmax.f32 %v823, %v841
        %v860 = vmax.f32 %v824, %v842
        %v861 = vmax.f32 %v825, %v843
        %v862 = vmax.f32 %v826, %v844
        %v863 = vmax.f32 %v827, %v845
        %v864 = vmax.f32 %v828, %v846
        %865 = vst [vmem:[%s208] sm:$0xff] %v847
        %866 = vst [vmem:[%s208 + $0x8] sm:$0xff] %v848
        %867 = vst [vmem:[%s208 + $0x10] sm:$0xff] %v849
        %868 = vst [vmem:[%s208 + $0x18] sm:$0xff] %v850
        %869 = vst [vmem:[%s208 + $0x20] sm:$0xff] %v851
        %870 = vst [vmem:[%s208 + $0x28] sm:$0xff] %v852
        %871 = vst [vmem:[%s208 + $0x30] sm:$0xff] %v853
        %872 = vst [vmem:[%s208 + $0x38] sm:$0xff] %v854
        %873 = vst [vmem:[%s208 + $0x40] sm:$0xff] %v855
        %874 = vst [vmem:[%s208 + $0x48] sm:$0xff] %v856
        %875 = vst [vmem:[%s208 + $0x50] sm:$0xff] %v857
        %876 = vst [vmem:[%s208 + $0x58] sm:$0xff] %v858
        %877 = vst [vmem:[%s208 + $0x60] sm:$0xff] %v859
        %878 = vst [vmem:[%s208 + $0x68] sm:$0xff] %v860
        %879 = vst [vmem:[%s208 + $0x70] sm:$0xff] %v861
        %880 = vst [vmem:[%s208 + $0x78] sm:$0xff] %v862
        %881 = vst [vmem:[%s208 + $0x80] sm:$0xff] %v863
        %882 = vst [vmem:[%s208 + $0x88] sm:$0xff] %v864
        %v883 = vmul.f32 %v847, %v847
        %v884 = vmul.f32 %v848, %v848
        %v885 = vmul.f32 %v849, %v849
        %v886 = vmul.f32 %v850, %v850
        %v887 = vmul.f32 %v851, %v851
        %v888 = vmul.f32 %v852, %v852
        %v889 = vmul.f32 %v853, %v853
        %v890 = vmul.f32 %v854, %v854
        %v891 = vmul.f32 %v855, %v855
        %v892 = vmul.f32 %v856, %v856
        %v893 = vmul.f32 %v857, %v857
        %v894 = vmul.f32 %v858, %v858
        %v895 = vmul.f32 %v859, %v859
        %v896 = vmul.f32 %v860, %v860
        %v897 = vmul.f32 %v861, %v861
        %v898 = vmul.f32 %v862, %v862
        %v899 = vmul.f32 %v863, %v863
        %v900 = vmul.f32 %v864, %v864
        %901 = vadd.xlane.f32.xlu0 %v883
        %v902 = vpop.xlane.xlu0 %901
        %903 = vadd.xlane.f32.xlu0 %v884
        %v904 = vpop.xlane.xlu0 %903
        %905 = vadd.xlane.f32.xlu0 %v885
        %v906 = vpop.xlane.xlu0 %905
        %907 = vadd.xlane.f32.xlu0 %v886
        %v908 = vpop.xlane.xlu0 %907
        %909 = vadd.xlane.f32.xlu0 %v887
        %v910 = vpop.xlane.xlu0 %909
        %911 = vadd.xlane.f32.xlu0 %v888
        %v912 = vpop.xlane.xlu0 %911
        %913 = vadd.xlane.f32.xlu0 %v889
        %v914 = vpop.xlane.xlu0 %913
        %915 = vadd.xlane.f32.xlu0 %v890
        %v916 = vpop.xlane.xlu0 %915
        %917 = vadd.xlane.f32.xlu0 %v891
        %v918 = vpop.xlane.xlu0 %917
        %919 = vadd.xlane.f32.xlu0 %v892
        %v920 = vpop.xlane.xlu0 %919
        %921 = vadd.xlane.f32.xlu0 %v893
        %v922 = vpop.xlane.xlu0 %921
        %923 = vadd.xlane.f32.xlu0 %v894
        %v924 = vpop.xlane.xlu0 %923
        %925 = vadd.xlane.f32.xlu0 %v895
        %v926 = vpop.xlane.xlu0 %925
        %927 = vadd.xlane.f32.xlu0 %v896
        %v928 = vpop.xlane.xlu0 %927
        %929 = vadd.xlane.f32.xlu0 %v897
        %v930 = vpop.xlane.xlu0 %929
        %931 = vadd.xlane.f32.xlu0 %v898
        %v932 = vpop.xlane.xlu0 %931
        %933 = vadd.xlane.f32.xlu0 %v899
        %v934 = vpop.xlane.xlu0 %933
        %935 = vadd.xlane.f32.xlu0 %v900
        %v936 = vpop.xlane.xlu0 %935
        %v937 = vmul.f32 %v902, %v902
        %v938 = vmul.f32 %v904, %v904
        %v939 = vmul.f32 %v906, %v906
        %v940 = vmul.f32 %v908, %v908
        %v941 = vmul.f32 %v910, %v910
        %v942 = vmul.f32 %v912, %v912
        %v943 = vmul.f32 %v914, %v914
        %v944 = vmul.f32 %v916, %v916
        %v945 = vmul.f32 %v918, %v918
        %v946 = vmul.f32 %v920, %v920
        %v947 = vmul.f32 %v922, %v922
        %v948 = vmul.f32 %v924, %v924
        %v949 = vmul.f32 %v926, %v926
        %v950 = vmul.f32 %v928, %v928
        %v951 = vmul.f32 %v930, %v930
        %v952 = vmul.f32 %v932, %v932
        %v953 = vmul.f32 %v934, %v934
        %v954 = vmul.f32 %v936, %v936
        %v955 = vadd.f32 %v937, %v938
        %v956 = vadd.f32 %v955, %v939
        %v957 = vadd.f32 %v956, %v940
        %v958 = vadd.f32 %v957, %v941
        %v959 = vadd.f32 %v958, %v942
        %v960 = vadd.f32 %v959, %v943
        %v961 = vadd.f32 %v960, %v944
        %v962 = vadd.f32 %v961, %v945
        %v963 = vadd.f32 %v962, %v946
        %v964 = vadd.f32 %v963, %v947
        %v965 = vadd.f32 %v964, %v948
        %v966 = vadd.f32 %v965, %v949
        %v967 = vadd.f32 %v966, %v950
        %v968 = vadd.f32 %v967, %v951
        %v969 = vadd.f32 %v968, %v952
        %v970 = vadd.f32 %v969, %v953
        %v971 = vadd.f32 %v970, %v954
        %v972 = vrot.slane %v971, 4
        %v973 = vadd.f32 %v971, %v972
        %v974 = vrot.slane %v973, 2
        %v975 = vadd.f32 %v973, %v974
        %v976 = vrot.slane %v975, 1
        %v977 = vadd.f32 %v975, %v976
        %v978 = vrsqrt.pop %v977
        %v979 = vmul.f32 %v978, %v977
        %v980 = vmul.f32 %v979, %v978
        %v981 = vmul.f32 0.5, %v980
        %v982 = vsub.f32 1.5, %v981
        %v983 = vmul.f32 %v978, %v982
        %v984 = vmul.f32 %v977, %v983
        %vm985 = vcmp.eq.f32.partialorder %v977, inf
        %v986 = vsel %vm985, %v977, %v984
        %vm987 = vcmp.eq.f32.partialorder %v977, 0.0
        %v988 = vand.u32 %v977, 2147483648
        %v989 = vsel %vm987, %v988, %v986
        %v990 = vadd.f32 %v989, 1e-06
        %v991 = vrcp.pop %v990
        %v992 = vmul.f32 %v990, %v991
        %v993 = vsub.f32 1.0, %v992
        %v994 = vmul.f32 %v991, %v993
        %v995 = vadd.f32 %v991, %v994
        %vm996 = vweird.f32 %v990
        %vm997 = vweird.f32 %v991
        %vm998 = vmor %vm996, %vm997
        %v999 = vsel %vm998, %v991, %v995
        %v1000 = vand.u32 2147483647, %v990
        %vm1001 = vcmp.eq.f32.partialorder %v1000, 8.507059e+37
        %v1002 = vand.u32 %v990, 2147483648
        %v1003 = vor.u32 1.1754944e-38, %v1002
        %v1004 = vsel %vm1001, %v1003, %v999
        %v1005 = vmul.f32 %v902, %v1004
        %v1006 = vmul.f32 %v904, %v1004
        %v1007 = vmul.f32 %v906, %v1004
        %v1008 = vmul.f32 %v908, %v1004
        %v1009 = vmul.f32 %v910, %v1004
        %v1010 = vmul.f32 %v912, %v1004
        %v1011 = vmul.f32 %v914, %v1004
        %v1012 = vmul.f32 %v916, %v1004
        %v1013 = vmul.f32 %v918, %v1004
        %v1014 = vmul.f32 %v920, %v1004
        %v1015 = vmul.f32 %v922, %v1004
        %v1016 = vmul.f32 %v924, %v1004
        %v1017 = vmul.f32 %v926, %v1004
        %v1018 = vmul.f32 %v928, %v1004
        %v1019 = vmul.f32 %v930, %v1004
        %v1020 = vmul.f32 %v932, %v1004
        %v1021 = vmul.f32 %v934, %v1004
        %v1022 = vmul.f32 %v936, %v1004
        %vm1023 = vcmask 7168
        %1024 = vst.msk [vmem:[%s198] sm:$0xff] %vm1023, %v1005
        %1025 = vst.msk [vmem:[%s198 + $0x8] sm:$0xff] %vm1023, %v1006
        %1026 = vst.msk [vmem:[%s198 + $0x10] sm:$0xff] %vm1023, %v1007
        %1027 = vst.msk [vmem:[%s198 + $0x18] sm:$0xff] %vm1023, %v1008
        %1028 = vst.msk [vmem:[%s198 + $0x20] sm:$0xff] %vm1023, %v1009
        %1029 = vst.msk [vmem:[%s198 + $0x28] sm:$0xff] %vm1023, %v1010
        %1030 = vst.msk [vmem:[%s198 + $0x30] sm:$0xff] %vm1023, %v1011
        %1031 = vst.msk [vmem:[%s198 + $0x38] sm:$0xff] %vm1023, %v1012
        %1032 = vst.msk [vmem:[%s198 + $0x40] sm:$0xff] %vm1023, %v1013
        %1033 = vst.msk [vmem:[%s198 + $0x48] sm:$0xff] %vm1023, %v1014
        %1034 = vst.msk [vmem:[%s198 + $0x50] sm:$0xff] %vm1023, %v1015
        %1035 = vst.msk [vmem:[%s198 + $0x58] sm:$0xff] %vm1023, %v1016
        %1036 = vst.msk [vmem:[%s198 + $0x60] sm:$0xff] %vm1023, %v1017
        %1037 = vst.msk [vmem:[%s198 + $0x68] sm:$0xff] %vm1023, %v1018
        %1038 = vst.msk [vmem:[%s198 + $0x70] sm:$0xff] %vm1023, %v1019
        %1039 = vst.msk [vmem:[%s198 + $0x78] sm:$0xff] %vm1023, %v1020
        %1040 = vst.msk [vmem:[%s198 + $0x80] sm:$0xff] %vm1023, %v1021
        %1041 = vst.msk [vmem:[%s198 + $0x88] sm:$0xff] %vm1023, %v1022
        %p1042 = scmp.lt.s32.totalorder %s19, 1
        %s1043 = scalar_select %p1042, %s19, 1
        %s1044 = smul.addr %s1043, 18
        %s1045 = smul.addr %s1044, 8
        %s1046 = scalar_lea.vmem %s3, %s1045
        %s1047 = sand.u32 %s121, 1
        %s1048 = scalar_lea.sflag [#allocation3], %s1047
        %s1049 = sand.u32 %s121, 1
        %s1050 = smul.addr %s1049, 144
        %s1051 = scalar_lea.vmem [#allocation2], %s1050
        // Predicated region
        $region33: #{cnn_forward.4} parent=31 // pred_check
          %p1052 = pneg %p105
        $region34: #{cnn_forward.4} parent=31 // pred_check_branch
          %1054 = sbr.rel (%p1052) target = $region36
        $region35: #{cnn_forward.4} parent=31 // pred_region
          _
        $region36: #{cnn_forward.4} parent=31 // pred_fallthru
          _
        // Predicated region
        $region37: #{cnn_forward.4} parent=31 // pred_check
          %p1055 = pneg %p131
        $region38: #{cnn_forward.4} parent=31 // pred_check_branch
          %1057 = sbr.rel (%p1055) target = $region40
        $region39: #{cnn_forward.4} parent=31 // pred_region
          %1059 = vsyncadd %s1048, 0
          %s1060 = smul.addr %s19, 18
          %s1061 = smul.addr %s1060, 8
          %s1062 = scalar_lea.hbm %s4, %s1061
          %s1063 = sshll.u32 %s1051, 4
          %s1064 = int_to_ptr.vmem [resolvable:$true] %s1063
          %s1065 = sshll.u32 %s1062, 4
          %s1066 = int_to_ptr.hbm [resolvable:$true] %s1065
          %1071 = dma.vmem_to_hbm [thread:$0]  %s1064, 2304, %s1066, %s1048, 128, 128, 8
        $region40: #{cnn_forward.4} parent=31 // pred_fallthru
          _
      $region32: #{cnn_forward.4} parent=5 // pred_fallthru
        _
      %p1072 = scmp.le.s32.totalorder 2, %s14
      // Predicated region
      $region41: #{cnn_forward.4} parent=5 // pred_check
        %p1073 = pneg %p1072
      $region42: #{cnn_forward.4} parent=5 // pred_check_branch
        %1075 = sbr.rel (%p1073) target = $region44
      $region43: #{cnn_forward.4} parent=5 // pred_region
        %s1076 = ssub.s32 %s14, 2
        // Predicated region
        $region45: #{cnn_forward.4} parent=43 // pred_check
          %p1077 = pneg %p111
        $region46: #{cnn_forward.4} parent=43 // pred_check_branch
          %1079 = sbr.rel (%p1077) target = $region48
        $region47: #{cnn_forward.4} parent=43 // pred_region
          %p1080 = scmp.lt.s32.totalorder %s20, 1
          %s1081 = scalar_select %p1080, %s20, 1
          %s1082 = smul.addr %s1081, 18
          %s1083 = smul.addr %s1082, 8
          %s1084 = scalar_lea.vmem %s3, %s1083
        $region48: #{cnn_forward.4} parent=43 // pred_fallthru
          _
        // Predicated region
        $region49: #{cnn_forward.4} parent=43 // pred_check
          %p1085 = pneg %p137
        $region50: #{cnn_forward.4} parent=43 // pred_check_branch
          %1087 = sbr.rel (%p1085) target = $region52
        $region51: #{cnn_forward.4} parent=43 // pred_region
          %s1088 = sand.u32 %s122, 1
          %s1089 = scalar_lea.sflag [#allocation3], %s1088
          %s1090 = sand.u32 %s122, 1
          %s1091 = smul.addr %s1090, 144
          %s1092 = scalar_lea.vmem [#allocation2], %s1091
          %1094 = dma.done %s1089, 2304
        $region52: #{cnn_forward.4} parent=43 // pred_fallthru
          _
      $region44: #{cnn_forward.4} parent=5 // pred_fallthru
        _
    $region6: #{cnn_forward.4} parent=1 // loop_footer
      %s18 = sadd.s32 1, %s14
    $region7: #{cnn_forward.4} parent=1 // loop_footer_branch
      %13 = sbr.rel target = $region3
    $region8: #{cnn_forward.4} parent=1 // loop_exit
      _
    %1095 = vsyncpa [#allocation3], 1
    %s1096 = scalar_lea.sflag [#allocation3], 1
    %1097 = vsyncpa %s1096, 1

// kernel: cnn_forward.5
$region0: #{cnn_forward.5}
  #allocation0 [shape = 'u32[]', space=smem, size = 0x4, offset = 0x4, fixed_abs, tag = 'smem constant byte address 0x4 - core index']
  #allocation1 [shape = 'u32[72,128]{1,0:T(1,128)}', space=vmem, size = 0x9000, scoped, tag = 'internal scratch']
  %s0 = inlined_call_operand.vmem [shape: f32[2,4,16,512], index: 0, kind: input, shape index: {}]
  %s1 = inlined_call_operand.vmem [shape: f32[512,128], index: 1, kind: input, shape index: {}]
  %s2 = inlined_call_operand.vmem [shape: f32[1,128], index: 2, kind: input, shape index: {}]
  %s3 = inlined_call_operand.vmem [shape: f32[2,16,128], index: 3, kind: output, shape index: {0}]
  %s4 = inlined_call_operand.hbm [shape: f32[2,16,1], index: 4, kind: output, shape index: {1}]
  %5 = xla_tuple %s3, %s4
  %s6 = sld [smem:[#allocation0]]
  $region53: #{cnn_forward.5} parent=0
    _
  %s8 = ssub.s32 1, %s6
  %s9 = scalar_select 0, %s8, %s6
  $region1: #{cnn_forward.5} parent=0
    #allocation2 [shape = 'u8[16384]{0}', space=vmem, size = 0x4000, scoped, tag = 'output window, operand 1']
    #allocation3 [shape = 's32[2]{0}', space=sflag, size = 0x8, scoped, tag = 'scoped memory for cnn_forward.5']
    %10 = vsyncpa [#allocation3], 0
    %s11 = scalar_lea.sflag [#allocation3], 1
    %12 = vsyncpa %s11, 0
    loop: start=0, step=1, limit=4
    $region2: #{cnn_forward.5} parent=1 // loop_pre_header
      _
    $region3: #{cnn_forward.5} parent=1 // loop_header
      %s14 = sphi 0, %s18
      %p15 = scmp.ge.s32.totalorder %s14, 4
      %s24 = sphi 0, %s26
      %s27 = sphi 0, %s24
      %s28 = sphi 0, %s27
      %s44 = sphi 0, %s28
      %s48 = sphi 0, %s48
      %s50 = sphi 0, %s48
      %s51 = sphi 0, %s50
      %s65 = sphi 0, %s51
      %s69 = sphi 0, %s69
      %s71 = sphi 0, %s69
      %s72 = sphi 0, %s71
      %s86 = sphi 0, %s72
      %s92 = sphi 0, %s94
      %s95 = sphi 0, %s92
      %s96 = sphi 0, %s95
      %s112 = sphi 0, %s96
      %s118 = sphi 0, %s120
      %s121 = sphi 0, %s118
      %s122 = sphi 0, %s121
      %s138 = sphi 0, %s122
    $region4: #{cnn_forward.5} parent=1 // loop_header_branch
      %17 = sbr.rel (%p15) target = $region8
    $region5: #{cnn_forward.5} parent=1 // loop_body
      %s19 = ssub.s32 %s14, 1
      %s20 = ssub.s32 %s14, 2
      %s21 = sadd.s32 %s14, 1
      %s22 = ssub.s32 %s14, %s21
      %p23 = scmp.eq.s32.totalorder %s22, 0
      %s25 = sadd.s32 %s24, 1
      %s26 = scalar_select %p23, %s24, %s25
      %p29 = pneg %p23
      %p30 = scmp.eq.s32.totalorder %s14, 1
      %p31 = por %p29, %p30
      %p32 = scmp.ne.s32.totalorder %s24, %s27
      %p33 = scmp.eq.s32.totalorder %s14, 0
      %p34 = por %p32, %p33
      %p35 = scmp.ne.s32.totalorder %s24, %s27
      %p36 = scmp.eq.s32.totalorder %s19, 1
      %p37 = por %p35, %p36
      %p38 = scmp.ne.s32.totalorder %s27, %s28
      %p39 = scmp.eq.s32.totalorder %s19, 0
      %p40 = por %p38, %p39
      %p41 = scmp.ne.s32.totalorder %s27, %s28
      %p42 = scmp.eq.s32.totalorder %s20, 1
      %p43 = por %p41, %p42
      %p45 = scmp.ne.s32.totalorder %s28, %s44
      %p46 = scmp.eq.s32.totalorder %s20, 0
      %p47 = por %p45, %p46
      %s49 = sadd.s32 %s48, 1
      %p52 = scmp.eq.s32.totalorder %s14, 1
      %p53 = scmp.ne.s32.totalorder %s48, %s50
      %p54 = scmp.eq.s32.totalorder %s14, 0
      %p55 = por %p53, %p54
      %p56 = scmp.ne.s32.totalorder %s48, %s50
      %p57 = scmp.eq.s32.totalorder %s19, 1
      %p58 = por %p56, %p57
      %p59 = scmp.ne.s32.totalorder %s50, %s51
      %p60 = scmp.eq.s32.totalorder %s19, 0
      %p61 = por %p59, %p60
      %p62 = scmp.ne.s32.totalorder %s50, %s51
      %p63 = scmp.eq.s32.totalorder %s20, 1
      %p64 = por %p62, %p63
      %p66 = scmp.ne.s32.totalorder %s51, %s65
      %p67 = scmp.eq.s32.totalorder %s20, 0
      %p68 = por %p66, %p67
      %s70 = sadd.s32 %s69, 1
      %p73 = scmp.eq.s32.totalorder %s14, 1
      %p74 = scmp.ne.s32.totalorder %s69, %s71
      %p75 = scmp.eq.s32.totalorder %s14, 0
      %p76 = por %p74, %p75
      %p77 = scmp.ne.s32.totalorder %s69, %s71
      %p78 = scmp.eq.s32.totalorder %s19, 1
      %p79 = por %p77, %p78
      %p80 = scmp.ne.s32.totalorder %s71, %s72
      %p81 = scmp.eq.s32.totalorder %s19, 0
      %p82 = por %p80, %p81
      %p83 = scmp.ne.s32.totalorder %s71, %s72
      %p84 = scmp.eq.s32.totalorder %s20, 1
      %p85 = por %p83, %p84
      %p87 = scmp.ne.s32.totalorder %s72, %s86
      %p88 = scmp.eq.s32.totalorder %s20, 0
      %p89 = por %p87, %p88
      %s90 = ssub.s32 %s14, %s21
      %p91 = scmp.eq.s32.totalorder %s90, 0
      %s93 = sadd.s32 %s92, 1
      %s94 = scalar_select %p91, %s92, %s93
      %p97 = pneg %p91
      %p98 = scmp.eq.s32.totalorder %s14, 1
      %p99 = por %p97, %p98
      %p100 = scmp.ne.s32.totalorder %s92, %s95
      %p101 = scmp.eq.s32.totalorder %s14, 0
      %p102 = por %p100, %p101
      %p103 = scmp.ne.s32.totalorder %s92, %s95
      %p104 = scmp.eq.s32.totalorder %s19, 1
      %p105 = por %p103, %p104
      %p106 = scmp.ne.s32.totalorder %s95, %s96
      %p107 = scmp.eq.s32.totalorder %s19, 0
      %p108 = por %p106, %p107
      %p109 = scmp.ne.s32.totalorder %s95, %s96
      %p110 = scmp.eq.s32.totalorder %s20, 1
      %p111 = por %p109, %p110
      %p113 = scmp.ne.s32.totalorder %s96, %s112
      %p114 = scmp.eq.s32.totalorder %s20, 0
      %p115 = por %p113, %p114
      %s116 = ssub.s32 %s14, %s21
      %p117 = scmp.eq.s32.totalorder %s116, 0
      %s119 = sadd.s32 %s118, 1
      %s120 = scalar_select %p117, %s118, %s119
      %p123 = pneg %p117
      %p124 = scmp.eq.s32.totalorder %s14, 1
      %p125 = por %p123, %p124
      %p126 = scmp.ne.s32.totalorder %s118, %s121
      %p127 = scmp.eq.s32.totalorder %s14, 0
      %p128 = por %p126, %p127
      %p129 = scmp.ne.s32.totalorder %s118, %s121
      %p130 = scmp.eq.s32.totalorder %s19, 1
      %p131 = por %p129, %p130
      %p132 = scmp.ne.s32.totalorder %s121, %s122
      %p133 = scmp.eq.s32.totalorder %s19, 0
      %p134 = por %p132, %p133
      %p135 = scmp.ne.s32.totalorder %s121, %s122
      %p136 = scmp.eq.s32.totalorder %s20, 1
      %p137 = por %p135, %p136
      %p139 = scmp.ne.s32.totalorder %s122, %s138
      %p140 = scmp.eq.s32.totalorder %s20, 0
      %p141 = por %p139, %p140
      %p142 = scmp.le.s32.totalorder 1, %s14
      %p143 = scmp.lt.s32.totalorder %s14, 3
      %p144 = pnand %p142, %p143
      %p145 = pneg %p144
      // Predicated region
      $region9: #{cnn_forward.5} parent=5 // pred_check
        _
      $region10: #{cnn_forward.5} parent=5 // pred_check_branch
        %147 = sbr.rel (%p144) target = $region12
      $region11: #{cnn_forward.5} parent=5 // pred_region
        %s148 = ssub.s32 %s14, 1
        // Predicated region
        $region13: #{cnn_forward.5} parent=11 // pred_check
          %p149 = pneg %p61
        $region14: #{cnn_forward.5} parent=11 // pred_check_branch
          %151 = sbr.rel (%p149) target = $region16
        $region15: #{cnn_forward.5} parent=11 // pred_region
          _
        $region16: #{cnn_forward.5} parent=11 // pred_fallthru
          _
        // Predicated region
        $region17: #{cnn_forward.5} parent=11 // pred_check
          %p152 = pneg %p82
        $region18: #{cnn_forward.5} parent=11 // pred_check_branch
          %154 = sbr.rel (%p152) target = $region20
        $region19: #{cnn_forward.5} parent=11 // pred_region
          _
        $region20: #{cnn_forward.5} parent=11 // pred_fallthru
          _
      $region12: #{cnn_forward.5} parent=5 // pred_fallthru
        _
      %p155 = scmp.lt.s32.totalorder %s14, 2
      // Predicated region
      $region21: #{cnn_forward.5} parent=5 // pred_check
        %p156 = pneg %p155
      $region22: #{cnn_forward.5} parent=5 // pred_check_branch
        %158 = sbr.rel (%p156) target = $region24
      $region23: #{cnn_forward.5} parent=5 // pred_region
        // Predicated region
        $region25: #{cnn_forward.5} parent=23 // pred_check
          %p159 = pneg %p34
        $region26: #{cnn_forward.5} parent=23 // pred_check_branch
          %161 = sbr.rel (%p159) target = $region28
        $region27: #{cnn_forward.5} parent=23 // pred_region
          %p162 = scmp.lt.s32.totalorder %s14, 1
          %s163 = scalar_select %p162, %s14, 1
          %s164 = smul.addr %s163, 32
          %s165 = smul.addr %s164, 8
          %s166 = scalar_lea.vmem %s0, %s165
        $region28: #{cnn_forward.5} parent=23 // pred_fallthru
          _
      $region24: #{cnn_forward.5} parent=5 // pred_fallthru
        _
      %p167 = scmp.le.s32.totalorder 1, %s14
      %p168 = scmp.lt.s32.totalorder %s14, 3
      %p169 = pnand %p167, %p168
      %p170 = pneg %p169
      // Predicated region
      $region29: #{cnn_forward.5} parent=5 // pred_check
        _
      $region30: #{cnn_forward.5} parent=5 // pred_check_branch
        %172 = sbr.rel (%p169) target = $region32
      $region31: #{cnn_forward.5} parent=5 // pred_region
        %s173 = ssub.s32 %s14, 1
        %p174 = scmp.lt.s32.totalorder %s19, 1
        %s175 = scalar_select %p174, %s19, 1
        %s176 = smul.addr %s175, 32
        %s177 = smul.addr %s176, 8
        %s178 = scalar_lea.vmem %s0, %s177
        %p179 = pneg %p40
        %p180 = pneg %p37
        %p181 = pneg %p61
        %p182 = pneg %p58
        %p183 = pneg %p82
        %p184 = pneg %p79
        %p185 = pneg %p108
        %p186 = pneg %p105
        %p187 = scmp.lt.s32.totalorder %s19, 1
        %s188 = scalar_select %p187, %s19, 1
        %s189 = smul.addr %s188, 2
        %s190 = smul.addr %s189, 8
        %s191 = scalar_lea.vmem %s3, %s190
        %p192 = pneg %p134
        %p193 = pneg %p131
        %s194 = sand.u32 %s121, 1
        %s195 = scalar_lea.sflag [#allocation3], %s194
        %s196 = sand.u32 %s121, 1
        %s197 = smul.addr %s196, 16
        %s198 = scalar_lea.vmem [#allocation2], %s197
        %p199 = scmp.lt.s32.totalorder %s19, 1
        %s200 = scalar_select %p199, %s19, 1
        %s201 = smul.addr %s200, 32
        %s202 = smul.addr %s201, 8
        %s203 = scalar_lea.vmem %s0, %s202
        %p204 = scmp.lt.s32.totalorder %s19, 1
        %s205 = scalar_select %p204, %s19, 1
        %s206 = smul.addr %s205, 2
        %s207 = smul.addr %s206, 8
        %s208 = scalar_lea.vmem %s3, %s207
        %v209 = vld [vmem:[%s203] sm:$0xff]
        %v210 = vld [vmem:[%s203 + $0x8] sm:$0xff]
        %v211 = vld [vmem:[%s203 + $0x10] sm:$0xff]
        %v212 = vld [vmem:[%s203 + $0x18] sm:$0xff]
        %v213 = vld [vmem:[%s203 + $0x20] sm:$0xff]
        %v214 = vld [vmem:[%s203 + $0x28] sm:$0xff]
        %v215 = vld [vmem:[%s203 + $0x30] sm:$0xff]
        %v216 = vld [vmem:[%s203 + $0x38] sm:$0xff]
        %v217 = vld [vmem:[%s203 + $0x40] sm:$0xff]
        %v218 = vld [vmem:[%s203 + $0x48] sm:$0xff]
        %v219 = vld [vmem:[%s203 + $0x50] sm:$0xff]
        %v220 = vld [vmem:[%s203 + $0x58] sm:$0xff]
        %v221 = vld [vmem:[%s203 + $0x60] sm:$0xff]
        %v222 = vld [vmem:[%s203 + $0x68] sm:$0xff]
        %v223 = vld [vmem:[%s203 + $0x70] sm:$0xff]
        %v224 = vld [vmem:[%s203 + $0x78] sm:$0xff]
        %v225 = vld [vmem:[%s203 + $0x80] sm:$0xff]
        %v226 = vld [vmem:[%s203 + $0x88] sm:$0xff]
        %v227 = vld [vmem:[%s203 + $0x90] sm:$0xff]
        %v228 = vld [vmem:[%s203 + $0x98] sm:$0xff]
        %v229 = vld [vmem:[%s203 + $0xa0] sm:$0xff]
        %v230 = vld [vmem:[%s203 + $0xa8] sm:$0xff]
        %v231 = vld [vmem:[%s203 + $0xb0] sm:$0xff]
        %v232 = vld [vmem:[%s203 + $0xb8] sm:$0xff]
        %v233 = vld [vmem:[%s203 + $0xc0] sm:$0xff]
        %v234 = vld [vmem:[%s203 + $0xc8] sm:$0xff]
        %v235 = vld [vmem:[%s203 + $0xd0] sm:$0xff]
        %v236 = vld [vmem:[%s203 + $0xd8] sm:$0xff]
        %v237 = vld [vmem:[%s203 + $0xe0] sm:$0xff]
        %v238 = vld [vmem:[%s203 + $0xe8] sm:$0xff]
        %v239 = vld [vmem:[%s203 + $0xf0] sm:$0xff]
        %v240 = vld [vmem:[%s203 + $0xf8] sm:$0xff]
        %v241 = vld [vmem:[%s1] sm:$0xff]
        %v242 = vld [vmem:[%s1 + $0x8] sm:$0xff]
        %v243 = vld [vmem:[%s1 + $0x10] sm:$0xff]
        %v244 = vld [vmem:[%s1 + $0x18] sm:$0xff]
        %v245 = vld [vmem:[%s1 + $0x20] sm:$0xff]
        %v246 = vld [vmem:[%s1 + $0x28] sm:$0xff]
        %v247 = vld [vmem:[%s1 + $0x30] sm:$0xff]
        %v248 = vld [vmem:[%s1 + $0x38] sm:$0xff]
        %v249 = vld [vmem:[%s1 + $0x40] sm:$0xff]
        %v250 = vld [vmem:[%s1 + $0x48] sm:$0xff]
        %v251 = vld [vmem:[%s1 + $0x50] sm:$0xff]
        %v252 = vld [vmem:[%s1 + $0x58] sm:$0xff]
        %v253 = vld [vmem:[%s1 + $0x60] sm:$0xff]
        %v254 = vld [vmem:[%s1 + $0x68] sm:$0xff]
        %v255 = vld [vmem:[%s1 + $0x70] sm:$0xff]
        %v256 = vld [vmem:[%s1 + $0x78] sm:$0xff]
        %v257 = vld [vmem:[%s1 + $0x80] sm:$0xff]
        %v258 = vld [vmem:[%s1 + $0x88] sm:$0xff]
        %v259 = vld [vmem:[%s1 + $0x90] sm:$0xff]
        %v260 = vld [vmem:[%s1 + $0x98] sm:$0xff]
        %v261 = vld [vmem:[%s1 + $0xa0] sm:$0xff]
        %v262 = vld [vmem:[%s1 + $0xa8] sm:$0xff]
        %v263 = vld [vmem:[%s1 + $0xb0] sm:$0xff]
        %v264 = vld [vmem:[%s1 + $0xb8] sm:$0xff]
        %v265 = vld [vmem:[%s1 + $0xc0] sm:$0xff]
        %v266 = vld [vmem:[%s1 + $0xc8] sm:$0xff]
        %v267 = vld [vmem:[%s1 + $0xd0] sm:$0xff]
        %v268 = vld [vmem:[%s1 + $0xd8] sm:$0xff]
        %v269 = vld [vmem:[%s1 + $0xe0] sm:$0xff]
        %v270 = vld [vmem:[%s1 + $0xe8] sm:$0xff]
        %v271 = vld [vmem:[%s1 + $0xf0] sm:$0xff]
        %v272 = vld [vmem:[%s1 + $0xf8] sm:$0xff]
        %v273 = vld [vmem:[%s1 + $0x100] sm:$0xff]
        %v274 = vld [vmem:[%s1 + $0x108] sm:$0xff]
        %v275 = vld [vmem:[%s1 + $0x110] sm:$0xff]
        %v276 = vld [vmem:[%s1 + $0x118] sm:$0xff]
        %v277 = vld [vmem:[%s1 + $0x120] sm:$0xff]
        %v278 = vld [vmem:[%s1 + $0x128] sm:$0xff]
        %v279 = vld [vmem:[%s1 + $0x130] sm:$0xff]
        %v280 = vld [vmem:[%s1 + $0x138] sm:$0xff]
        %v281 = vld [vmem:[%s1 + $0x140] sm:$0xff]
        %v282 = vld [vmem:[%s1 + $0x148] sm:$0xff]
        %v283 = vld [vmem:[%s1 + $0x150] sm:$0xff]
        %v284 = vld [vmem:[%s1 + $0x158] sm:$0xff]
        %v285 = vld [vmem:[%s1 + $0x160] sm:$0xff]
        %v286 = vld [vmem:[%s1 + $0x168] sm:$0xff]
        %v287 = vld [vmem:[%s1 + $0x170] sm:$0xff]
        %v288 = vld [vmem:[%s1 + $0x178] sm:$0xff]
        %v289 = vld [vmem:[%s1 + $0x180] sm:$0xff]
        %v290 = vld [vmem:[%s1 + $0x188] sm:$0xff]
        %v291 = vld [vmem:[%s1 + $0x190] sm:$0xff]
        %v292 = vld [vmem:[%s1 + $0x198] sm:$0xff]
        %v293 = vld [vmem:[%s1 + $0x1a0] sm:$0xff]
        %v294 = vld [vmem:[%s1 + $0x1a8] sm:$0xff]
        %v295 = vld [vmem:[%s1 + $0x1b0] sm:$0xff]
        %v296 = vld [vmem:[%s1 + $0x1b8] sm:$0xff]
        %v297 = vld [vmem:[%s1 + $0x1c0] sm:$0xff]
        %v298 = vld [vmem:[%s1 + $0x1c8] sm:$0xff]
        %v299 = vld [vmem:[%s1 + $0x1d0] sm:$0xff]
        %v300 = vld [vmem:[%s1 + $0x1d8] sm:$0xff]
        %v301 = vld [vmem:[%s1 + $0x1e0] sm:$0xff]
        %v302 = vld [vmem:[%s1 + $0x1e8] sm:$0xff]
        %v303 = vld [vmem:[%s1 + $0x1f0] sm:$0xff]
        %v304 = vld [vmem:[%s1 + $0x1f8] sm:$0xff]
        %v305 = vld [vmem:[%s2] sm:$0x1]
        %v307 = vperm.slane %v305, 0
        %309 = vmatpush.msra.mxu0 %v256
        %310 = vmatpush.msra.mxu0 %v255
        %311 = vmatpush.msra.mxu0 %v254
        %312 = vmatpush.msra.mxu0 %v253
        %313 = vmatpush.msra.mxu0 %v252
        %314 = vmatpush.msra.mxu0 %v251
        %315 = vmatpush.msra.mxu0 %v250
        %316 = vmatpush.msra.mxu0 %v249
        %317 = vmatpush.msra.mxu0 %v248
        %318 = vmatpush.msra.mxu0 %v247
        %319 = vmatpush.msra.mxu0 %v246
        %320 = vmatpush.msra.mxu0 %v245
        %321 = vmatpush.msra.mxu0 %v244
        %322 = vmatpush.msra.mxu0 %v243
        %323 = vmatpush.msra.mxu0 %v242
        %324 = vmatpush.msra.mxu0 %v241
        %325 = vmatmul.f32.gmra.mxu0 %v209
        %v326 = vpop.f32.mrf.mxu0
        %v327 = vadd.f32 %v307, %v326
        %328 = vmatmul.f32.gmra.mxu0 %v213
        %v329 = vpop.f32.mrf.mxu0
        %v330 = vadd.f32 %v307, %v329
        %331 = vmatmul.f32.gmra.mxu0 %v217
        %v332 = vpop.f32.mrf.mxu0
        %v333 = vadd.f32 %v307, %v332
        %334 = vmatmul.f32.gmra.mxu0 %v221
        %v335 = vpop.f32.mrf.mxu0
        %v336 = vadd.f32 %v307, %v335
        %337 = vmatmul.f32.gmra.mxu0 %v225
        %v338 = vpop.f32.mrf.mxu0
        %v339 = vadd.f32 %v307, %v338
        %340 = vmatmul.f32.gmra.mxu0 %v229
        %v341 = vpop.f32.mrf.mxu0
        %v342 = vadd.f32 %v307, %v341
        %343 = vmatmul.f32.gmra.mxu0 %v233
        %v344 = vpop.f32.mrf.mxu0
        %v345 = vadd.f32 %v307, %v344
        %346 = vmatmul.f32.gmra.mxu0 %v237
        %v347 = vpop.f32.mrf.mxu0
        %v348 = vadd.f32 %v307, %v347
        %349 = vdwg.mxu0
        %350 = vmatpush.msra.mxu0 %v272
        %351 = vmatpush.msra.mxu0 %v271
        %352 = vmatpush.msra.mxu0 %v270
        %353 = vmatpush.msra.mxu0 %v269
        %354 = vmatpush.msra.mxu0 %v268
        %355 = vmatpush.msra.mxu0 %v267
        %356 = vmatpush.msra.mxu0 %v266
        %357 = vmatpush.msra.mxu0 %v265
        %358 = vmatpush.msra.mxu0 %v264
        %359 = vmatpush.msra.mxu0 %v263
        %360 = vmatpush.msra.mxu0 %v262
        %361 = vmatpush.msra.mxu0 %v261
        %362 = vmatpush.msra.mxu0 %v260
        %363 = vmatpush.msra.mxu0 %v259
        %364 = vmatpush.msra.mxu0 %v258
        %365 = vmatpush.msra.mxu0 %v257
        %366 = vmatmul.f32.gmra.mxu0 %v210
        %v367 = vpop.f32.mrf.mxu0
        %v368 = vadd.f32 %v327, %v367
        %369 = vmatmul.f32.gmra.mxu0 %v214
        %v370 = vpop.f32.mrf.mxu0
        %v371 = vadd.f32 %v330, %v370
        %372 = vmatmul.f32.gmra.mxu0 %v218
        %v373 = vpop.f32.mrf.mxu0
        %v374 = vadd.f32 %v333, %v373
        %375 = vmatmul.f32.gmra.mxu0 %v222
        %v376 = vpop.f32.mrf.mxu0
        %v377 = vadd.f32 %v336, %v376
        %378 = vmatmul.f32.gmra.mxu0 %v226
        %v379 = vpop.f32.mrf.mxu0
        %v380 = vadd.f32 %v339, %v379
        %381 = vmatmul.f32.gmra.mxu0 %v230
        %v382 = vpop.f32.mrf.mxu0
        %v383 = vadd.f32 %v342, %v382
        %384 = vmatmul.f32.gmra.mxu0 %v234
        %v385 = vpop.f32.mrf.mxu0
        %v386 = vadd.f32 %v345, %v385
        %387 = vmatmul.f32.gmra.mxu0 %v238
        %v388 = vpop.f32.mrf.mxu0
        %v389 = vadd.f32 %v348, %v388
        %390 = vdwg.mxu0
        %391 = vmatpush.msra.mxu0 %v288
        %392 = vmatpush.msra.mxu0 %v287
        %393 = vmatpush.msra.mxu0 %v286
        %394 = vmatpush.msra.mxu0 %v285
        %395 = vmatpush.msra.mxu0 %v284
        %396 = vmatpush.msra.mxu0 %v283
        %397 = vmatpush.msra.mxu0 %v282
        %398 = vmatpush.msra.mxu0 %v281
        %399 = vmatpush.msra.mxu0 %v280
        %400 = vmatpush.msra.mxu0 %v279
        %401 = vmatpush.msra.mxu0 %v278
        %402 = vmatpush.msra.mxu0 %v277
        %403 = vmatpush.msra.mxu0 %v276
        %404 = vmatpush.msra.mxu0 %v275
        %405 = vmatpush.msra.mxu0 %v274
        %406 = vmatpush.msra.mxu0 %v273
        %407 = vmatmul.f32.gmra.mxu0 %v211
        %v408 = vpop.f32.mrf.mxu0
        %v409 = vadd.f32 %v368, %v408
        %410 = vmatmul.f32.gmra.mxu0 %v215
        %v411 = vpop.f32.mrf.mxu0
        %v412 = vadd.f32 %v371, %v411
        %413 = vmatmul.f32.gmra.mxu0 %v219
        %v414 = vpop.f32.mrf.mxu0
        %v415 = vadd.f32 %v374, %v414
        %416 = vmatmul.f32.gmra.mxu0 %v223
        %v417 = vpop.f32.mrf.mxu0
        %v418 = vadd.f32 %v377, %v417
        %419 = vmatmul.f32.gmra.mxu0 %v227
        %v420 = vpop.f32.mrf.mxu0
        %v421 = vadd.f32 %v380, %v420
        %422 = vmatmul.f32.gmra.mxu0 %v231
        %v423 = vpop.f32.mrf.mxu0
        %v424 = vadd.f32 %v383, %v423
        %425 = vmatmul.f32.gmra.mxu0 %v235
        %v426 = vpop.f32.mrf.mxu0
        %v427 = vadd.f32 %v386, %v426
        %428 = vmatmul.f32.gmra.mxu0 %v239
        %v429 = vpop.f32.mrf.mxu0
        %v430 = vadd.f32 %v389, %v429
        %431 = vdwg.mxu0
        %432 = vmatpush.msra.mxu0 %v304
        %433 = vmatpush.msra.mxu0 %v303
        %434 = vmatpush.msra.mxu0 %v302
        %435 = vmatpush.msra.mxu0 %v301
        %436 = vmatpush.msra.mxu0 %v300
        %437 = vmatpush.msra.mxu0 %v299
        %438 = vmatpush.msra.mxu0 %v298
        %439 = vmatpush.msra.mxu0 %v297
        %440 = vmatpush.msra.mxu0 %v296
        %441 = vmatpush.msra.mxu0 %v295
        %442 = vmatpush.msra.mxu0 %v294
        %443 = vmatpush.msra.mxu0 %v293
        %444 = vmatpush.msra.mxu0 %v292
        %445 = vmatpush.msra.mxu0 %v291
        %446 = vmatpush.msra.mxu0 %v290
        %447 = vmatpush.msra.mxu0 %v289
        %448 = vmatmul.f32.gmra.mxu0 %v212
        %v449 = vpop.f32.mrf.mxu0
        %v450 = vadd.f32 %v409, %v449
        %451 = vmatmul.f32.gmra.mxu0 %v216
        %v452 = vpop.f32.mrf.mxu0
        %v453 = vadd.f32 %v412, %v452
        %454 = vmatmul.f32.gmra.mxu0 %v220
        %v455 = vpop.f32.mrf.mxu0
        %v456 = vadd.f32 %v415, %v455
        %457 = vmatmul.f32.gmra.mxu0 %v224
        %v458 = vpop.f32.mrf.mxu0
        %v459 = vadd.f32 %v418, %v458
        %460 = vmatmul.f32.gmra.mxu0 %v228
        %v461 = vpop.f32.mrf.mxu0
        %v462 = vadd.f32 %v421, %v461
        %463 = vmatmul.f32.gmra.mxu0 %v232
        %v464 = vpop.f32.mrf.mxu0
        %v465 = vadd.f32 %v424, %v464
        %466 = vmatmul.f32.gmra.mxu0 %v236
        %v467 = vpop.f32.mrf.mxu0
        %v468 = vadd.f32 %v427, %v467
        %469 = vmatmul.f32.gmra.mxu0 %v240
        %v470 = vpop.f32.mrf.mxu0
        %v471 = vadd.f32 %v430, %v470
        %472 = vdwg.mxu0
        %v473 = vmax.f32 %v450, 0.0
        %v474 = vmax.f32 %v453, 0.0
        %v475 = vmax.f32 %v456, 0.0
        %v476 = vmax.f32 %v459, 0.0
        %v477 = vmax.f32 %v462, 0.0
        %v478 = vmax.f32 %v465, 0.0
        %v479 = vmax.f32 %v468, 0.0
        %v480 = vmax.f32 %v471, 0.0
        %v481 = vmax.f32 %v473, %v475
        %v482 = vmax.f32 %v474, %v476
        %v483 = vmax.f32 %v477, %v479
        %v484 = vmax.f32 %v478, %v480
        %v485 = vmax.f32 %v481, %v483
        %v486 = vmax.f32 %v482, %v484
        %487 = vst [vmem:[%s208] sm:$0xff] %v485
        %488 = vst [vmem:[%s208 + $0x8] sm:$0xff] %v486
        %v489 = vmul.f32 %v485, %v485
        %v490 = vmul.f32 %v486, %v486
        %491 = vadd.xlane.f32.xlu0 %v489
        %v492 = vpop.xlane.xlu0 %491
        %493 = vadd.xlane.f32.xlu0 %v490
        %v494 = vpop.xlane.xlu0 %493
        %v495 = vmul.f32 %v492, %v492
        %v496 = vmul.f32 %v494, %v494
        %v497 = vadd.f32 %v495, %v496
        %v498 = vrot.slane %v497, 4
        %v499 = vadd.f32 %v497, %v498
        %v500 = vrot.slane %v499, 2
        %v501 = vadd.f32 %v499, %v500
        %v502 = vrot.slane %v501, 1
        %v503 = vadd.f32 %v501, %v502
        %v504 = vrsqrt.pop %v503
        %v505 = vmul.f32 %v504, %v503
        %v506 = vmul.f32 %v505, %v504
        %v507 = vmul.f32 0.5, %v506
        %v508 = vsub.f32 1.5, %v507
        %v509 = vmul.f32 %v504, %v508
        %v510 = vmul.f32 %v503, %v509
        %vm511 = vcmp.eq.f32.partialorder %v503, inf
        %v512 = vsel %vm511, %v503, %v510
        %vm513 = vcmp.eq.f32.partialorder %v503, 0.0
        %v514 = vand.u32 %v503, 2147483648
        %v515 = vsel %vm513, %v514, %v512
        %v516 = vadd.f32 %v515, 1e-06
        %v517 = vrcp.pop %v516
        %v518 = vmul.f32 %v516, %v517
        %v519 = vsub.f32 1.0, %v518
        %v520 = vmul.f32 %v517, %v519
        %v521 = vadd.f32 %v517, %v520
        %vm522 = vweird.f32 %v516
        %vm523 = vweird.f32 %v517
        %vm524 = vmor %vm522, %vm523
        %v525 = vsel %vm524, %v517, %v521
        %v526 = vand.u32 2147483647, %v516
        %vm527 = vcmp.eq.f32.partialorder %v526, 8.507059e+37
        %v528 = vand.u32 %v516, 2147483648
        %v529 = vor.u32 1.1754944e-38, %v528
        %v530 = vsel %vm527, %v529, %v525
        %v531 = vmul.f32 %v492, %v530
        %v532 = vmul.f32 %v494, %v530
        %vm533 = vcmask 7168
        %534 = vst.msk [vmem:[%s198] sm:$0xff] %vm533, %v531
        %535 = vst.msk [vmem:[%s198 + $0x8] sm:$0xff] %vm533, %v532
        %p536 = scmp.lt.s32.totalorder %s19, 1
        %s537 = scalar_select %p536, %s19, 1
        %s538 = smul.addr %s537, 2
        %s539 = smul.addr %s538, 8
        %s540 = scalar_lea.vmem %s3, %s539
        %s541 = sand.u32 %s121, 1
        %s542 = scalar_lea.sflag [#allocation3], %s541
        %s543 = sand.u32 %s121, 1
        %s544 = smul.addr %s543, 16
        %s545 = scalar_lea.vmem [#allocation2], %s544
        // Predicated region
        $region33: #{cnn_forward.5} parent=31 // pred_check
          %p546 = pneg %p105
        $region34: #{cnn_forward.5} parent=31 // pred_check_branch
          %548 = sbr.rel (%p546) target = $region36
        $region35: #{cnn_forward.5} parent=31 // pred_region
          _
        $region36: #{cnn_forward.5} parent=31 // pred_fallthru
          _
        // Predicated region
        $region37: #{cnn_forward.5} parent=31 // pred_check
          %p549 = pneg %p131
        $region38: #{cnn_forward.5} parent=31 // pred_check_branch
          %551 = sbr.rel (%p549) target = $region40
        $region39: #{cnn_forward.5} parent=31 // pred_region
          %553 = vsyncadd %s542, 0
          %s554 = smul.addr %s19, 2
          %s555 = smul.addr %s554, 8
          %s556 = scalar_lea.hbm %s4, %s555
          %s557 = sshll.u32 %s545, 4
          %s558 = int_to_ptr.vmem [resolvable:$true] %s557
          %s559 = sshll.u32 %s556, 4
          %s560 = int_to_ptr.hbm [resolvable:$true] %s559
          %565 = dma.vmem_to_hbm [thread:$0]  %s558, 256, %s560, %s542, 128, 128, 8
        $region40: #{cnn_forward.5} parent=31 // pred_fallthru
          _
      $region32: #{cnn_forward.5} parent=5 // pred_fallthru
        _
      %p566 = scmp.le.s32.totalorder 2, %s14
      // Predicated region
      $region41: #{cnn_forward.5} parent=5 // pred_check
        %p567 = pneg %p566
      $region42: #{cnn_forward.5} parent=5 // pred_check_branch
        %569 = sbr.rel (%p567) target = $region44
      $region43: #{cnn_forward.5} parent=5 // pred_region
        %s570 = ssub.s32 %s14, 2
        // Predicated region
        $region45: #{cnn_forward.5} parent=43 // pred_check
          %p571 = pneg %p111
        $region46: #{cnn_forward.5} parent=43 // pred_check_branch
          %573 = sbr.rel (%p571) target = $region48
        $region47: #{cnn_forward.5} parent=43 // pred_region
          %p574 = scmp.lt.s32.totalorder %s20, 1
          %s575 = scalar_select %p574, %s20, 1
          %s576 = smul.addr %s575, 2
          %s577 = smul.addr %s576, 8
          %s578 = scalar_lea.vmem %s3, %s577
        $region48: #{cnn_forward.5} parent=43 // pred_fallthru
          _
        // Predicated region
        $region49: #{cnn_forward.5} parent=43 // pred_check
          %p579 = pneg %p137
        $region50: #{cnn_forward.5} parent=43 // pred_check_branch
          %581 = sbr.rel (%p579) target = $region52
        $region51: #{cnn_forward.5} parent=43 // pred_region
          %s582 = sand.u32 %s122, 1
          %s583 = scalar_lea.sflag [#allocation3], %s582
          %s584 = sand.u32 %s122, 1
          %s585 = smul.addr %s584, 16
          %s586 = scalar_lea.vmem [#allocation2], %s585
          %588 = dma.done %s583, 256
        $region52: #{cnn_forward.5} parent=43 // pred_fallthru
          _
      $region44: #{cnn_forward.5} parent=5 // pred_fallthru
        _
    $region6: #{cnn_forward.5} parent=1 // loop_footer
      %s18 = sadd.s32 1, %s14
    $region7: #{cnn_forward.5} parent=1 // loop_footer_branch
      %13 = sbr.rel target = $region3
    $region8: #{cnn_forward.5} parent=1 // loop_exit
      _
    %589 = vsyncpa [#allocation3], 1
    %s590 = scalar_lea.sflag [#allocation3], 1
    %591 = vsyncpa %s590, 1

// kernel: cnn_forward.7
$region0: #{cnn_forward.7}
  #allocation0 [shape = 'u32[]', space=smem, size = 0x4, offset = 0x4, fixed_abs, tag = 'smem constant byte address 0x4 - core index']
  #allocation1 [shape = 'u32[72,128]{1,0:T(1,128)}', space=vmem, size = 0x9000, scoped, tag = 'internal scratch']
  %s0 = inlined_call_operand.vmem [shape: f32[8,512], index: 0, kind: input, shape index: {}]
  %s1 = inlined_call_operand.vmem [shape: f32[512,128], index: 1, kind: input, shape index: {}]
  %s2 = inlined_call_operand.vmem [shape: f32[1,128], index: 2, kind: input, shape index: {}]
  %s3 = inlined_call_operand.vmem [shape: f32[8,128], index: 3, kind: output, shape index: {}]
  %s4 = sld [smem:[#allocation0]]
  $region22: #{cnn_forward.7} parent=0
    _
  %s6 = ssub.s32 1, %s4
  %s7 = scalar_select 0, %s6, %s4
  // Predicated region
  $region2: #{cnn_forward.7} parent=0 // pred_check
    _
  $region3: #{cnn_forward.7} parent=0 // pred_check_branch
    %9 = sbr.rel (0) target = $region5
  $region4: #{cnn_forward.7} parent=0 // pred_region
    _
  $region5: #{cnn_forward.7} parent=0 // pred_fallthru
    _
  // Predicated region
  $region6: #{cnn_forward.7} parent=0 // pred_check
    _
  $region7: #{cnn_forward.7} parent=0 // pred_check_branch
    %11 = sbr.rel (0) target = $region9
  $region8: #{cnn_forward.7} parent=0 // pred_region
    _
  $region9: #{cnn_forward.7} parent=0 // pred_fallthru
    _
  // Predicated region
  $region10: #{cnn_forward.7} parent=0 // pred_check
    _
  $region11: #{cnn_forward.7} parent=0 // pred_check_branch
    %13 = sbr.rel (0) target = $region13
  $region12: #{cnn_forward.7} parent=0 // pred_region
    _
  $region13: #{cnn_forward.7} parent=0 // pred_fallthru
    _
  %v14 = vld [vmem:[%s0] sm:$0xff]
  %v15 = vld [vmem:[%s0 + $0x8] sm:$0xff]
  %v16 = vld [vmem:[%s0 + $0x10] sm:$0xff]
  %v17 = vld [vmem:[%s0 + $0x18] sm:$0xff]
  %v18 = vld [vmem:[%s1] sm:$0xff]
  %v19 = vld [vmem:[%s1 + $0x8] sm:$0xff]
  %v20 = vld [vmem:[%s1 + $0x10] sm:$0xff]
  %v21 = vld [vmem:[%s1 + $0x18] sm:$0xff]
  %v22 = vld [vmem:[%s1 + $0x20] sm:$0xff]
  %v23 = vld [vmem:[%s1 + $0x28] sm:$0xff]
  %v24 = vld [vmem:[%s1 + $0x30] sm:$0xff]
  %v25 = vld [vmem:[%s1 + $0x38] sm:$0xff]
  %v26 = vld [vmem:[%s1 + $0x40] sm:$0xff]
  %v27 = vld [vmem:[%s1 + $0x48] sm:$0xff]
  %v28 = vld [vmem:[%s1 + $0x50] sm:$0xff]
  %v29 = vld [vmem:[%s1 + $0x58] sm:$0xff]
  %v30 = vld [vmem:[%s1 + $0x60] sm:$0xff]
  %v31 = vld [vmem:[%s1 + $0x68] sm:$0xff]
  %v32 = vld [vmem:[%s1 + $0x70] sm:$0xff]
  %v33 = vld [vmem:[%s1 + $0x78] sm:$0xff]
  %v34 = vld [vmem:[%s1 + $0x80] sm:$0xff]
  %v35 = vld [vmem:[%s1 + $0x88] sm:$0xff]
  %v36 = vld [vmem:[%s1 + $0x90] sm:$0xff]
  %v37 = vld [vmem:[%s1 + $0x98] sm:$0xff]
  %v38 = vld [vmem:[%s1 + $0xa0] sm:$0xff]
  %v39 = vld [vmem:[%s1 + $0xa8] sm:$0xff]
  %v40 = vld [vmem:[%s1 + $0xb0] sm:$0xff]
  %v41 = vld [vmem:[%s1 + $0xb8] sm:$0xff]
  %v42 = vld [vmem:[%s1 + $0xc0] sm:$0xff]
  %v43 = vld [vmem:[%s1 + $0xc8] sm:$0xff]
  %v44 = vld [vmem:[%s1 + $0xd0] sm:$0xff]
  %v45 = vld [vmem:[%s1 + $0xd8] sm:$0xff]
  %v46 = vld [vmem:[%s1 + $0xe0] sm:$0xff]
  %v47 = vld [vmem:[%s1 + $0xe8] sm:$0xff]
  %v48 = vld [vmem:[%s1 + $0xf0] sm:$0xff]
  %v49 = vld [vmem:[%s1 + $0xf8] sm:$0xff]
  %v50 = vld [vmem:[%s1 + $0x100] sm:$0xff]
  %v51 = vld [vmem:[%s1 + $0x108] sm:$0xff]
  %v52 = vld [vmem:[%s1 + $0x110] sm:$0xff]
  %v53 = vld [vmem:[%s1 + $0x118] sm:$0xff]
  %v54 = vld [vmem:[%s1 + $0x120] sm:$0xff]
  %v55 = vld [vmem:[%s1 + $0x128] sm:$0xff]
  %v56 = vld [vmem:[%s1 + $0x130] sm:$0xff]
  %v57 = vld [vmem:[%s1 + $0x138] sm:$0xff]
  %v58 = vld [vmem:[%s1 + $0x140] sm:$0xff]
  %v59 = vld [vmem:[%s1 + $0x148] sm:$0xff]
  %v60 = vld [vmem:[%s1 + $0x150] sm:$0xff]
  %v61 = vld [vmem:[%s1 + $0x158] sm:$0xff]
  %v62 = vld [vmem:[%s1 + $0x160] sm:$0xff]
  %v63 = vld [vmem:[%s1 + $0x168] sm:$0xff]
  %v64 = vld [vmem:[%s1 + $0x170] sm:$0xff]
  %v65 = vld [vmem:[%s1 + $0x178] sm:$0xff]
  %v66 = vld [vmem:[%s1 + $0x180] sm:$0xff]
  %v67 = vld [vmem:[%s1 + $0x188] sm:$0xff]
  %v68 = vld [vmem:[%s1 + $0x190] sm:$0xff]
  %v69 = vld [vmem:[%s1 + $0x198] sm:$0xff]
  %v70 = vld [vmem:[%s1 + $0x1a0] sm:$0xff]
  %v71 = vld [vmem:[%s1 + $0x1a8] sm:$0xff]
  %v72 = vld [vmem:[%s1 + $0x1b0] sm:$0xff]
  %v73 = vld [vmem:[%s1 + $0x1b8] sm:$0xff]
  %v74 = vld [vmem:[%s1 + $0x1c0] sm:$0xff]
  %v75 = vld [vmem:[%s1 + $0x1c8] sm:$0xff]
  %v76 = vld [vmem:[%s1 + $0x1d0] sm:$0xff]
  %v77 = vld [vmem:[%s1 + $0x1d8] sm:$0xff]
  %v78 = vld [vmem:[%s1 + $0x1e0] sm:$0xff]
  %v79 = vld [vmem:[%s1 + $0x1e8] sm:$0xff]
  %v80 = vld [vmem:[%s1 + $0x1f0] sm:$0xff]
  %v81 = vld [vmem:[%s1 + $0x1f8] sm:$0xff]
  %v82 = vld [vmem:[%s2] sm:$0x1]
  %v84 = vperm.slane %v82, 0
  %86 = vmatpush.msra.mxu0 %v33
  %87 = vmatpush.msra.mxu0 %v32
  %88 = vmatpush.msra.mxu0 %v31
  %89 = vmatpush.msra.mxu0 %v30
  %90 = vmatpush.msra.mxu0 %v29
  %91 = vmatpush.msra.mxu0 %v28
  %92 = vmatpush.msra.mxu0 %v27
  %93 = vmatpush.msra.mxu0 %v26
  %94 = vmatpush.msra.mxu0 %v25
  %95 = vmatpush.msra.mxu0 %v24
  %96 = vmatpush.msra.mxu0 %v23
  %97 = vmatpush.msra.mxu0 %v22
  %98 = vmatpush.msra.mxu0 %v21
  %99 = vmatpush.msra.mxu0 %v20
  %100 = vmatpush.msra.mxu0 %v19
  %101 = vmatpush.msra.mxu0 %v18
  %102 = vmatmul.f32.gmra.mxu0 %v14
  %v103 = vpop.f32.mrf.mxu0
  %v104 = vadd.f32 %v84, %v103
  %105 = vdwg.mxu0
  %106 = vmatpush.msra.mxu0 %v49
  %107 = vmatpush.msra.mxu0 %v48
  %108 = vmatpush.msra.mxu0 %v47
  %109 = vmatpush.msra.mxu0 %v46
  %110 = vmatpush.msra.mxu0 %v45
  %111 = vmatpush.msra.mxu0 %v44
  %112 = vmatpush.msra.mxu0 %v43
  %113 = vmatpush.msra.mxu0 %v42
  %114 = vmatpush.msra.mxu0 %v41
  %115 = vmatpush.msra.mxu0 %v40
  %116 = vmatpush.msra.mxu0 %v39
  %117 = vmatpush.msra.mxu0 %v38
  %118 = vmatpush.msra.mxu0 %v37
  %119 = vmatpush.msra.mxu0 %v36
  %120 = vmatpush.msra.mxu0 %v35
  %121 = vmatpush.msra.mxu0 %v34
  %122 = vmatmul.f32.gmra.mxu0 %v15
  %v123 = vpop.f32.mrf.mxu0
  %v124 = vadd.f32 %v104, %v123
  %125 = vdwg.mxu0
  %126 = vmatpush.msra.mxu0 %v65
  %127 = vmatpush.msra.mxu0 %v64
  %128 = vmatpush.msra.mxu0 %v63
  %129 = vmatpush.msra.mxu0 %v62
  %130 = vmatpush.msra.mxu0 %v61
  %131 = vmatpush.msra.mxu0 %v60
  %132 = vmatpush.msra.mxu0 %v59
  %133 = vmatpush.msra.mxu0 %v58
  %134 = vmatpush.msra.mxu0 %v57
  %135 = vmatpush.msra.mxu0 %v56
  %136 = vmatpush.msra.mxu0 %v55
  %137 = vmatpush.msra.mxu0 %v54
  %138 = vmatpush.msra.mxu0 %v53
  %139 = vmatpush.msra.mxu0 %v52
  %140 = vmatpush.msra.mxu0 %v51
  %141 = vmatpush.msra.mxu0 %v50
  %142 = vmatmul.f32.gmra.mxu0 %v16
  %v143 = vpop.f32.mrf.mxu0
  %v144 = vadd.f32 %v124, %v143
  %145 = vdwg.mxu0
  %146 = vmatpush.msra.mxu0 %v81
  %147 = vmatpush.msra.mxu0 %v80
  %148 = vmatpush.msra.mxu0 %v79
  %149 = vmatpush.msra.mxu0 %v78
  %150 = vmatpush.msra.mxu0 %v77
  %151 = vmatpush.msra.mxu0 %v76
  %152 = vmatpush.msra.mxu0 %v75
  %153 = vmatpush.msra.mxu0 %v74
  %154 = vmatpush.msra.mxu0 %v73
  %155 = vmatpush.msra.mxu0 %v72
  %156 = vmatpush.msra.mxu0 %v71
  %157 = vmatpush.msra.mxu0 %v70
  %158 = vmatpush.msra.mxu0 %v69
  %159 = vmatpush.msra.mxu0 %v68
  %160 = vmatpush.msra.mxu0 %v67
  %161 = vmatpush.msra.mxu0 %v66
  %162 = vmatmul.f32.gmra.mxu0 %v17
  %v163 = vpop.f32.mrf.mxu0
  %v164 = vadd.f32 %v144, %v163
  %165 = vdwg.mxu0
  %166 = vst [vmem:[%s3] sm:$0xff] %v164
  // Predicated region
  $region14: #{cnn_forward.7} parent=0 // pred_check
    _
  $region15: #{cnn_forward.7} parent=0 // pred_check_branch
    %168 = sbr.rel (0) target = $region17
  $region16: #{cnn_forward.7} parent=0 // pred_region
    _
  $region17: #{cnn_forward.7} parent=0 // pred_fallthru
    _
  // Predicated region
  $region18: #{cnn_forward.7} parent=0 // pred_check
    _
  $region19: #{cnn_forward.7} parent=0 // pred_check_branch
    %170 = sbr.rel (0) target = $region21
  $region20: #{cnn_forward.7} parent=0 // pred_region
    _
  $region21: #{cnn_forward.7} parent=0 // pred_fallthru
    _

// kernel: cnn_forward.6
$region0: #{cnn_forward.6}
  #allocation0 [shape = 'u32[]', space=smem, size = 0x4, offset = 0x4, fixed_abs, tag = 'smem constant byte address 0x4 - core index']
  #allocation1 [shape = 'u32[72,128]{1,0:T(1,128)}', space=vmem, size = 0x9000, scoped, tag = 'internal scratch']
  %s0 = inlined_call_operand.vmem [shape: f32[8,2048], index: 0, kind: input, shape index: {}]
  %s1 = inlined_call_operand.vmem [shape: f32[2048,512], index: 1, kind: input, shape index: {}]
  %s2 = inlined_call_operand.vmem [shape: f32[1,512], index: 2, kind: input, shape index: {}]
  %s3 = inlined_call_operand.vmem [shape: f32[8,512], index: 3, kind: output, shape index: {}]
  %s4 = sld [smem:[#allocation0]]
  $region22: #{cnn_forward.6} parent=0
    _
  %s6 = ssub.s32 1, %s4
  %s7 = scalar_select 0, %s6, %s4
  // Predicated region
  $region2: #{cnn_forward.6} parent=0 // pred_check
    _
  $region3: #{cnn_forward.6} parent=0 // pred_check_branch
    %9 = sbr.rel (0) target = $region5
  $region4: #{cnn_forward.6} parent=0 // pred_region
    _
  $region5: #{cnn_forward.6} parent=0 // pred_fallthru
    _
  // Predicated region
  $region6: #{cnn_forward.6} parent=0 // pred_check
    _
  $region7: #{cnn_forward.6} parent=0 // pred_check_branch
    %11 = sbr.rel (0) target = $region9
  $region8: #{cnn_forward.6} parent=0 // pred_region
    _
  $region9: #{cnn_forward.6} parent=0 // pred_fallthru
    _
  // Predicated region
  $region10: #{cnn_forward.6} parent=0 // pred_check
    _
  $region11: #{cnn_forward.6} parent=0 // pred_check_branch
    %13 = sbr.rel (0) target = $region13
  $region12: #{cnn_forward.6} parent=0 // pred_region
    _
  $region13: #{cnn_forward.6} parent=0 // pred_fallthru
    _
  %v14 = vld [vmem:[%s0] sm:$0xff]
  %v15 = vld [vmem:[%s0 + $0x8] sm:$0xff]
  %v16 = vld [vmem:[%s0 + $0x10] sm:$0xff]
  %v17 = vld [vmem:[%s0 + $0x18] sm:$0xff]
  %v18 = vld [vmem:[%s0 + $0x20] sm:$0xff]
  %v19 = vld [vmem:[%s0 + $0x28] sm:$0xff]
  %v20 = vld [vmem:[%s0 + $0x30] sm:$0xff]
  %v21 = vld [vmem:[%s0 + $0x38] sm:$0xff]
  %v22 = vld [vmem:[%s0 + $0x40] sm:$0xff]
  %v23 = vld [vmem:[%s0 + $0x48] sm:$0xff]
  %v24 = vld [vmem:[%s0 + $0x50] sm:$0xff]
  %v25 = vld [vmem:[%s0 + $0x58] sm:$0xff]
  %v26 = vld [vmem:[%s0 + $0x60] sm:$0xff]
  %v27 = vld [vmem:[%s0 + $0x68] sm:$0xff]
  %v28 = vld [vmem:[%s0 + $0x70] sm:$0xff]
  %v29 = vld [vmem:[%s0 + $0x78] sm:$0xff]
  %v30 = vld [vmem:[%s1] sm:$0xff]
  %v31 = vld [vmem:[%s1 + $0x8] sm:$0xff]
  %v32 = vld [vmem:[%s1 + $0x10] sm:$0xff]
  %v33 = vld [vmem:[%s1 + $0x18] sm:$0xff]
  %v34 = vld [vmem:[%s1 + $0x20] sm:$0xff]
  %v35 = vld [vmem:[%s1 + $0x28] sm:$0xff]
  %v36 = vld [vmem:[%s1 + $0x30] sm:$0xff]
  %v37 = vld [vmem:[%s1 + $0x38] sm:$0xff]
  %v38 = vld [vmem:[%s1 + $0x40] sm:$0xff]
  %v39 = vld [vmem:[%s1 + $0x48] sm:$0xff]
  %v40 = vld [vmem:[%s1 + $0x50] sm:$0xff]
  %v41 = vld [vmem:[%s1 + $0x58] sm:$0xff]
  %v42 = vld [vmem:[%s1 + $0x60] sm:$0xff]
  %v43 = vld [vmem:[%s1 + $0x68] sm:$0xff]
  %v44 = vld [vmem:[%s1 + $0x70] sm:$0xff]
  %v45 = vld [vmem:[%s1 + $0x78] sm:$0xff]
  %v46 = vld [vmem:[%s1 + $0x80] sm:$0xff]
  %v47 = vld [vmem:[%s1 + $0x88] sm:$0xff]
  %v48 = vld [vmem:[%s1 + $0x90] sm:$0xff]
  %v49 = vld [vmem:[%s1 + $0x98] sm:$0xff]
  %v50 = vld [vmem:[%s1 + $0xa0] sm:$0xff]
  %v51 = vld [vmem:[%s1 + $0xa8] sm:$0xff]
  %v52 = vld [vmem:[%s1 + $0xb0] sm:$0xff]
  %v53 = vld [vmem:[%s1 + $0xb8] sm:$0xff]
  %v54 = vld [vmem:[%s1 + $0xc0] sm:$0xff]
  %v55 = vld [vmem:[%s1 + $0xc8] sm:$0xff]
  %v56 = vld [vmem:[%s1 + $0xd0] sm:$0xff]
  %v57 = vld [vmem:[%s1 + $0xd8] sm:$0xff]
  %v58 = vld [vmem:[%s1 + $0xe0] sm:$0xff]
  %v59 = vld [vmem:[%s1 + $0xe8] sm:$0xff]
  %v60 = vld [vmem:[%s1 + $0xf0] sm:$0xff]
  %v61 = vld [vmem:[%s1 + $0xf8] sm:$0xff]
  %v62 = vld [vmem:[%s1 + $0x100] sm:$0xff]
  %v63 = vld [vmem:[%s1 + $0x108] sm:$0xff]
  %v64 = vld [vmem:[%s1 + $0x110] sm:$0xff]
  %v65 = vld [vmem:[%s1 + $0x118] sm:$0xff]
  %v66 = vld [vmem:[%s1 + $0x120] sm:$0xff]
  %v67 = vld [vmem:[%s1 + $0x128] sm:$0xff]
  %v68 = vld [vmem:[%s1 + $0x130] sm:$0xff]
  %v69 = vld [vmem:[%s1 + $0x138] sm:$0xff]
  %v70 = vld [vmem:[%s1 + $0x140] sm:$0xff]
  %v71 = vld [vmem:[%s1 + $0x148] sm:$0xff]
  %v72 = vld [vmem:[%s1 + $0x150] sm:$0xff]
  %v73 = vld [vmem:[%s1 + $0x158] sm:$0xff]
  %v74 = vld [vmem:[%s1 + $0x160] sm:$0xff]
  %v75 = vld [vmem:[%s1 + $0x168] sm:$0xff]
  %v76 = vld [vmem:[%s1 + $0x170] sm:$0xff]
  %v77 = vld [vmem:[%s1 + $0x178] sm:$0xff]
  %v78 = vld [vmem:[%s1 + $0x180] sm:$0xff]
  %v79 = vld [vmem:[%s1 + $0x188] sm:$0xff]
  %v80 = vld [vmem:[%s1 + $0x190] sm:$0xff]
  %v81 = vld [vmem:[%s1 + $0x198] sm:$0xff]
  %v82 = vld [vmem:[%s1 + $0x1a0] sm:$0xff]
  %v83 = vld [vmem:[%s1 + $0x1a8] sm:$0xff]
  %v84 = vld [vmem:[%s1 + $0x1b0] sm:$0xff]
  %v85 = vld [vmem:[%s1 + $0x1b8] sm:$0xff]
  %v86 = vld [vmem:[%s1 + $0x1c0] sm:$0xff]
  %v87 = vld [vmem:[%s1 + $0x1c8] sm:$0xff]
  %v88 = vld [vmem:[%s1 + $0x1d0] sm:$0xff]
  %v89 = vld [vmem:[%s1 + $0x1d8] sm:$0xff]
  %v90 = vld [vmem:[%s1 + $0x1e0] sm:$0xff]
  %v91 = vld [vmem:[%s1 + $0x1e8] sm:$0xff]
  %v92 = vld [vmem:[%s1 + $0x1f0] sm:$0xff]
  %v93 = vld [vmem:[%s1 + $0x1f8] sm:$0xff]
  %v94 = vld [vmem:[%s1 + $0x200] sm:$0xff]
  %v95 = vld [vmem:[%s1 + $0x208] sm:$0xff]
  %v96 = vld [vmem:[%s1 + $0x210] sm:$0xff]
  %v97 = vld [vmem:[%s1 + $0x218] sm:$0xff]
  %v98 = vld [vmem:[%s1 + $0x220] sm:$0xff]
  %v99 = vld [vmem:[%s1 + $0x228] sm:$0xff]
  %v100 = vld [vmem:[%s1 + $0x230] sm:$0xff]
  %v101 = vld [vmem:[%s1 + $0x238] sm:$0xff]
  %v102 = vld [vmem:[%s1 + $0x240] sm:$0xff]
  %v103 = vld [vmem:[%s1 + $0x248] sm:$0xff]
  %v104 = vld [vmem:[%s1 + $0x250] sm:$0xff]
  %v105 = vld [vmem:[%s1 + $0x258] sm:$0xff]
  %v106 = vld [vmem:[%s1 + $0x260] sm:$0xff]
  %v107 = vld [vmem:[%s1 + $0x268] sm:$0xff]
  %v108 = vld [vmem:[%s1 + $0x270] sm:$0xff]
  %v109 = vld [vmem:[%s1 + $0x278] sm:$0xff]
  %v110 = vld [vmem:[%s1 + $0x280] sm:$0xff]
  %v111 = vld [vmem:[%s1 + $0x288] sm:$0xff]
  %v112 = vld [vmem:[%s1 + $0x290] sm:$0xff]
  %v113 = vld [vmem:[%s1 + $0x298] sm:$0xff]
  %v114 = vld [vmem:[%s1 + $0x2a0] sm:$0xff]
  %v115 = vld [vmem:[%s1 + $0x2a8] sm:$0xff]
  %v116 = vld [vmem:[%s1 + $0x2b0] sm:$0xff]
  %v117 = vld [vmem:[%s1 + $0x2b8] sm:$0xff]
  %v118 = vld [vmem:[%s1 + $0x2c0] sm:$0xff]
  %v119 = vld [vmem:[%s1 + $0x2c8] sm:$0xff]
  %v120 = vld [vmem:[%s1 + $0x2d0] sm:$0xff]
  %v121 = vld [vmem:[%s1 + $0x2d8] sm:$0xff]
  %v122 = vld [vmem:[%s1 + $0x2e0] sm:$0xff]
  %v123 = vld [vmem:[%s1 + $0x2e8] sm:$0xff]
  %v124 = vld [vmem:[%s1 + $0x2f0] sm:$0xff]
  %v125 = vld [vmem:[%s1 + $0x2f8] sm:$0xff]
  %v126 = vld [vmem:[%s1 + $0x300] sm:$0xff]
  %v127 = vld [vmem:[%s1 + $0x308] sm:$0xff]
  %v128 = vld [vmem:[%s1 + $0x310] sm:$0xff]
  %v129 = vld [vmem:[%s1 + $0x318] sm:$0xff]
  %v130 = vld [vmem:[%s1 + $0x320] sm:$0xff]
  %v131 = vld [vmem:[%s1 + $0x328] sm:$0xff]
  %v132 = vld [vmem:[%s1 + $0x330] sm:$0xff]
  %v133 = vld [vmem:[%s1 + $0x338] sm:$0xff]
  %v134 = vld [vmem:[%s1 + $0x340] sm:$0xff]
  %v135 = vld [vmem:[%s1 + $0x348] sm:$0xff]
  %v136 = vld [vmem:[%s1 + $0x350] sm:$0xff]
  %v137 = vld [vmem:[%s1 + $0x358] sm:$0xff]
  %v138 = vld [vmem:[%s1 + $0x360] sm:$0xff]
  %v139 = vld [vmem:[%s1 + $0x368] sm:$0xff]
  %v140 = vld [vmem:[%s1 + $0x370] sm:$0xff]
  %v141 = vld [vmem:[%s1 + $0x378] sm:$0xff]
  %v142 = vld [vmem:[%s1 + $0x380] sm:$0xff]
  %v143 = vld [vmem:[%s1 + $0x388] sm:$0xff]
  %v144 = vld [vmem:[%s1 + $0x390] sm:$0xff]
  %v145 = vld [vmem:[%s1 + $0x398] sm:$0xff]
  %v146 = vld [vmem:[%s1 + $0x3a0] sm:$0xff]
  %v147 = vld [vmem:[%s1 + $0x3a8] sm:$0xff]
  %v148 = vld [vmem:[%s1 + $0x3b0] sm:$0xff]
  %v149 = vld [vmem:[%s1 + $0x3b8] sm:$0xff]
  %v150 = vld [vmem:[%s1 + $0x3c0] sm:$0xff]
  %v151 = vld [vmem:[%s1 + $0x3c8] sm:$0xff]
  %v152 = vld [vmem:[%s1 + $0x3d0] sm:$0xff]
  %v153 = vld [vmem:[%s1 + $0x3d8] sm:$0xff]
  %v154 = vld [vmem:[%s1 + $0x3e0] sm:$0xff]
  %v155 = vld [vmem:[%s1 + $0x3e8] sm:$0xff]
  %v156 = vld [vmem:[%s1 + $0x3f0] sm:$0xff]
  %v157 = vld [vmem:[%s1 + $0x3f8] sm:$0xff]
  %v158 = vld [vmem:[%s1 + $0x400] sm:$0xff]
  %v159 = vld [vmem:[%s1 + $0x408] sm:$0xff]
  %v160 = vld [vmem:[%s1 + $0x410] sm:$0xff]
  %v161 = vld [vmem:[%s1 + $0x418] sm:$0xff]
  %v162 = vld [vmem:[%s1 + $0x420] sm:$0xff]
  %v163 = vld [vmem:[%s1 + $0x428] sm:$0xff]
  %v164 = vld [vmem:[%s1 + $0x430] sm:$0xff]
  %v165 = vld [vmem:[%s1 + $0x438] sm:$0xff]
  %v166 = vld [vmem:[%s1 + $0x440] sm:$0xff]
  %v167 = vld [vmem:[%s1 + $0x448] sm:$0xff]
  %v168 = vld [vmem:[%s1 + $0x450] sm:$0xff]
  %v169 = vld [vmem:[%s1 + $0x458] sm:$0xff]
  %v170 = vld [vmem:[%s1 + $0x460] sm:$0xff]
  %v171 = vld [vmem:[%s1 + $0x468] sm:$0xff]
  %v172 = vld [vmem:[%s1 + $0x470] sm:$0xff]
  %v173 = vld [vmem:[%s1 + $0x478] sm:$0xff]
  %v174 = vld [vmem:[%s1 + $0x480] sm:$0xff]
  %v175 = vld [vmem:[%s1 + $0x488] sm:$0xff]
  %v176 = vld [vmem:[%s1 + $0x490] sm:$0xff]
  %v177 = vld [vmem:[%s1 + $0x498] sm:$0xff]
  %v178 = vld [vmem:[%s1 + $0x4a0] sm:$0xff]
  %v179 = vld [vmem:[%s1 + $0x4a8] sm:$0xff]
  %v180 = vld [vmem:[%s1 + $0x4b0] sm:$0xff]
  %v181 = vld [vmem:[%s1 + $0x4b8] sm:$0xff]
  %v182 = vld [vmem:[%s1 + $0x4c0] sm:$0xff]
  %v183 = vld [vmem:[%s1 + $0x4c8] sm:$0xff]
  %v184 = vld [vmem:[%s1 + $0x4d0] sm:$0xff]
  %v185 = vld [vmem:[%s1 + $0x4d8] sm:$0xff]
  %v186 = vld [vmem:[%s1 + $0x4e0] sm:$0xff]
  %v187 = vld [vmem:[%s1 + $0x4e8] sm:$0xff]
  %v188 = vld [vmem:[%s1 + $0x4f0] sm:$0xff]
  %v189 = vld [vmem:[%s1 + $0x4f8] sm:$0xff]
  %v190 = vld [vmem:[%s1 + $0x500] sm:$0xff]
  %v191 = vld [vmem:[%s1 + $0x508] sm:$0xff]
  %v192 = vld [vmem:[%s1 + $0x510] sm:$0xff]
  %v193 = vld [vmem:[%s1 + $0x518] sm:$0xff]
  %v194 = vld [vmem:[%s1 + $0x520] sm:$0xff]
  %v195 = vld [vmem:[%s1 + $0x528] sm:$0xff]
  %v196 = vld [vmem:[%s1 + $0x530] sm:$0xff]
  %v197 = vld [vmem:[%s1 + $0x538] sm:$0xff]
  %v198 = vld [vmem:[%s1 + $0x540] sm:$0xff]
  %v199 = vld [vmem:[%s1 + $0x548] sm:$0xff]
  %v200 = vld [vmem:[%s1 + $0x550] sm:$0xff]
  %v201 = vld [vmem:[%s1 + $0x558] sm:$0xff]
  %v202 = vld [vmem:[%s1 + $0x560] sm:$0xff]
  %v203 = vld [vmem:[%s1 + $0x568] sm:$0xff]
  %v204 = vld [vmem:[%s1 + $0x570] sm:$0xff]
  %v205 = vld [vmem:[%s1 + $0x578] sm:$0xff]
  %v206 = vld [vmem:[%s1 + $0x580] sm:$0xff]
  %v207 = vld [vmem:[%s1 + $0x588] sm:$0xff]
  %v208 = vld [vmem:[%s1 + $0x590] sm:$0xff]
  %v209 = vld [vmem:[%s1 + $0x598] sm:$0xff]
  %v210 = vld [vmem:[%s1 + $0x5a0] sm:$0xff]
  %v211 = vld [vmem:[%s1 + $0x5a8] sm:$0xff]
  %v212 = vld [vmem:[%s1 + $0x5b0] sm:$0xff]
  %v213 = vld [vmem:[%s1 + $0x5b8] sm:$0xff]
  %v214 = vld [vmem:[%s1 + $0x5c0] sm:$0xff]
  %v215 = vld [vmem:[%s1 + $0x5c8] sm:$0xff]
  %v216 = vld [vmem:[%s1 + $0x5d0] sm:$0xff]
  %v217 = vld [vmem:[%s1 + $0x5d8] sm:$0xff]
  %v218 = vld [vmem:[%s1 + $0x5e0] sm:$0xff]
  %v219 = vld [vmem:[%s1 + $0x5e8] sm:$0xff]
  %v220 = vld [vmem:[%s1 + $0x5f0] sm:$0xff]
  %v221 = vld [vmem:[%s1 + $0x5f8] sm:$0xff]
  %v222 = vld [vmem:[%s1 + $0x600] sm:$0xff]
  %v223 = vld [vmem:[%s1 + $0x608] sm:$0xff]
  %v224 = vld [vmem:[%s1 + $0x610] sm:$0xff]
  %v225 = vld [vmem:[%s1 + $0x618] sm:$0xff]
  %v226 = vld [vmem:[%s1 + $0x620] sm:$0xff]
  %v227 = vld [vmem:[%s1 + $0x628] sm:$0xff]
  %v228 = vld [vmem:[%s1 + $0x630] sm:$0xff]
  %v229 = vld [vmem:[%s1 + $0x638] sm:$0xff]
  %v230 = vld [vmem:[%s1 + $0x640] sm:$0xff]
  %v231 = vld [vmem:[%s1 + $0x648] sm:$0xff]
  %v232 = vld [vmem:[%s1 + $0x650] sm:$0xff]
  %v233 = vld [vmem:[%s1 + $0x658] sm:$0xff]
  %v234 = vld [vmem:[%s1 + $0x660] sm:$0xff]
  %v235 = vld [vmem:[%s1 + $0x668] sm:$0xff]
  %v236 = vld [vmem:[%s1 + $0x670] sm:$0xff]
  %v237 = vld [vmem:[%s1 + $0x678] sm:$0xff]
  %v238 = vld [vmem:[%s1 + $0x680] sm:$0xff]
  %v239 = vld [vmem:[%s1 + $0x688] sm:$0xff]
  %v240 = vld [vmem:[%s1 + $0x690] sm:$0xff]
  %v241 = vld [vmem:[%s1 + $0x698] sm:$0xff]
  %v242 = vld [vmem:[%s1 + $0x6a0] sm:$0xff]
  %v243 = vld [vmem:[%s1 + $0x6a8] sm:$0xff]
  %v244 = vld [vmem:[%s1 + $0x6b0] sm:$0xff]
  %v245 = vld [vmem:[%s1 + $0x6b8] sm:$0xff]
  %v246 = vld [vmem:[%s1 + $0x6c0] sm:$0xff]
  %v247 = vld [vmem:[%s1 + $0x6c8] sm:$0xff]
  %v248 = vld [vmem:[%s1 + $0x6d0] sm:$0xff]
  %v249 = vld [vmem:[%s1 + $0x6d8] sm:$0xff]
  %v250 = vld [vmem:[%s1 + $0x6e0] sm:$0xff]
  %v251 = vld [vmem:[%s1 + $0x6e8] sm:$0xff]
  %v252 = vld [vmem:[%s1 + $0x6f0] sm:$0xff]
  %v253 = vld [vmem:[%s1 + $0x6f8] sm:$0xff]
  %v254 = vld [vmem:[%s1 + $0x700] sm:$0xff]
  %v255 = vld [vmem:[%s1 + $0x708] sm:$0xff]
  %v256 = vld [vmem:[%s1 + $0x710] sm:$0xff]
  %v257 = vld [vmem:[%s1 + $0x718] sm:$0xff]
  %v258 = vld [vmem:[%s1 + $0x720] sm:$0xff]
  %v259 = vld [vmem:[%s1 + $0x728] sm:$0xff]
  %v260 = vld [vmem:[%s1 + $0x730] sm:$0xff]
  %v261 = vld [vmem:[%s1 + $0x738] sm:$0xff]
  %v262 = vld [vmem:[%s1 + $0x740] sm:$0xff]
  %v263 = vld [vmem:[%s1 + $0x748] sm:$0xff]
  %v264 = vld [vmem:[%s1 + $0x750] sm:$0xff]
  %v265 = vld [vmem:[%s1 + $0x758] sm:$0xff]
  %v266 = vld [vmem:[%s1 + $0x760] sm:$0xff]
  %v267 = vld [vmem:[%s1 + $0x768] sm:$0xff]
  %v268 = vld [vmem:[%s1 + $0x770] sm:$0xff]
  %v269 = vld [vmem:[%s1 + $0x778] sm:$0xff]
  %v270 = vld [vmem:[%s1 + $0x780] sm:$0xff]
  %v271 = vld [vmem:[%s1 + $0x788] sm:$0xff]
  %v272 = vld [vmem:[%s1 + $0x790] sm:$0xff]
  %v273 = vld [vmem:[%s1 + $0x798] sm:$0xff]
  %v274 = vld [vmem:[%s1 + $0x7a0] sm:$0xff]
  %v275 = vld [vmem:[%s1 + $0x7a8] sm:$0xff]
  %v276 = vld [vmem:[%s1 + $0x7b0] sm:$0xff]
  %v277 = vld [vmem:[%s1 + $0x7b8] sm:$0xff]
  %v278 = vld [vmem:[%s1 + $0x7c0] sm:$0xff]
  %v279 = vld [vmem:[%s1 + $0x7c8] sm:$0xff]
  %v280 = vld [vmem:[%s1 + $0x7d0] sm:$0xff]
  %v281 = vld [vmem:[%s1 + $0x7d8] sm:$0xff]
  %v282 = vld [vmem:[%s1 + $0x7e0] sm:$0xff]
  %v283 = vld [vmem:[%s1 + $0x7e8] sm:$0xff]
  %v284 = vld [vmem:[%s1 + $0x7f0] sm:$0xff]
  %v285 = vld [vmem:[%s1 + $0x7f8] sm:$0xff]
  %v286 = vld [vmem:[%s1 + $0x800] sm:$0xff]
  %v287 = vld [vmem:[%s1 + $0x808] sm:$0xff]
  %v288 = vld [vmem:[%s1 + $0x810] sm:$0xff]
  %v289 = vld [vmem:[%s1 + $0x818] sm:$0xff]
  %v290 = vld [vmem:[%s1 + $0x820] sm:$0xff]
  %v291 = vld [vmem:[%s1 + $0x828] sm:$0xff]
  %v292 = vld [vmem:[%s1 + $0x830] sm:$0xff]
  %v293 = vld [vmem:[%s1 + $0x838] sm:$0xff]
  %v294 = vld [vmem:[%s1 + $0x840] sm:$0xff]
  %v295 = vld [vmem:[%s1 + $0x848] sm:$0xff]
  %v296 = vld [vmem:[%s1 + $0x850] sm:$0xff]
  %v297 = vld [vmem:[%s1 + $0x858] sm:$0xff]
  %v298 = vld [vmem:[%s1 + $0x860] sm:$0xff]
  %v299 = vld [vmem:[%s1 + $0x868] sm:$0xff]
  %v300 = vld [vmem:[%s1 + $0x870] sm:$0xff]
  %v301 = vld [vmem:[%s1 + $0x878] sm:$0xff]
  %v302 = vld [vmem:[%s1 + $0x880] sm:$0xff]
  %v303 = vld [vmem:[%s1 + $0x888] sm:$0xff]
  %v304 = vld [vmem:[%s1 + $0x890] sm:$0xff]
  %v305 = vld [vmem:[%s1 + $0x898] sm:$0xff]
  %v306 = vld [vmem:[%s1 + $0x8a0] sm:$0xff]
  %v307 = vld [vmem:[%s1 + $0x8a8] sm:$0xff]
  %v308 = vld [vmem:[%s1 + $0x8b0] sm:$0xff]
  %v309 = vld [vmem:[%s1 + $0x8b8] sm:$0xff]
  %v310 = vld [vmem:[%s1 + $0x8c0] sm:$0xff]
  %v311 = vld [vmem:[%s1 + $0x8c8] sm:$0xff]
  %v312 = vld [vmem:[%s1 + $0x8d0] sm:$0xff]
  %v313 = vld [vmem:[%s1 + $0x8d8] sm:$0xff]
  %v314 = vld [vmem:[%s1 + $0x8e0] sm:$0xff]
  %v315 = vld [vmem:[%s1 + $0x8e8] sm:$0xff]
  %v316 = vld [vmem:[%s1 + $0x8f0] sm:$0xff]
  %v317 = vld [vmem:[%s1 + $0x8f8] sm:$0xff]
  %v318 = vld [vmem:[%s1 + $0x900] sm:$0xff]
  %v319 = vld [vmem:[%s1 + $0x908] sm:$0xff]
  %v320 = vld [vmem:[%s1 + $0x910] sm:$0xff]
  %v321 = vld [vmem:[%s1 + $0x918] sm:$0xff]
  %v322 = vld [vmem:[%s1 + $0x920] sm:$0xff]
  %v323 = vld [vmem:[%s1 + $0x928] sm:$0xff]
  %v324 = vld [vmem:[%s1 + $0x930] sm:$0xff]
  %v325 = vld [vmem:[%s1 + $0x938] sm:$0xff]
  %v326 = vld [vmem:[%s1 + $0x940] sm:$0xff]
  %v327 = vld [vmem:[%s1 + $0x948] sm:$0xff]
  %v328 = vld [vmem:[%s1 + $0x950] sm:$0xff]
  %v329 = vld [vmem:[%s1 + $0x958] sm:$0xff]
  %v330 = vld [vmem:[%s1 + $0x960] sm:$0xff]
  %v331 = vld [vmem:[%s1 + $0x968] sm:$0xff]
  %v332 = vld [vmem:[%s1 + $0x970] sm:$0xff]
  %v333 = vld [vmem:[%s1 + $0x978] sm:$0xff]
  %v334 = vld [vmem:[%s1 + $0x980] sm:$0xff]
  %v335 = vld [vmem:[%s1 + $0x988] sm:$0xff]
  %v336 = vld [vmem:[%s1 + $0x990] sm:$0xff]
  %v337 = vld [vmem:[%s1 + $0x998] sm:$0xff]
  %v338 = vld [vmem:[%s1 + $0x9a0] sm:$0xff]
  %v339 = vld [vmem:[%s1 + $0x9a8] sm:$0xff]
  %v340 = vld [vmem:[%s1 + $0x9b0] sm:$0xff]
  %v341 = vld [vmem:[%s1 + $0x9b8] sm:$0xff]
  %v342 = vld [vmem:[%s1 + $0x9c0] sm:$0xff]
  %v343 = vld [vmem:[%s1 + $0x9c8] sm:$0xff]
  %v344 = vld [vmem:[%s1 + $0x9d0] sm:$0xff]
  %v345 = vld [vmem:[%s1 + $0x9d8] sm:$0xff]
  %v346 = vld [vmem:[%s1 + $0x9e0] sm:$0xff]
  %v347 = vld [vmem:[%s1 + $0x9e8] sm:$0xff]
  %v348 = vld [vmem:[%s1 + $0x9f0] sm:$0xff]
  %v349 = vld [vmem:[%s1 + $0x9f8] sm:$0xff]
  %v350 = vld [vmem:[%s1 + $0xa00] sm:$0xff]
  %v351 = vld [vmem:[%s1 + $0xa08] sm:$0xff]
  %v352 = vld [vmem:[%s1 + $0xa10] sm:$0xff]
  %v353 = vld [vmem:[%s1 + $0xa18] sm:$0xff]
  %v354 = vld [vmem:[%s1 + $0xa20] sm:$0xff]
  %v355 = vld [vmem:[%s1 + $0xa28] sm:$0xff]
  %v356 = vld [vmem:[%s1 + $0xa30] sm:$0xff]
  %v357 = vld [vmem:[%s1 + $0xa38] sm:$0xff]
  %v358 = vld [vmem:[%s1 + $0xa40] sm:$0xff]
  %v359 = vld [vmem:[%s1 + $0xa48] sm:$0xff]
  %v360 = vld [vmem:[%s1 + $0xa50] sm:$0xff]
  %v361 = vld [vmem:[%s1 + $0xa58] sm:$0xff]
  %v362 = vld [vmem:[%s1 + $0xa60] sm:$0xff]
  %v363 = vld [vmem:[%s1 + $0xa68] sm:$0xff]
  %v364 = vld [vmem:[%s1 + $0xa70] sm:$0xff]
  %v365 = vld [vmem:[%s1 + $0xa78] sm:$0xff]
  %v366 = vld [vmem:[%s1 + $0xa80] sm:$0xff]
  %v367 = vld [vmem:[%s1 + $0xa88] sm:$0xff]
  %v368 = vld [vmem:[%s1 + $0xa90] sm:$0xff]
  %v369 = vld [vmem:[%s1 + $0xa98] sm:$0xff]
  %v370 = vld [vmem:[%s1 + $0xaa0] sm:$0xff]
  %v371 = vld [vmem:[%s1 + $0xaa8] sm:$0xff]
  %v372 = vld [vmem:[%s1 + $0xab0] sm:$0xff]
  %v373 = vld [vmem:[%s1 + $0xab8] sm:$0xff]
  %v374 = vld [vmem:[%s1 + $0xac0] sm:$0xff]
  %v375 = vld [vmem:[%s1 + $0xac8] sm:$0xff]
  %v376 = vld [vmem:[%s1 + $0xad0] sm:$0xff]
  %v377 = vld [vmem:[%s1 + $0xad8] sm:$0xff]
  %v378 = vld [vmem:[%s1 + $0xae0] sm:$0xff]
  %v379 = vld [vmem:[%s1 + $0xae8] sm:$0xff]
  %v380 = vld [vmem:[%s1 + $0xaf0] sm:$0xff]
  %v381 = vld [vmem:[%s1 + $0xaf8] sm:$0xff]
  %v382 = vld [vmem:[%s1 + $0xb00] sm:$0xff]
  %v383 = vld [vmem:[%s1 + $0xb08] sm:$0xff]
  %v384 = vld [vmem:[%s1 + $0xb10] sm:$0xff]
  %v385 = vld [vmem:[%s1 + $0xb18] sm:$0xff]
  %v386 = vld [vmem:[%s1 + $0xb20] sm:$0xff]
  %v387 = vld [vmem:[%s1 + $0xb28] sm:$0xff]
  %v388 = vld [vmem:[%s1 + $0xb30] sm:$0xff]
  %v389 = vld [vmem:[%s1 + $0xb38] sm:$0xff]
  %v390 = vld [vmem:[%s1 + $0xb40] sm:$0xff]
  %v391 = vld [vmem:[%s1 + $0xb48] sm:$0xff]
  %v392 = vld [vmem:[%s1 + $0xb50] sm:$0xff]
  %v393 = vld [vmem:[%s1 + $0xb58] sm:$0xff]
  %v394 = vld [vmem:[%s1 + $0xb60] sm:$0xff]
  %v395 = vld [vmem:[%s1 + $0xb68] sm:$0xff]
  %v396 = vld [vmem:[%s1 + $0xb70] sm:$0xff]
  %v397 = vld [vmem:[%s1 + $0xb78] sm:$0xff]
  %v398 = vld [vmem:[%s1 + $0xb80] sm:$0xff]
  %v399 = vld [vmem:[%s1 + $0xb88] sm:$0xff]
  %v400 = vld [vmem:[%s1 + $0xb90] sm:$0xff]
  %v401 = vld [vmem:[%s1 + $0xb98] sm:$0xff]
  %v402 = vld [vmem:[%s1 + $0xba0] sm:$0xff]
  %v403 = vld [vmem:[%s1 + $0xba8] sm:$0xff]
  %v404 = vld [vmem:[%s1 + $0xbb0] sm:$0xff]
  %v405 = vld [vmem:[%s1 + $0xbb8] sm:$0xff]
  %v406 = vld [vmem:[%s1 + $0xbc0] sm:$0xff]
  %v407 = vld [vmem:[%s1 + $0xbc8] sm:$0xff]
  %v408 = vld [vmem:[%s1 + $0xbd0] sm:$0xff]
  %v409 = vld [vmem:[%s1 + $0xbd8] sm:$0xff]
  %v410 = vld [vmem:[%s1 + $0xbe0] sm:$0xff]
  %v411 = vld [vmem:[%s1 + $0xbe8] sm:$0xff]
  %v412 = vld [vmem:[%s1 + $0xbf0] sm:$0xff]
  %v413 = vld [vmem:[%s1 + $0xbf8] sm:$0xff]
  %v414 = vld [vmem:[%s1 + $0xc00] sm:$0xff]
  %v415 = vld [vmem:[%s1 + $0xc08] sm:$0xff]
  %v416 = vld [vmem:[%s1 + $0xc10] sm:$0xff]
  %v417 = vld [vmem:[%s1 + $0xc18] sm:$0xff]
  %v418 = vld [vmem:[%s1 + $0xc20] sm:$0xff]
  %v419 = vld [vmem:[%s1 + $0xc28] sm:$0xff]
  %v420 = vld [vmem:[%s1 + $0xc30] sm:$0xff]
  %v421 = vld [vmem:[%s1 + $0xc38] sm:$0xff]
  %v422 = vld [vmem:[%s1 + $0xc40] sm:$0xff]
  %v423 = vld [vmem:[%s1 + $0xc48] sm:$0xff]
  %v424 = vld [vmem:[%s1 + $0xc50] sm:$0xff]
  %v425 = vld [vmem:[%s1 + $0xc58] sm:$0xff]
  %v426 = vld [vmem:[%s1 + $0xc60] sm:$0xff]
  %v427 = vld [vmem:[%s1 + $0xc68] sm:$0xff]
  %v428 = vld [vmem:[%s1 + $0xc70] sm:$0xff]
  %v429 = vld [vmem:[%s1 + $0xc78] sm:$0xff]
  %v430 = vld [vmem:[%s1 + $0xc80] sm:$0xff]
  %v431 = vld [vmem:[%s1 + $0xc88] sm:$0xff]
  %v432 = vld [vmem:[%s1 + $0xc90] sm:$0xff]
  %v433 = vld [vmem:[%s1 + $0xc98] sm:$0xff]
  %v434 = vld [vmem:[%s1 + $0xca0] sm:$0xff]
  %v435 = vld [vmem:[%s1 + $0xca8] sm:$0xff]
  %v436 = vld [vmem:[%s1 + $0xcb0] sm:$0xff]
  %v437 = vld [vmem:[%s1 + $0xcb8] sm:$0xff]
  %v438 = vld [vmem:[%s1 + $0xcc0] sm:$0xff]
  %v439 = vld [vmem:[%s1 + $0xcc8] sm:$0xff]
  %v440 = vld [vmem:[%s1 + $0xcd0] sm:$0xff]
  %v441 = vld [vmem:[%s1 + $0xcd8] sm:$0xff]
  %v442 = vld [vmem:[%s1 + $0xce0] sm:$0xff]
  %v443 = vld [vmem:[%s1 + $0xce8] sm:$0xff]
  %v444 = vld [vmem:[%s1 + $0xcf0] sm:$0xff]
  %v445 = vld [vmem:[%s1 + $0xcf8] sm:$0xff]
  %v446 = vld [vmem:[%s1 + $0xd00] sm:$0xff]
  %v447 = vld [vmem:[%s1 + $0xd08] sm:$0xff]
  %v448 = vld [vmem:[%s1 + $0xd10] sm:$0xff]
  %v449 = vld [vmem:[%s1 + $0xd18] sm:$0xff]
  %v450 = vld [vmem:[%s1 + $0xd20] sm:$0xff]
  %v451 = vld [vmem:[%s1 + $0xd28] sm:$0xff]
  %v452 = vld [vmem:[%s1 + $0xd30] sm:$0xff]
  %v453 = vld [vmem:[%s1 + $0xd38] sm:$0xff]
  %v454 = vld [vmem:[%s1 + $0xd40] sm:$0xff]
  %v455 = vld [vmem:[%s1 + $0xd48] sm:$0xff]
  %v456 = vld [vmem:[%s1 + $0xd50] sm:$0xff]
  %v457 = vld [vmem:[%s1 + $0xd58] sm:$0xff]
  %v458 = vld [vmem:[%s1 + $0xd60] sm:$0xff]
  %v459 = vld [vmem:[%s1 + $0xd68] sm:$0xff]
  %v460 = vld [vmem:[%s1 + $0xd70] sm:$0xff]
  %v461 = vld [vmem:[%s1 + $0xd78] sm:$0xff]
  %v462 = vld [vmem:[%s1 + $0xd80] sm:$0xff]
  %v463 = vld [vmem:[%s1 + $0xd88] sm:$0xff]
  %v464 = vld [vmem:[%s1 + $0xd90] sm:$0xff]
  %v465 = vld [vmem:[%s1 + $0xd98] sm:$0xff]
  %v466 = vld [vmem:[%s1 + $0xda0] sm:$0xff]
  %v467 = vld [vmem:[%s1 + $0xda8] sm:$0xff]
  %v468 = vld [vmem:[%s1 + $0xdb0] sm:$0xff]
  %v469 = vld [vmem:[%s1 + $0xdb8] sm:$0xff]
  %v470 = vld [vmem:[%s1 + $0xdc0] sm:$0xff]
  %v471 = vld [vmem:[%s1 + $0xdc8] sm:$0xff]
  %v472 = vld [vmem:[%s1 + $0xdd0] sm:$0xff]
  %v473 = vld [vmem:[%s1 + $0xdd8] sm:$0xff]
  %v474 = vld [vmem:[%s1 + $0xde0] sm:$0xff]
  %v475 = vld [vmem:[%s1 + $0xde8] sm:$0xff]
  %v476 = vld [vmem:[%s1 + $0xdf0] sm:$0xff]
  %v477 = vld [vmem:[%s1 + $0xdf8] sm:$0xff]
  %v478 = vld [vmem:[%s1 + $0xe00] sm:$0xff]
  %v479 = vld [vmem:[%s1 + $0xe08] sm:$0xff]
  %v480 = vld [vmem:[%s1 + $0xe10] sm:$0xff]
  %v481 = vld [vmem:[%s1 + $0xe18] sm:$0xff]
  %v482 = vld [vmem:[%s1 + $0xe20] sm:$0xff]
  %v483 = vld [vmem:[%s1 + $0xe28] sm:$0xff]
  %v484 = vld [vmem:[%s1 + $0xe30] sm:$0xff]
  %v485 = vld [vmem:[%s1 + $0xe38] sm:$0xff]
  %v486 = vld [vmem:[%s1 + $0xe40] sm:$0xff]
  %v487 = vld [vmem:[%s1 + $0xe48] sm:$0xff]
  %v488 = vld [vmem:[%s1 + $0xe50] sm:$0xff]
  %v489 = vld [vmem:[%s1 + $0xe58] sm:$0xff]
  %v490 = vld [vmem:[%s1 + $0xe60] sm:$0xff]
  %v491 = vld [vmem:[%s1 + $0xe68] sm:$0xff]
  %v492 = vld [vmem:[%s1 + $0xe70] sm:$0xff]
  %v493 = vld [vmem:[%s1 + $0xe78] sm:$0xff]
  %v494 = vld [vmem:[%s1 + $0xe80] sm:$0xff]
  %v495 = vld [vmem:[%s1 + $0xe88] sm:$0xff]
  %v496 = vld [vmem:[%s1 + $0xe90] sm:$0xff]
  %v497 = vld [vmem:[%s1 + $0xe98] sm:$0xff]
  %v498 = vld [vmem:[%s1 + $0xea0] sm:$0xff]
  %v499 = vld [vmem:[%s1 + $0xea8] sm:$0xff]
  %v500 = vld [vmem:[%s1 + $0xeb0] sm:$0xff]
  %v501 = vld [vmem:[%s1 + $0xeb8] sm:$0xff]
  %v502 = vld [vmem:[%s1 + $0xec0] sm:$0xff]
  %v503 = vld [vmem:[%s1 + $0xec8] sm:$0xff]
  %v504 = vld [vmem:[%s1 + $0xed0] sm:$0xff]
  %v505 = vld [vmem:[%s1 + $0xed8] sm:$0xff]
  %v506 = vld [vmem:[%s1 + $0xee0] sm:$0xff]
  %v507 = vld [vmem:[%s1 + $0xee8] sm:$0xff]
  %v508 = vld [vmem:[%s1 + $0xef0] sm:$0xff]
  %v509 = vld [vmem:[%s1 + $0xef8] sm:$0xff]
  %v510 = vld [vmem:[%s1 + $0xf00] sm:$0xff]
  %v511 = vld [vmem:[%s1 + $0xf08] sm:$0xff]
  %v512 = vld [vmem:[%s1 + $0xf10] sm:$0xff]
  %v513 = vld [vmem:[%s1 + $0xf18] sm:$0xff]
  %v514 = vld [vmem:[%s1 + $0xf20] sm:$0xff]
  %v515 = vld [vmem:[%s1 + $0xf28] sm:$0xff]
  %v516 = vld [vmem:[%s1 + $0xf30] sm:$0xff]
  %v517 = vld [vmem:[%s1 + $0xf38] sm:$0xff]
  %v518 = vld [vmem:[%s1 + $0xf40] sm:$0xff]
  %v519 = vld [vmem:[%s1 + $0xf48] sm:$0xff]
  %v520 = vld [vmem:[%s1 + $0xf50] sm:$0xff]
  %v521 = vld [vmem:[%s1 + $0xf58] sm:$0xff]
  %v522 = vld [vmem:[%s1 + $0xf60] sm:$0xff]
  %v523 = vld [vmem:[%s1 + $0xf68] sm:$0xff]
  %v524 = vld [vmem:[%s1 + $0xf70] sm:$0xff]
  %v525 = vld [vmem:[%s1 + $0xf78] sm:$0xff]
  %v526 = vld [vmem:[%s1 + $0xf80] sm:$0xff]
  %v527 = vld [vmem:[%s1 + $0xf88] sm:$0xff]
  %v528 = vld [vmem:[%s1 + $0xf90] sm:$0xff]
  %v529 = vld [vmem:[%s1 + $0xf98] sm:$0xff]
  %v530 = vld [vmem:[%s1 + $0xfa0] sm:$0xff]
  %v531 = vld [vmem:[%s1 + $0xfa8] sm:$0xff]
  %v532 = vld [vmem:[%s1 + $0xfb0] sm:$0xff]
  %v533 = vld [vmem:[%s1 + $0xfb8] sm:$0xff]
  %v534 = vld [vmem:[%s1 + $0xfc0] sm:$0xff]
  %v535 = vld [vmem:[%s1 + $0xfc8] sm:$0xff]
  %v536 = vld [vmem:[%s1 + $0xfd0] sm:$0xff]
  %v537 = vld [vmem:[%s1 + $0xfd8] sm:$0xff]
  %v538 = vld [vmem:[%s1 + $0xfe0] sm:$0xff]
  %v539 = vld [vmem:[%s1 + $0xfe8] sm:$0xff]
  %v540 = vld [vmem:[%s1 + $0xff0] sm:$0xff]
  %v541 = vld [vmem:[%s1 + $0xff8] sm:$0xff]
  %v542 = vld [vmem:[%s1 + $0x1000] sm:$0xff]
  %v543 = vld [vmem:[%s1 + $0x1008] sm:$0xff]
  %v544 = vld [vmem:[%s1 + $0x1010] sm:$0xff]
  %v545 = vld [vmem:[%s1 + $0x1018] sm:$0xff]
  %v546 = vld [vmem:[%s1 + $0x1020] sm:$0xff]
  %v547 = vld [vmem:[%s1 + $0x1028] sm:$0xff]
  %v548 = vld [vmem:[%s1 + $0x1030] sm:$0xff]
  %v549 = vld [vmem:[%s1 + $0x1038] sm:$0xff]
  %v550 = vld [vmem:[%s1 + $0x1040] sm:$0xff]
  %v551 = vld [vmem:[%s1 + $0x1048] sm:$0xff]
  %v552 = vld [vmem:[%s1 + $0x1050] sm:$0xff]
  %v553 = vld [vmem:[%s1 + $0x1058] sm:$0xff]
  %v554 = vld [vmem:[%s1 + $0x1060] sm:$0xff]
  %v555 = vld [vmem:[%s1 + $0x1068] sm:$0xff]
  %v556 = vld [vmem:[%s1 + $0x1070] sm:$0xff]
  %v557 = vld [vmem:[%s1 + $0x1078] sm:$0xff]
  %v558 = vld [vmem:[%s1 + $0x1080] sm:$0xff]
  %v559 = vld [vmem:[%s1 + $0x1088] sm:$0xff]
  %v560 = vld [vmem:[%s1 + $0x1090] sm:$0xff]
  %v561 = vld [vmem:[%s1 + $0x1098] sm:$0xff]
  %v562 = vld [vmem:[%s1 + $0x10a0] sm:$0xff]
  %v563 = vld [vmem:[%s1 + $0x10a8] sm:$0xff]
  %v564 = vld [vmem:[%s1 + $0x10b0] sm:$0xff]
  %v565 = vld [vmem:[%s1 + $0x10b8] sm:$0xff]
  %v566 = vld [vmem:[%s1 + $0x10c0] sm:$0xff]
  %v567 = vld [vmem:[%s1 + $0x10c8] sm:$0xff]
  %v568 = vld [vmem:[%s1 + $0x10d0] sm:$0xff]
  %v569 = vld [vmem:[%s1 + $0x10d8] sm:$0xff]
  %v570 = vld [vmem:[%s1 + $0x10e0] sm:$0xff]
  %v571 = vld [vmem:[%s1 + $0x10e8] sm:$0xff]
  %v572 = vld [vmem:[%s1 + $0x10f0] sm:$0xff]
  %v573 = vld [vmem:[%s1 + $0x10f8] sm:$0xff]
  %v574 = vld [vmem:[%s1 + $0x1100] sm:$0xff]
  %v575 = vld [vmem:[%s1 + $0x1108] sm:$0xff]
  %v576 = vld [vmem:[%s1 + $0x1110] sm:$0xff]
  %v577 = vld [vmem:[%s1 + $0x1118] sm:$0xff]
  %v578 = vld [vmem:[%s1 + $0x1120] sm:$0xff]
  %v579 = vld [vmem:[%s1 + $0x1128] sm:$0xff]
  %v580 = vld [vmem:[%s1 + $0x1130] sm:$0xff]
  %v581 = vld [vmem:[%s1 + $0x1138] sm:$0xff]
  %v582 = vld [vmem:[%s1 + $0x1140] sm:$0xff]
  %v583 = vld [vmem:[%s1 + $0x1148] sm:$0xff]
  %v584 = vld [vmem:[%s1 + $0x1150] sm:$0xff]
  %v585 = vld [vmem:[%s1 + $0x1158] sm:$0xff]
  %v586 = vld [vmem:[%s1 + $0x1160] sm:$0xff]
  %v587 = vld [vmem:[%s1 + $0x1168] sm:$0xff]
  %v588 = vld [vmem:[%s1 + $0x1170] sm:$0xff]
  %v589 = vld [vmem:[%s1 + $0x1178] sm:$0xff]
  %v590 = vld [vmem:[%s1 + $0x1180] sm:$0xff]
  %v591 = vld [vmem:[%s1 + $0x1188] sm:$0xff]
  %v592 = vld [vmem:[%s1 + $0x1190] sm:$0xff]
  %v593 = vld [vmem:[%s1 + $0x1198] sm:$0xff]
  %v594 = vld [vmem:[%s1 + $0x11a0] sm:$0xff]
  %v595 = vld [vmem:[%s1 + $0x11a8] sm:$0xff]
  %v596 = vld [vmem:[%s1 + $0x11b0] sm:$0xff]
  %v597 = vld [vmem:[%s1 + $0x11b8] sm:$0xff]
  %v598 = vld [vmem:[%s1 + $0x11c0] sm:$0xff]
  %v599 = vld [vmem:[%s1 + $0x11c8] sm:$0xff]
  %v600 = vld [vmem:[%s1 + $0x11d0] sm:$0xff]
  %v601 = vld [vmem:[%s1 + $0x11d8] sm:$0xff]
  %v602 = vld [vmem:[%s1 + $0x11e0] sm:$0xff]
  %v603 = vld [vmem:[%s1 + $0x11e8] sm:$0xff]
  %v604 = vld [vmem:[%s1 + $0x11f0] sm:$0xff]
  %v605 = vld [vmem:[%s1 + $0x11f8] sm:$0xff]
  %v606 = vld [vmem:[%s1 + $0x1200] sm:$0xff]
  %v607 = vld [vmem:[%s1 + $0x1208] sm:$0xff]
  %v608 = vld [vmem:[%s1 + $0x1210] sm:$0xff]
  %v609 = vld [vmem:[%s1 + $0x1218] sm:$0xff]
  %v610 = vld [vmem:[%s1 + $0x1220] sm:$0xff]
  %v611 = vld [vmem:[%s1 + $0x1228] sm:$0xff]
  %v612 = vld [vmem:[%s1 + $0x1230] sm:$0xff]
  %v613 = vld [vmem:[%s1 + $0x1238] sm:$0xff]
  %v614 = vld [vmem:[%s1 + $0x1240] sm:$0xff]
  %v615 = vld [vmem:[%s1 + $0x1248] sm:$0xff]
  %v616 = vld [vmem:[%s1 + $0x1250] sm:$0xff]
  %v617 = vld [vmem:[%s1 + $0x1258] sm:$0xff]
  %v618 = vld [vmem:[%s1 + $0x1260] sm:$0xff]
  %v619 = vld [vmem:[%s1 + $0x1268] sm:$0xff]
  %v620 = vld [vmem:[%s1 + $0x1270] sm:$0xff]
  %v621 = vld [vmem:[%s1 + $0x1278] sm:$0xff]
  %v622 = vld [vmem:[%s1 + $0x1280] sm:$0xff]
  %v623 = vld [vmem:[%s1 + $0x1288] sm:$0xff]
  %v624 = vld [vmem:[%s1 + $0x1290] sm:$0xff]
  %v625 = vld [vmem:[%s1 + $0x1298] sm:$0xff]
  %v626 = vld [vmem:[%s1 + $0x12a0] sm:$0xff]
  %v627 = vld [vmem:[%s1 + $0x12a8] sm:$0xff]
  %v628 = vld [vmem:[%s1 + $0x12b0] sm:$0xff]
  %v629 = vld [vmem:[%s1 + $0x12b8] sm:$0xff]
  %v630 = vld [vmem:[%s1 + $0x12c0] sm:$0xff]
  %v631 = vld [vmem:[%s1 + $0x12c8] sm:$0xff]
  %v632 = vld [vmem:[%s1 + $0x12d0] sm:$0xff]
  %v633 = vld [vmem:[%s1 + $0x12d8] sm:$0xff]
  %v634 = vld [vmem:[%s1 + $0x12e0] sm:$0xff]
  %v635 = vld [vmem:[%s1 + $0x12e8] sm:$0xff]
  %v636 = vld [vmem:[%s1 + $0x12f0] sm:$0xff]
  %v637 = vld [vmem:[%s1 + $0x12f8] sm:$0xff]
  %v638 = vld [vmem:[%s1 + $0x1300] sm:$0xff]
  %v639 = vld [vmem:[%s1 + $0x1308] sm:$0xff]
  %v640 = vld [vmem:[%s1 + $0x1310] sm:$0xff]
  %v641 = vld [vmem:[%s1 + $0x1318] sm:$0xff]
  %v642 = vld [vmem:[%s1 + $0x1320] sm:$0xff]
  %v643 = vld [vmem:[%s1 + $0x1328] sm:$0xff]
  %v644 = vld [vmem:[%s1 + $0x1330] sm:$0xff]
  %v645 = vld [vmem:[%s1 + $0x1338] sm:$0xff]
  %v646 = vld [vmem:[%s1 + $0x1340] sm:$0xff]
  %v647 = vld [vmem:[%s1 + $0x1348] sm:$0xff]
  %v648 = vld [vmem:[%s1 + $0x1350] sm:$0xff]
  %v649 = vld [vmem:[%s1 + $0x1358] sm:$0xff]
  %v650 = vld [vmem:[%s1 + $0x1360] sm:$0xff]
  %v651 = vld [vmem:[%s1 + $0x1368] sm:$0xff]
  %v652 = vld [vmem:[%s1 + $0x1370] sm:$0xff]
  %v653 = vld [vmem:[%s1 + $0x1378] sm:$0xff]
  %v654 = vld [vmem:[%s1 + $0x1380] sm:$0xff]
  %v655 = vld [vmem:[%s1 + $0x1388] sm:$0xff]
  %v656 = vld [vmem:[%s1 + $0x1390] sm:$0xff]
  %v657 = vld [vmem:[%s1 + $0x1398] sm:$0xff]
  %v658 = vld [vmem:[%s1 + $0x13a0] sm:$0xff]
  %v659 = vld [vmem:[%s1 + $0x13a8] sm:$0xff]
  %v660 = vld [vmem:[%s1 + $0x13b0] sm:$0xff]
  %v661 = vld [vmem:[%s1 + $0x13b8] sm:$0xff]
  %v662 = vld [vmem:[%s1 + $0x13c0] sm:$0xff]
  %v663 = vld [vmem:[%s1 + $0x13c8] sm:$0xff]
  %v664 = vld [vmem:[%s1 + $0x13d0] sm:$0xff]
  %v665 = vld [vmem:[%s1 + $0x13d8] sm:$0xff]
  %v666 = vld [vmem:[%s1 + $0x13e0] sm:$0xff]
  %v667 = vld [vmem:[%s1 + $0x13e8] sm:$0xff]
  %v668 = vld [vmem:[%s1 + $0x13f0] sm:$0xff]
  %v669 = vld [vmem:[%s1 + $0x13f8] sm:$0xff]
  %v670 = vld [vmem:[%s1 + $0x1400] sm:$0xff]
  %v671 = vld [vmem:[%s1 + $0x1408] sm:$0xff]
  %v672 = vld [vmem:[%s1 + $0x1410] sm:$0xff]
  %v673 = vld [vmem:[%s1 + $0x1418] sm:$0xff]
  %v674 = vld [vmem:[%s1 + $0x1420] sm:$0xff]
  %v675 = vld [vmem:[%s1 + $0x1428] sm:$0xff]
  %v676 = vld [vmem:[%s1 + $0x1430] sm:$0xff]
  %v677 = vld [vmem:[%s1 + $0x1438] sm:$0xff]
  %v678 = vld [vmem:[%s1 + $0x1440] sm:$0xff]
  %v679 = vld [vmem:[%s1 + $0x1448] sm:$0xff]
  %v680 = vld [vmem:[%s1 + $0x1450] sm:$0xff]
  %v681 = vld [vmem:[%s1 + $0x1458] sm:$0xff]
  %v682 = vld [vmem:[%s1 + $0x1460] sm:$0xff]
  %v683 = vld [vmem:[%s1 + $0x1468] sm:$0xff]
  %v684 = vld [vmem:[%s1 + $0x1470] sm:$0xff]
  %v685 = vld [vmem:[%s1 + $0x1478] sm:$0xff]
  %v686 = vld [vmem:[%s1 + $0x1480] sm:$0xff]
  %v687 = vld [vmem:[%s1 + $0x1488] sm:$0xff]
  %v688 = vld [vmem:[%s1 + $0x1490] sm:$0xff]
  %v689 = vld [vmem:[%s1 + $0x1498] sm:$0xff]
  %v690 = vld [vmem:[%s1 + $0x14a0] sm:$0xff]
  %v691 = vld [vmem:[%s1 + $0x14a8] sm:$0xff]
  %v692 = vld [vmem:[%s1 + $0x14b0] sm:$0xff]
  %v693 = vld [vmem:[%s1 + $0x14b8] sm:$0xff]
  %v694 = vld [vmem:[%s1 + $0x14c0] sm:$0xff]
  %v695 = vld [vmem:[%s1 + $0x14c8] sm:$0xff]
  %v696 = vld [vmem:[%s1 + $0x14d0] sm:$0xff]
  %v697 = vld [vmem:[%s1 + $0x14d8] sm:$0xff]
  %v698 = vld [vmem:[%s1 + $0x14e0] sm:$0xff]
  %v699 = vld [vmem:[%s1 + $0x14e8] sm:$0xff]
  %v700 = vld [vmem:[%s1 + $0x14f0] sm:$0xff]
  %v701 = vld [vmem:[%s1 + $0x14f8] sm:$0xff]
  %v702 = vld [vmem:[%s1 + $0x1500] sm:$0xff]
  %v703 = vld [vmem:[%s1 + $0x1508] sm:$0xff]
  %v704 = vld [vmem:[%s1 + $0x1510] sm:$0xff]
  %v705 = vld [vmem:[%s1 + $0x1518] sm:$0xff]
  %v706 = vld [vmem:[%s1 + $0x1520] sm:$0xff]
  %v707 = vld [vmem:[%s1 + $0x1528] sm:$0xff]
  %v708 = vld [vmem:[%s1 + $0x1530] sm:$0xff]
  %v709 = vld [vmem:[%s1 + $0x1538] sm:$0xff]
  %v710 = vld [vmem:[%s1 + $0x1540] sm:$0xff]
  %v711 = vld [vmem:[%s1 + $0x1548] sm:$0xff]
  %v712 = vld [vmem:[%s1 + $0x1550] sm:$0xff]
  %v713 = vld [vmem:[%s1 + $0x1558] sm:$0xff]
  %v714 = vld [vmem:[%s1 + $0x1560] sm:$0xff]
  %v715 = vld [vmem:[%s1 + $0x1568] sm:$0xff]
  %v716 = vld [vmem:[%s1 + $0x1570] sm:$0xff]
  %v717 = vld [vmem:[%s1 + $0x1578] sm:$0xff]
  %v718 = vld [vmem:[%s1 + $0x1580] sm:$0xff]
  %v719 = vld [vmem:[%s1 + $0x1588] sm:$0xff]
  %v720 = vld [vmem:[%s1 + $0x1590] sm:$0xff]
  %v721 = vld [vmem:[%s1 + $0x1598] sm:$0xff]
  %v722 = vld [vmem:[%s1 + $0x15a0] sm:$0xff]
  %v723 = vld [vmem:[%s1 + $0x15a8] sm:$0xff]
  %v724 = vld [vmem:[%s1 + $0x15b0] sm:$0xff]
  %v725 = vld [vmem:[%s1 + $0x15b8] sm:$0xff]
  %v726 = vld [vmem:[%s1 + $0x15c0] sm:$0xff]
  %v727 = vld [vmem:[%s1 + $0x15c8] sm:$0xff]
  %v728 = vld [vmem:[%s1 + $0x15d0] sm:$0xff]
  %v729 = vld [vmem:[%s1 + $0x15d8] sm:$0xff]
  %v730 = vld [vmem:[%s1 + $0x15e0] sm:$0xff]
  %v731 = vld [vmem:[%s1 + $0x15e8] sm:$0xff]
  %v732 = vld [vmem:[%s1 + $0x15f0] sm:$0xff]
  %v733 = vld [vmem:[%s1 + $0x15f8] sm:$0xff]
  %v734 = vld [vmem:[%s1 + $0x1600] sm:$0xff]
  %v735 = vld [vmem:[%s1 + $0x1608] sm:$0xff]
  %v736 = vld [vmem:[%s1 + $0x1610] sm:$0xff]
  %v737 = vld [vmem:[%s1 + $0x1618] sm:$0xff]
  %v738 = vld [vmem:[%s1 + $0x1620] sm:$0xff]
  %v739 = vld [vmem:[%s1 + $0x1628] sm:$0xff]
  %v740 = vld [vmem:[%s1 + $0x1630] sm:$0xff]
  %v741 = vld [vmem:[%s1 + $0x1638] sm:$0xff]
  %v742 = vld [vmem:[%s1 + $0x1640] sm:$0xff]
  %v743 = vld [vmem:[%s1 + $0x1648] sm:$0xff]
  %v744 = vld [vmem:[%s1 + $0x1650] sm:$0xff]
  %v745 = vld [vmem:[%s1 + $0x1658] sm:$0xff]
  %v746 = vld [vmem:[%s1 + $0x1660] sm:$0xff]
  %v747 = vld [vmem:[%s1 + $0x1668] sm:$0xff]
  %v748 = vld [vmem:[%s1 + $0x1670] sm:$0xff]
  %v749 = vld [vmem:[%s1 + $0x1678] sm:$0xff]
  %v750 = vld [vmem:[%s1 + $0x1680] sm:$0xff]
  %v751 = vld [vmem:[%s1 + $0x1688] sm:$0xff]
  %v752 = vld [vmem:[%s1 + $0x1690] sm:$0xff]
  %v753 = vld [vmem:[%s1 + $0x1698] sm:$0xff]
  %v754 = vld [vmem:[%s1 + $0x16a0] sm:$0xff]
  %v755 = vld [vmem:[%s1 + $0x16a8] sm:$0xff]
  %v756 = vld [vmem:[%s1 + $0x16b0] sm:$0xff]
  %v757 = vld [vmem:[%s1 + $0x16b8] sm:$0xff]
  %v758 = vld [vmem:[%s1 + $0x16c0] sm:$0xff]
  %v759 = vld [vmem:[%s1 + $0x16c8] sm:$0xff]
  %v760 = vld [vmem:[%s1 + $0x16d0] sm:$0xff]
  %v761 = vld [vmem:[%s1 + $0x16d8] sm:$0xff]
  %v762 = vld [vmem:[%s1 + $0x16e0] sm:$0xff]
  %v763 = vld [vmem:[%s1 + $0x16e8] sm:$0xff]
  %v764 = vld [vmem:[%s1 + $0x16f0] sm:$0xff]
  %v765 = vld [vmem:[%s1 + $0x16f8] sm:$0xff]
  %v766 = vld [vmem:[%s1 + $0x1700] sm:$0xff]
  %v767 = vld [vmem:[%s1 + $0x1708] sm:$0xff]
  %v768 = vld [vmem:[%s1 + $0x1710] sm:$0xff]
  %v769 = vld [vmem:[%s1 + $0x1718] sm:$0xff]
  %v770 = vld [vmem:[%s1 + $0x1720] sm:$0xff]
  %v771 = vld [vmem:[%s1 + $0x1728] sm:$0xff]
  %v772 = vld [vmem:[%s1 + $0x1730] sm:$0xff]
  %v773 = vld [vmem:[%s1 + $0x1738] sm:$0xff]
  %v774 = vld [vmem:[%s1 + $0x1740] sm:$0xff]
  %v775 = vld [vmem:[%s1 + $0x1748] sm:$0xff]
  %v776 = vld [vmem:[%s1 + $0x1750] sm:$0xff]
  %v777 = vld [vmem:[%s1 + $0x1758] sm:$0xff]
  %v778 = vld [vmem:[%s1 + $0x1760] sm:$0xff]
  %v779 = vld [vmem:[%s1 + $0x1768] sm:$0xff]
  %v780 = vld [vmem:[%s1 + $0x1770] sm:$0xff]
  %v781 = vld [vmem:[%s1 + $0x1778] sm:$0xff]
  %v782 = vld [vmem:[%s1 + $0x1780] sm:$0xff]
  %v783 = vld [vmem:[%s1 + $0x1788] sm:$0xff]
  %v784 = vld [vmem:[%s1 + $0x1790] sm:$0xff]
  %v785 = vld [vmem:[%s1 + $0x1798] sm:$0xff]
  %v786 = vld [vmem:[%s1 + $0x17a0] sm:$0xff]
  %v787 = vld [vmem:[%s1 + $0x17a8] sm:$0xff]
  %v788 = vld [vmem:[%s1 + $0x17b0] sm:$0xff]
  %v789 = vld [vmem:[%s1 + $0x17b8] sm:$0xff]
  %v790 = vld [vmem:[%s1 + $0x17c0] sm:$0xff]
  %v791 = vld [vmem:[%s1 + $0x17c8] sm:$0xff]
  %v792 = vld [vmem:[%s1 + $0x17d0] sm:$0xff]
  %v793 = vld [vmem:[%s1 + $0x17d8] sm:$0xff]
  %v794 = vld [vmem:[%s1 + $0x17e0] sm:$0xff]
  %v795 = vld [vmem:[%s1 + $0x17e8] sm:$0xff]
  %v796 = vld [vmem:[%s1 + $0x17f0] sm:$0xff]
  %v797 = vld [vmem:[%s1 + $0x17f8] sm:$0xff]
  %v798 = vld [vmem:[%s1 + $0x1800] sm:$0xff]
  %v799 = vld [vmem:[%s1 + $0x1808] sm:$0xff]
  %v800 = vld [vmem:[%s1 + $0x1810] sm:$0xff]
  %v801 = vld [vmem:[%s1 + $0x1818] sm:$0xff]
  %v802 = vld [vmem:[%s1 + $0x1820] sm:$0xff]
  %v803 = vld [vmem:[%s1 + $0x1828] sm:$0xff]
  %v804 = vld [vmem:[%s1 + $0x1830] sm:$0xff]
  %v805 = vld [vmem:[%s1 + $0x1838] sm:$0xff]
  %v806 = vld [vmem:[%s1 + $0x1840] sm:$0xff]
  %v807 = vld [vmem:[%s1 + $0x1848] sm:$0xff]
  %v808 = vld [vmem:[%s1 + $0x1850] sm:$0xff]
  %v809 = vld [vmem:[%s1 + $0x1858] sm:$0xff]
  %v810 = vld [vmem:[%s1 + $0x1860] sm:$0xff]
  %v811 = vld [vmem:[%s1 + $0x1868] sm:$0xff]
  %v812 = vld [vmem:[%s1 + $0x1870] sm:$0xff]
  %v813 = vld [vmem:[%s1 + $0x1878] sm:$0xff]
  %v814 = vld [vmem:[%s1 + $0x1880] sm:$0xff]
  %v815 = vld [vmem:[%s1 + $0x1888] sm:$0xff]
  %v816 = vld [vmem:[%s1 + $0x1890] sm:$0xff]
  %v817 = vld [vmem:[%s1 + $0x1898] sm:$0xff]
  %v818 = vld [vmem:[%s1 + $0x18a0] sm:$0xff]
  %v819 = vld [vmem:[%s1 + $0x18a8] sm:$0xff]
  %v820 = vld [vmem:[%s1 + $0x18b0] sm:$0xff]
  %v821 = vld [vmem:[%s1 + $0x18b8] sm:$0xff]
  %v822 = vld [vmem:[%s1 + $0x18c0] sm:$0xff]
  %v823 = vld [vmem:[%s1 + $0x18c8] sm:$0xff]
  %v824 = vld [vmem:[%s1 + $0x18d0] sm:$0xff]
  %v825 = vld [vmem:[%s1 + $0x18d8] sm:$0xff]
  %v826 = vld [vmem:[%s1 + $0x18e0] sm:$0xff]
  %v827 = vld [vmem:[%s1 + $0x18e8] sm:$0xff]
  %v828 = vld [vmem:[%s1 + $0x18f0] sm:$0xff]
  %v829 = vld [vmem:[%s1 + $0x18f8] sm:$0xff]
  %v830 = vld [vmem:[%s1 + $0x1900] sm:$0xff]
  %v831 = vld [vmem:[%s1 + $0x1908] sm:$0xff]
  %v832 = vld [vmem:[%s1 + $0x1910] sm:$0xff]
  %v833 = vld [vmem:[%s1 + $0x1918] sm:$0xff]
  %v834 = vld [vmem:[%s1 + $0x1920] sm:$0xff]
  %v835 = vld [vmem:[%s1 + $0x1928] sm:$0xff]
  %v836 = vld [vmem:[%s1 + $0x1930] sm:$0xff]
  %v837 = vld [vmem:[%s1 + $0x1938] sm:$0xff]
  %v838 = vld [vmem:[%s1 + $0x1940] sm:$0xff]
  %v839 = vld [vmem:[%s1 + $0x1948] sm:$0xff]
  %v840 = vld [vmem:[%s1 + $0x1950] sm:$0xff]
  %v841 = vld [vmem:[%s1 + $0x1958] sm:$0xff]
  %v842 = vld [vmem:[%s1 + $0x1960] sm:$0xff]
  %v843 = vld [vmem:[%s1 + $0x1968] sm:$0xff]
  %v844 = vld [vmem:[%s1 + $0x1970] sm:$0xff]
  %v845 = vld [vmem:[%s1 + $0x1978] sm:$0xff]
  %v846 = vld [vmem:[%s1 + $0x1980] sm:$0xff]
  %v847 = vld [vmem:[%s1 + $0x1988] sm:$0xff]
  %v848 = vld [vmem:[%s1 + $0x1990] sm:$0xff]
  %v849 = vld [vmem:[%s1 + $0x1998] sm:$0xff]
  %v850 = vld [vmem:[%s1 + $0x19a0] sm:$0xff]
  %v851 = vld [vmem:[%s1 + $0x19a8] sm:$0xff]
  %v852 = vld [vmem:[%s1 + $0x19b0] sm:$0xff]
  %v853 = vld [vmem:[%s1 + $0x19b8] sm:$0xff]
  %v854 = vld [vmem:[%s1 + $0x19c0] sm:$0xff]
  %v855 = vld [vmem:[%s1 + $0x19c8] sm:$0xff]
  %v856 = vld [vmem:[%s1 + $0x19d0] sm:$0xff]
  %v857 = vld [vmem:[%s1 + $0x19d8] sm:$0xff]
  %v858 = vld [vmem:[%s1 + $0x19e0] sm:$0xff]
  %v859 = vld [vmem:[%s1 + $0x19e8] sm:$0xff]
  %v860 = vld [vmem:[%s1 + $0x19f0] sm:$0xff]
  %v861 = vld [vmem:[%s1 + $0x19f8] sm:$0xff]
  %v862 = vld [vmem:[%s1 + $0x1a00] sm:$0xff]
  %v863 = vld [vmem:[%s1 + $0x1a08] sm:$0xff]
  %v864 = vld [vmem:[%s1 + $0x1a10] sm:$0xff]
  %v865 = vld [vmem:[%s1 + $0x1a18] sm:$0xff]
  %v866 = vld [vmem:[%s1 + $0x1a20] sm:$0xff]
  %v867 = vld [vmem:[%s1 + $0x1a28] sm:$0xff]
  %v868 = vld [vmem:[%s1 + $0x1a30] sm:$0xff]
  %v869 = vld [vmem:[%s1 + $0x1a38] sm:$0xff]
  %v870 = vld [vmem:[%s1 + $0x1a40] sm:$0xff]
  %v871 = vld [vmem:[%s1 + $0x1a48] sm:$0xff]
  %v872 = vld [vmem:[%s1 + $0x1a50] sm:$0xff]
  %v873 = vld [vmem:[%s1 + $0x1a58] sm:$0xff]
  %v874 = vld [vmem:[%s1 + $0x1a60] sm:$0xff]
  %v875 = vld [vmem:[%s1 + $0x1a68] sm:$0xff]
  %v876 = vld [vmem:[%s1 + $0x1a70] sm:$0xff]
  %v877 = vld [vmem:[%s1 + $0x1a78] sm:$0xff]
  %v878 = vld [vmem:[%s1 + $0x1a80] sm:$0xff]
  %v879 = vld [vmem:[%s1 + $0x1a88] sm:$0xff]
  %v880 = vld [vmem:[%s1 + $0x1a90] sm:$0xff]
  %v881 = vld [vmem:[%s1 + $0x1a98] sm:$0xff]
  %v882 = vld [vmem:[%s1 + $0x1aa0] sm:$0xff]
  %v883 = vld [vmem:[%s1 + $0x1aa8] sm:$0xff]
  %v884 = vld [vmem:[%s1 + $0x1ab0] sm:$0xff]
  %v885 = vld [vmem:[%s1 + $0x1ab8] sm:$0xff]
  %v886 = vld [vmem:[%s1 + $0x1ac0] sm:$0xff]
  %v887 = vld [vmem:[%s1 + $0x1ac8] sm:$0xff]
  %v888 = vld [vmem:[%s1 + $0x1ad0] sm:$0xff]
  %v889 = vld [vmem:[%s1 + $0x1ad8] sm:$0xff]
  %v890 = vld [vmem:[%s1 + $0x1ae0] sm:$0xff]
  %v891 = vld [vmem:[%s1 + $0x1ae8] sm:$0xff]
  %v892 = vld [vmem:[%s1 + $0x1af0] sm:$0xff]
  %v893 = vld [vmem:[%s1 + $0x1af8] sm:$0xff]
  %v894 = vld [vmem:[%s1 + $0x1b00] sm:$0xff]
  %v895 = vld [vmem:[%s1 + $0x1b08] sm:$0xff]
  %v896 = vld [vmem:[%s1 + $0x1b10] sm:$0xff]
  %v897 = vld [vmem:[%s1 + $0x1b18] sm:$0xff]
  %v898 = vld [vmem:[%s1 + $0x1b20] sm:$0xff]
  %v899 = vld [vmem:[%s1 + $0x1b28] sm:$0xff]
  %v900 = vld [vmem:[%s1 + $0x1b30] sm:$0xff]
  %v901 = vld [vmem:[%s1 + $0x1b38] sm:$0xff]
  %v902 = vld [vmem:[%s1 + $0x1b40] sm:$0xff]
  %v903 = vld [vmem:[%s1 + $0x1b48] sm:$0xff]
  %v904 = vld [vmem:[%s1 + $0x1b50] sm:$0xff]
  %v905 = vld [vmem:[%s1 + $0x1b58] sm:$0xff]
  %v906 = vld [vmem:[%s1 + $0x1b60] sm:$0xff]
  %v907 = vld [vmem:[%s1 + $0x1b68] sm:$0xff]
  %v908 = vld [vmem:[%s1 + $0x1b70] sm:$0xff]
  %v909 = vld [vmem:[%s1 + $0x1b78] sm:$0xff]
  %v910 = vld [vmem:[%s1 + $0x1b80] sm:$0xff]
  %v911 = vld [vmem:[%s1 + $0x1b88] sm:$0xff]
  %v912 = vld [vmem:[%s1 + $0x1b90] sm:$0xff]
  %v913 = vld [vmem:[%s1 + $0x1b98] sm:$0xff]
  %v914 = vld [vmem:[%s1 + $0x1ba0] sm:$0xff]
  %v915 = vld [vmem:[%s1 + $0x1ba8] sm:$0xff]
  %v916 = vld [vmem:[%s1 + $0x1bb0] sm:$0xff]
  %v917 = vld [vmem:[%s1 + $0x1bb8] sm:$0xff]
  %v918 = vld [vmem:[%s1 + $0x1bc0] sm:$0xff]
  %v919 = vld [vmem:[%s1 + $0x1bc8] sm:$0xff]
  %v920 = vld [vmem:[%s1 + $0x1bd0] sm:$0xff]
  %v921 = vld [vmem:[%s1 + $0x1bd8] sm:$0xff]
  %v922 = vld [vmem:[%s1 + $0x1be0] sm:$0xff]
  %v923 = vld [vmem:[%s1 + $0x1be8] sm:$0xff]
  %v924 = vld [vmem:[%s1 + $0x1bf0] sm:$0xff]
  %v925 = vld [vmem:[%s1 + $0x1bf8] sm:$0xff]
  %v926 = vld [vmem:[%s1 + $0x1c00] sm:$0xff]
  %v927 = vld [vmem:[%s1 + $0x1c08] sm:$0xff]
  %v928 = vld [vmem:[%s1 + $0x1c10] sm:$0xff]
  %v929 = vld [vmem:[%s1 + $0x1c18] sm:$0xff]
  %v930 = vld [vmem:[%s1 + $0x1c20] sm:$0xff]
  %v931 = vld [vmem:[%s1 + $0x1c28] sm:$0xff]
  %v932 = vld [vmem:[%s1 + $0x1c30] sm:$0xff]
  %v933 = vld [vmem:[%s1 + $0x1c38] sm:$0xff]
  %v934 = vld [vmem:[%s1 + $0x1c40] sm:$0xff]
  %v935 = vld [vmem:[%s1 + $0x1c48] sm:$0xff]
  %v936 = vld [vmem:[%s1 + $0x1c50] sm:$0xff]
  %v937 = vld [vmem:[%s1 + $0x1c58] sm:$0xff]
  %v938 = vld [vmem:[%s1 + $0x1c60] sm:$0xff]
  %v939 = vld [vmem:[%s1 + $0x1c68] sm:$0xff]
  %v940 = vld [vmem:[%s1 + $0x1c70] sm:$0xff]
  %v941 = vld [vmem:[%s1 + $0x1c78] sm:$0xff]
  %v942 = vld [vmem:[%s1 + $0x1c80] sm:$0xff]
  %v943 = vld [vmem:[%s1 + $0x1c88] sm:$0xff]
  %v944 = vld [vmem:[%s1 + $0x1c90] sm:$0xff]
  %v945 = vld [vmem:[%s1 + $0x1c98] sm:$0xff]
  %v946 = vld [vmem:[%s1 + $0x1ca0] sm:$0xff]
  %v947 = vld [vmem:[%s1 + $0x1ca8] sm:$0xff]
  %v948 = vld [vmem:[%s1 + $0x1cb0] sm:$0xff]
  %v949 = vld [vmem:[%s1 + $0x1cb8] sm:$0xff]
  %v950 = vld [vmem:[%s1 + $0x1cc0] sm:$0xff]
  %v951 = vld [vmem:[%s1 + $0x1cc8] sm:$0xff]
  %v952 = vld [vmem:[%s1 + $0x1cd0] sm:$0xff]
  %v953 = vld [vmem:[%s1 + $0x1cd8] sm:$0xff]
  %v954 = vld [vmem:[%s1 + $0x1ce0] sm:$0xff]
  %v955 = vld [vmem:[%s1 + $0x1ce8] sm:$0xff]
  %v956 = vld [vmem:[%s1 + $0x1cf0] sm:$0xff]
  %v957 = vld [vmem:[%s1 + $0x1cf8] sm:$0xff]
  %v958 = vld [vmem:[%s1 + $0x1d00] sm:$0xff]
  %v959 = vld [vmem:[%s1 + $0x1d08] sm:$0xff]
  %v960 = vld [vmem:[%s1 + $0x1d10] sm:$0xff]
  %v961 = vld [vmem:[%s1 + $0x1d18] sm:$0xff]
  %v962 = vld [vmem:[%s1 + $0x1d20] sm:$0xff]
  %v963 = vld [vmem:[%s1 + $0x1d28] sm:$0xff]
  %v964 = vld [vmem:[%s1 + $0x1d30] sm:$0xff]
  %v965 = vld [vmem:[%s1 + $0x1d38] sm:$0xff]
  %v966 = vld [vmem:[%s1 + $0x1d40] sm:$0xff]
  %v967 = vld [vmem:[%s1 + $0x1d48] sm:$0xff]
  %v968 = vld [vmem:[%s1 + $0x1d50] sm:$0xff]
  %v969 = vld [vmem:[%s1 + $0x1d58] sm:$0xff]
  %v970 = vld [vmem:[%s1 + $0x1d60] sm:$0xff]
  %v971 = vld [vmem:[%s1 + $0x1d68] sm:$0xff]
  %v972 = vld [vmem:[%s1 + $0x1d70] sm:$0xff]
  %v973 = vld [vmem:[%s1 + $0x1d78] sm:$0xff]
  %v974 = vld [vmem:[%s1 + $0x1d80] sm:$0xff]
  %v975 = vld [vmem:[%s1 + $0x1d88] sm:$0xff]
  %v976 = vld [vmem:[%s1 + $0x1d90] sm:$0xff]
  %v977 = vld [vmem:[%s1 + $0x1d98] sm:$0xff]
  %v978 = vld [vmem:[%s1 + $0x1da0] sm:$0xff]
  %v979 = vld [vmem:[%s1 + $0x1da8] sm:$0xff]
  %v980 = vld [vmem:[%s1 + $0x1db0] sm:$0xff]
  %v981 = vld [vmem:[%s1 + $0x1db8] sm:$0xff]
  %v982 = vld [vmem:[%s1 + $0x1dc0] sm:$0xff]
  %v983 = vld [vmem:[%s1 + $0x1dc8] sm:$0xff]
  %v984 = vld [vmem:[%s1 + $0x1dd0] sm:$0xff]
  %v985 = vld [vmem:[%s1 + $0x1dd8] sm:$0xff]
  %v986 = vld [vmem:[%s1 + $0x1de0] sm:$0xff]
  %v987 = vld [vmem:[%s1 + $0x1de8] sm:$0xff]
  %v988 = vld [vmem:[%s1 + $0x1df0] sm:$0xff]
  %v989 = vld [vmem:[%s1 + $0x1df8] sm:$0xff]
  %v990 = vld [vmem:[%s1 + $0x1e00] sm:$0xff]
  %v991 = vld [vmem:[%s1 + $0x1e08] sm:$0xff]
  %v992 = vld [vmem:[%s1 + $0x1e10] sm:$0xff]
  %v993 = vld [vmem:[%s1 + $0x1e18] sm:$0xff]
  %v994 = vld [vmem:[%s1 + $0x1e20] sm:$0xff]
  %v995 = vld [vmem:[%s1 + $0x1e28] sm:$0xff]
  %v996 = vld [vmem:[%s1 + $0x1e30] sm:$0xff]
  %v997 = vld [vmem:[%s1 + $0x1e38] sm:$0xff]
  %v998 = vld [vmem:[%s1 + $0x1e40] sm:$0xff]
  %v999 = vld [vmem:[%s1 + $0x1e48] sm:$0xff]
  %v1000 = vld [vmem:[%s1 + $0x1e50] sm:$0xff]
  %v1001 = vld [vmem:[%s1 + $0x1e58] sm:$0xff]
  %v1002 = vld [vmem:[%s1 + $0x1e60] sm:$0xff]
  %v1003 = vld [vmem:[%s1 + $0x1e68] sm:$0xff]
  %v1004 = vld [vmem:[%s1 + $0x1e70] sm:$0xff]
  %v1005 = vld [vmem:[%s1 + $0x1e78] sm:$0xff]
  %v1006 = vld [vmem:[%s1 + $0x1e80] sm:$0xff]
  %v1007 = vld [vmem:[%s1 + $0x1e88] sm:$0xff]
  %v1008 = vld [vmem:[%s1 + $0x1e90] sm:$0xff]
  %v1009 = vld [vmem:[%s1 + $0x1e98] sm:$0xff]
  %v1010 = vld [vmem:[%s1 + $0x1ea0] sm:$0xff]
  %v1011 = vld [vmem:[%s1 + $0x1ea8] sm:$0xff]
  %v1012 = vld [vmem:[%s1 + $0x1eb0] sm:$0xff]
  %v1013 = vld [vmem:[%s1 + $0x1eb8] sm:$0xff]
  %v1014 = vld [vmem:[%s1 + $0x1ec0] sm:$0xff]
  %v1015 = vld [vmem:[%s1 + $0x1ec8] sm:$0xff]
  %v1016 = vld [vmem:[%s1 + $0x1ed0] sm:$0xff]
  %v1017 = vld [vmem:[%s1 + $0x1ed8] sm:$0xff]
  %v1018 = vld [vmem:[%s1 + $0x1ee0] sm:$0xff]
  %v1019 = vld [vmem:[%s1 + $0x1ee8] sm:$0xff]
  %v1020 = vld [vmem:[%s1 + $0x1ef0] sm:$0xff]
  %v1021 = vld [vmem:[%s1 + $0x1ef8] sm:$0xff]
  %v1022 = vld [vmem:[%s1 + $0x1f00] sm:$0xff]
  %v1023 = vld [vmem:[%s1 + $0x1f08] sm:$0xff]
  %v1024 = vld [vmem:[%s1 + $0x1f10] sm:$0xff]
  %v1025 = vld [vmem:[%s1 + $0x1f18] sm:$0xff]
  %v1026 = vld [vmem:[%s1 + $0x1f20] sm:$0xff]
  %v1027 = vld [vmem:[%s1 + $0x1f28] sm:$0xff]
  %v1028 = vld [vmem:[%s1 + $0x1f30] sm:$0xff]
  %v1029 = vld [vmem:[%s1 + $0x1f38] sm:$0xff]
  %v1030 = vld [vmem:[%s1 + $0x1f40] sm:$0xff]
  %v1031 = vld [vmem:[%s1 + $0x1f48] sm:$0xff]
  %v1032 = vld [vmem:[%s1 + $0x1f50] sm:$0xff]
  %v1033 = vld [vmem:[%s1 + $0x1f58] sm:$0xff]
  %v1034 = vld [vmem:[%s1 + $0x1f60] sm:$0xff]
  %v1035 = vld [vmem:[%s1 + $0x1f68] sm:$0xff]
  %v1036 = vld [vmem:[%s1 + $0x1f70] sm:$0xff]
  %v1037 = vld [vmem:[%s1 + $0x1f78] sm:$0xff]
  %v1038 = vld [vmem:[%s1 + $0x1f80] sm:$0xff]
  %v1039 = vld [vmem:[%s1 + $0x1f88] sm:$0xff]
  %v1040 = vld [vmem:[%s1 + $0x1f90] sm:$0xff]
  %v1041 = vld [vmem:[%s1 + $0x1f98] sm:$0xff]
  %v1042 = vld [vmem:[%s1 + $0x1fa0] sm:$0xff]
  %v1043 = vld [vmem:[%s1 + $0x1fa8] sm:$0xff]
  %v1044 = vld [vmem:[%s1 + $0x1fb0] sm:$0xff]
  %v1045 = vld [vmem:[%s1 + $0x1fb8] sm:$0xff]
  %v1046 = vld [vmem:[%s1 + $0x1fc0] sm:$0xff]
  %v1047 = vld [vmem:[%s1 + $0x1fc8] sm:$0xff]
  %v1048 = vld [vmem:[%s1 + $0x1fd0] sm:$0xff]
  %v1049 = vld [vmem:[%s1 + $0x1fd8] sm:$0xff]
  %v1050 = vld [vmem:[%s1 + $0x1fe0] sm:$0xff]
  %v1051 = vld [vmem:[%s1 + $0x1fe8] sm:$0xff]
  %v1052 = vld [vmem:[%s1 + $0x1ff0] sm:$0xff]
  %v1053 = vld [vmem:[%s1 + $0x1ff8] sm:$0xff]
  %v1054 = vld [vmem:[%s2] sm:$0xf]
  %v1056 = vperm.slane %v1054, 0
  %v1057 = vperm.slane %v1054, 1
  %v1058 = vperm.slane %v1054, 2
  %v1059 = vperm.slane %v1054, 3
  %1064 = vmatpush.msra.mxu0 %v90
  %1065 = vmatpush.msra.mxu0 %v86
  %1066 = vmatpush.msra.mxu0 %v82
  %1067 = vmatpush.msra.mxu0 %v78
  %1068 = vmatpush.msra.mxu0 %v74
  %1069 = vmatpush.msra.mxu0 %v70
  %1070 = vmatpush.msra.mxu0 %v66
  %1071 = vmatpush.msra.mxu0 %v62
  %1072 = vmatpush.msra.mxu0 %v58
  %1073 = vmatpush.msra.mxu0 %v54
  %1074 = vmatpush.msra.mxu0 %v50
  %1075 = vmatpush.msra.mxu0 %v46
  %1076 = vmatpush.msra.mxu0 %v42
  %1077 = vmatpush.msra.mxu0 %v38
  %1078 = vmatpush.msra.mxu0 %v34
  %1079 = vmatpush.msra.mxu0 %v30
  %1080 = vmatmul.f32.gmra.mxu0 %v14
  %v1081 = vpop.f32.mrf.mxu0
  %v1082 = vadd.f32 %v1056, %v1081
  %1083 = vdwg.mxu0
  %1084 = vmatpush.msra.mxu0 %v154
  %1085 = vmatpush.msra.mxu0 %v150
  %1086 = vmatpush.msra.mxu0 %v146
  %1087 = vmatpush.msra.mxu0 %v142
  %1088 = vmatpush.msra.mxu0 %v138
  %1089 = vmatpush.msra.mxu0 %v134
  %1090 = vmatpush.msra.mxu0 %v130
  %1091 = vmatpush.msra.mxu0 %v126
  %1092 = vmatpush.msra.mxu0 %v122
  %1093 = vmatpush.msra.mxu0 %v118
  %1094 = vmatpush.msra.mxu0 %v114
  %1095 = vmatpush.msra.mxu0 %v110
  %1096 = vmatpush.msra.mxu0 %v106
  %1097 = vmatpush.msra.mxu0 %v102
  %1098 = vmatpush.msra.mxu0 %v98
  %1099 = vmatpush.msra.mxu0 %v94
  %1100 = vmatmul.f32.gmra.mxu0 %v15
  %v1101 = vpop.f32.mrf.mxu0
  %v1102 = vadd.f32 %v1082, %v1101
  %1103 = vdwg.mxu0
  %1104 = vmatpush.msra.mxu0 %v218
  %1105 = vmatpush.msra.mxu0 %v214
  %1106 = vmatpush.msra.mxu0 %v210
  %1107 = vmatpush.msra.mxu0 %v206
  %1108 = vmatpush.msra.mxu0 %v202
  %1109 = vmatpush.msra.mxu0 %v198
  %1110 = vmatpush.msra.mxu0 %v194
  %1111 = vmatpush.msra.mxu0 %v190
  %1112 = vmatpush.msra.mxu0 %v186
  %1113 = vmatpush.msra.mxu0 %v182
  %1114 = vmatpush.msra.mxu0 %v178
  %1115 = vmatpush.msra.mxu0 %v174
  %1116 = vmatpush.msra.mxu0 %v170
  %1117 = vmatpush.msra.mxu0 %v166
  %1118 = vmatpush.msra.mxu0 %v162
  %1119 = vmatpush.msra.mxu0 %v158
  %1120 = vmatmul.f32.gmra.mxu0 %v16
  %v1121 = vpop.f32.mrf.mxu0
  %v1122 = vadd.f32 %v1102, %v1121
  %1123 = vdwg.mxu0
  %1124 = vmatpush.msra.mxu0 %v282
  %1125 = vmatpush.msra.mxu0 %v278
  %1126 = vmatpush.msra.mxu0 %v274
  %1127 = vmatpush.msra.mxu0 %v270
  %1128 = vmatpush.msra.mxu0 %v266
  %1129 = vmatpush.msra.mxu0 %v262
  %1130 = vmatpush.msra.mxu0 %v258
  %1131 = vmatpush.msra.mxu0 %v254
  %1132 = vmatpush.msra.mxu0 %v250
  %1133 = vmatpush.msra.mxu0 %v246
  %1134 = vmatpush.msra.mxu0 %v242
  %1135 = vmatpush.msra.mxu0 %v238
  %1136 = vmatpush.msra.mxu0 %v234
  %1137 = vmatpush.msra.mxu0 %v230
  %1138 = vmatpush.msra.mxu0 %v226
  %1139 = vmatpush.msra.mxu0 %v222
  %1140 = vmatmul.f32.gmra.mxu0 %v17
  %v1141 = vpop.f32.mrf.mxu0
  %v1142 = vadd.f32 %v1122, %v1141
  %1143 = vdwg.mxu0
  %1144 = vmatpush.msra.mxu0 %v346
  %1145 = vmatpush.msra.mxu0 %v342
  %1146 = vmatpush.msra.mxu0 %v338
  %1147 = vmatpush.msra.mxu0 %v334
  %1148 = vmatpush.msra.mxu0 %v330
  %1149 = vmatpush.msra.mxu0 %v326
  %1150 = vmatpush.msra.mxu0 %v322
  %1151 = vmatpush.msra.mxu0 %v318
  %1152 = vmatpush.msra.mxu0 %v314
  %1153 = vmatpush.msra.mxu0 %v310
  %1154 = vmatpush.msra.mxu0 %v306
  %1155 = vmatpush.msra.mxu0 %v302
  %1156 = vmatpush.msra.mxu0 %v298
  %1157 = vmatpush.msra.mxu0 %v294
  %1158 = vmatpush.msra.mxu0 %v290
  %1159 = vmatpush.msra.mxu0 %v286
  %1160 = vmatmul.f32.gmra.mxu0 %v18
  %v1161 = vpop.f32.mrf.mxu0
  %v1162 = vadd.f32 %v1142, %v1161
  %1163 = vdwg.mxu0
  %1164 = vmatpush.msra.mxu0 %v410
  %1165 = vmatpush.msra.mxu0 %v406
  %1166 = vmatpush.msra.mxu0 %v402
  %1167 = vmatpush.msra.mxu0 %v398
  %1168 = vmatpush.msra.mxu0 %v394
  %1169 = vmatpush.msra.mxu0 %v390
  %1170 = vmatpush.msra.mxu0 %v386
  %1171 = vmatpush.msra.mxu0 %v382
  %1172 = vmatpush.msra.mxu0 %v378
  %1173 = vmatpush.msra.mxu0 %v374
  %1174 = vmatpush.msra.mxu0 %v370
  %1175 = vmatpush.msra.mxu0 %v366
  %1176 = vmatpush.msra.mxu0 %v362
  %1177 = vmatpush.msra.mxu0 %v358
  %1178 = vmatpush.msra.mxu0 %v354
  %1179 = vmatpush.msra.mxu0 %v350
  %1180 = vmatmul.f32.gmra.mxu0 %v19
  %v1181 = vpop.f32.mrf.mxu0
  %v1182 = vadd.f32 %v1162, %v1181
  %1183 = vdwg.mxu0
  %1184 = vmatpush.msra.mxu0 %v474
  %1185 = vmatpush.msra.mxu0 %v470
  %1186 = vmatpush.msra.mxu0 %v466
  %1187 = vmatpush.msra.mxu0 %v462
  %1188 = vmatpush.msra.mxu0 %v458
  %1189 = vmatpush.msra.mxu0 %v454
  %1190 = vmatpush.msra.mxu0 %v450
  %1191 = vmatpush.msra.mxu0 %v446
  %1192 = vmatpush.msra.mxu0 %v442
  %1193 = vmatpush.msra.mxu0 %v438
  %1194 = vmatpush.msra.mxu0 %v434
  %1195 = vmatpush.msra.mxu0 %v430
  %1196 = vmatpush.msra.mxu0 %v426
  %1197 = vmatpush.msra.mxu0 %v422
  %1198 = vmatpush.msra.mxu0 %v418
  %1199 = vmatpush.msra.mxu0 %v414
  %1200 = vmatmul.f32.gmra.mxu0 %v20
  %v1201 = vpop.f32.mrf.mxu0
  %v1202 = vadd.f32 %v1182, %v1201
  %1203 = vdwg.mxu0
  %1204 = vmatpush.msra.mxu0 %v538
  %1205 = vmatpush.msra.mxu0 %v534
  %1206 = vmatpush.msra.mxu0 %v530
  %1207 = vmatpush.msra.mxu0 %v526
  %1208 = vmatpush.msra.mxu0 %v522
  %1209 = vmatpush.msra.mxu0 %v518
  %1210 = vmatpush.msra.mxu0 %v514
  %1211 = vmatpush.msra.mxu0 %v510
  %1212 = vmatpush.msra.mxu0 %v506
  %1213 = vmatpush.msra.mxu0 %v502
  %1214 = vmatpush.msra.mxu0 %v498
  %1215 = vmatpush.msra.mxu0 %v494
  %1216 = vmatpush.msra.mxu0 %v490
  %1217 = vmatpush.msra.mxu0 %v486
  %1218 = vmatpush.msra.mxu0 %v482
  %1219 = vmatpush.msra.mxu0 %v478
  %1220 = vmatmul.f32.gmra.mxu0 %v21
  %v1221 = vpop.f32.mrf.mxu0
  %v1222 = vadd.f32 %v1202, %v1221
  %1223 = vdwg.mxu0
  %1224 = vmatpush.msra.mxu0 %v602
  %1225 = vmatpush.msra.mxu0 %v598
  %1226 = vmatpush.msra.mxu0 %v594
  %1227 = vmatpush.msra.mxu0 %v590
  %1228 = vmatpush.msra.mxu0 %v586
  %1229 = vmatpush.msra.mxu0 %v582
  %1230 = vmatpush.msra.mxu0 %v578
  %1231 = vmatpush.msra.mxu0 %v574
  %1232 = vmatpush.msra.mxu0 %v570
  %1233 = vmatpush.msra.mxu0 %v566
  %1234 = vmatpush.msra.mxu0 %v562
  %1235 = vmatpush.msra.mxu0 %v558
  %1236 = vmatpush.msra.mxu0 %v554
  %1237 = vmatpush.msra.mxu0 %v550
  %1238 = vmatpush.msra.mxu0 %v546
  %1239 = vmatpush.msra.mxu0 %v542
  %1240 = vmatmul.f32.gmra.mxu0 %v22
  %v1241 = vpop.f32.mrf.mxu0
  %v1242 = vadd.f32 %v1222, %v1241
  %1243 = vdwg.mxu0
  %1244 = vmatpush.msra.mxu0 %v666
  %1245 = vmatpush.msra.mxu0 %v662
  %1246 = vmatpush.msra.mxu0 %v658
  %1247 = vmatpush.msra.mxu0 %v654
  %1248 = vmatpush.msra.mxu0 %v650
  %1249 = vmatpush.msra.mxu0 %v646
  %1250 = vmatpush.msra.mxu0 %v642
  %1251 = vmatpush.msra.mxu0 %v638
  %1252 = vmatpush.msra.mxu0 %v634
  %1253 = vmatpush.msra.mxu0 %v630
  %1254 = vmatpush.msra.mxu0 %v626
  %1255 = vmatpush.msra.mxu0 %v622
  %1256 = vmatpush.msra.mxu0 %v618
  %1257 = vmatpush.msra.mxu0 %v614
  %1258 = vmatpush.msra.mxu0 %v610
  %1259 = vmatpush.msra.mxu0 %v606
  %1260 = vmatmul.f32.gmra.mxu0 %v23
  %v1261 = vpop.f32.mrf.mxu0
  %v1262 = vadd.f32 %v1242, %v1261
  %1263 = vdwg.mxu0
  %1264 = vmatpush.msra.mxu0 %v730
  %1265 = vmatpush.msra.mxu0 %v726
  %1266 = vmatpush.msra.mxu0 %v722
  %1267 = vmatpush.msra.mxu0 %v718
  %1268 = vmatpush.msra.mxu0 %v714
  %1269 = vmatpush.msra.mxu0 %v710
  %1270 = vmatpush.msra.mxu0 %v706
  %1271 = vmatpush.msra.mxu0 %v702
  %1272 = vmatpush.msra.mxu0 %v698
  %1273 = vmatpush.msra.mxu0 %v694
  %1274 = vmatpush.msra.mxu0 %v690
  %1275 = vmatpush.msra.mxu0 %v686
  %1276 = vmatpush.msra.mxu0 %v682
  %1277 = vmatpush.msra.mxu0 %v678
  %1278 = vmatpush.msra.mxu0 %v674
  %1279 = vmatpush.msra.mxu0 %v670
  %1280 = vmatmul.f32.gmra.mxu0 %v24
  %v1281 = vpop.f32.mrf.mxu0
  %v1282 = vadd.f32 %v1262, %v1281
  %1283 = vdwg.mxu0
  %1284 = vmatpush.msra.mxu0 %v794
  %1285 = vmatpush.msra.mxu0 %v790
  %1286 = vmatpush.msra.mxu0 %v786
  %1287 = vmatpush.msra.mxu0 %v782
  %1288 = vmatpush.msra.mxu0 %v778
  %1289 = vmatpush.msra.mxu0 %v774
  %1290 = vmatpush.msra.mxu0 %v770
  %1291 = vmatpush.msra.mxu0 %v766
  %1292 = vmatpush.msra.mxu0 %v762
  %1293 = vmatpush.msra.mxu0 %v758
  %1294 = vmatpush.msra.mxu0 %v754
  %1295 = vmatpush.msra.mxu0 %v750
  %1296 = vmatpush.msra.mxu0 %v746
  %1297 = vmatpush.msra.mxu0 %v742
  %1298 = vmatpush.msra.mxu0 %v738
  %1299 = vmatpush.msra.mxu0 %v734
  %1300 = vmatmul.f32.gmra.mxu0 %v25
  %v1301 = vpop.f32.mrf.mxu0
  %v1302 = vadd.f32 %v1282, %v1301
  %1303 = vdwg.mxu0
  %1304 = vmatpush.msra.mxu0 %v858
  %1305 = vmatpush.msra.mxu0 %v854
  %1306 = vmatpush.msra.mxu0 %v850
  %1307 = vmatpush.msra.mxu0 %v846
  %1308 = vmatpush.msra.mxu0 %v842
  %1309 = vmatpush.msra.mxu0 %v838
  %1310 = vmatpush.msra.mxu0 %v834
  %1311 = vmatpush.msra.mxu0 %v830
  %1312 = vmatpush.msra.mxu0 %v826
  %1313 = vmatpush.msra.mxu0 %v822
  %1314 = vmatpush.msra.mxu0 %v818
  %1315 = vmatpush.msra.mxu0 %v814
  %1316 = vmatpush.msra.mxu0 %v810
  %1317 = vmatpush.msra.mxu0 %v806
  %1318 = vmatpush.msra.mxu0 %v802
  %1319 = vmatpush.msra.mxu0 %v798
  %1320 = vmatmul.f32.gmra.mxu0 %v26
  %v1321 = vpop.f32.mrf.mxu0
  %v1322 = vadd.f32 %v1302, %v1321
  %1323 = vdwg.mxu0
  %1324 = vmatpush.msra.mxu0 %v922
  %1325 = vmatpush.msra.mxu0 %v918
  %1326 = vmatpush.msra.mxu0 %v914
  %1327 = vmatpush.msra.mxu0 %v910
  %1328 = vmatpush.msra.mxu0 %v906
  %1329 = vmatpush.msra.mxu0 %v902
  %1330 = vmatpush.msra.mxu0 %v898
  %1331 = vmatpush.msra.mxu0 %v894
  %1332 = vmatpush.msra.mxu0 %v890
  %1333 = vmatpush.msra.mxu0 %v886
  %1334 = vmatpush.msra.mxu0 %v882
  %1335 = vmatpush.msra.mxu0 %v878
  %1336 = vmatpush.msra.mxu0 %v874
  %1337 = vmatpush.msra.mxu0 %v870
  %1338 = vmatpush.msra.mxu0 %v866
  %1339 = vmatpush.msra.mxu0 %v862
  %1340 = vmatmul.f32.gmra.mxu0 %v27
  %v1341 = vpop.f32.mrf.mxu0
  %v1342 = vadd.f32 %v1322, %v1341
  %1343 = vdwg.mxu0
  %1344 = vmatpush.msra.mxu0 %v986
  %1345 = vmatpush.msra.mxu0 %v982
  %1346 = vmatpush.msra.mxu0 %v978
  %1347 = vmatpush.msra.mxu0 %v974
  %1348 = vmatpush.msra.mxu0 %v970
  %1349 = vmatpush.msra.mxu0 %v966
  %1350 = vmatpush.msra.mxu0 %v962
  %1351 = vmatpush.msra.mxu0 %v958
  %1352 = vmatpush.msra.mxu0 %v954
  %1353 = vmatpush.msra.mxu0 %v950
  %1354 = vmatpush.msra.mxu0 %v946
  %1355 = vmatpush.msra.mxu0 %v942
  %1356 = vmatpush.msra.mxu0 %v938
  %1357 = vmatpush.msra.mxu0 %v934
  %1358 = vmatpush.msra.mxu0 %v930
  %1359 = vmatpush.msra.mxu0 %v926
  %1360 = vmatmul.f32.gmra.mxu0 %v28
  %v1361 = vpop.f32.mrf.mxu0
  %v1362 = vadd.f32 %v1342, %v1361
  %1363 = vdwg.mxu0
  %1364 = vmatpush.msra.mxu0 %v1050
  %1365 = vmatpush.msra.mxu0 %v1046
  %1366 = vmatpush.msra.mxu0 %v1042
  %1367 = vmatpush.msra.mxu0 %v1038
  %1368 = vmatpush.msra.mxu0 %v1034
  %1369 = vmatpush.msra.mxu0 %v1030
  %1370 = vmatpush.msra.mxu0 %v1026
  %1371 = vmatpush.msra.mxu0 %v1022
  %1372 = vmatpush.msra.mxu0 %v1018
  %1373 = vmatpush.msra.mxu0 %v1014
  %1374 = vmatpush.msra.mxu0 %v1010
  %1375 = vmatpush.msra.mxu0 %v1006
  %1376 = vmatpush.msra.mxu0 %v1002
  %1377 = vmatpush.msra.mxu0 %v998
  %1378 = vmatpush.msra.mxu0 %v994
  %1379 = vmatpush.msra.mxu0 %v990
  %1380 = vmatmul.f32.gmra.mxu0 %v29
  %v1381 = vpop.f32.mrf.mxu0
  %v1382 = vadd.f32 %v1362, %v1381
  %1383 = vdwg.mxu0
  %1384 = vmatpush.msra.mxu0 %v91
  %1385 = vmatpush.msra.mxu0 %v87
  %1386 = vmatpush.msra.mxu0 %v83
  %1387 = vmatpush.msra.mxu0 %v79
  %1388 = vmatpush.msra.mxu0 %v75
  %1389 = vmatpush.msra.mxu0 %v71
  %1390 = vmatpush.msra.mxu0 %v67
  %1391 = vmatpush.msra.mxu0 %v63
  %1392 = vmatpush.msra.mxu0 %v59
  %1393 = vmatpush.msra.mxu0 %v55
  %1394 = vmatpush.msra.mxu0 %v51
  %1395 = vmatpush.msra.mxu0 %v47
  %1396 = vmatpush.msra.mxu0 %v43
  %1397 = vmatpush.msra.mxu0 %v39
  %1398 = vmatpush.msra.mxu0 %v35
  %1399 = vmatpush.msra.mxu0 %v31
  %1400 = vmatmul.f32.gmra.mxu0 %v14
  %v1401 = vpop.f32.mrf.mxu0
  %v1402 = vadd.f32 %v1057, %v1401
  %1403 = vdwg.mxu0
  %1404 = vmatpush.msra.mxu0 %v155
  %1405 = vmatpush.msra.mxu0 %v151
  %1406 = vmatpush.msra.mxu0 %v147
  %1407 = vmatpush.msra.mxu0 %v143
  %1408 = vmatpush.msra.mxu0 %v139
  %1409 = vmatpush.msra.mxu0 %v135
  %1410 = vmatpush.msra.mxu0 %v131
  %1411 = vmatpush.msra.mxu0 %v127
  %1412 = vmatpush.msra.mxu0 %v123
  %1413 = vmatpush.msra.mxu0 %v119
  %1414 = vmatpush.msra.mxu0 %v115
  %1415 = vmatpush.msra.mxu0 %v111
  %1416 = vmatpush.msra.mxu0 %v107
  %1417 = vmatpush.msra.mxu0 %v103
  %1418 = vmatpush.msra.mxu0 %v99
  %1419 = vmatpush.msra.mxu0 %v95
  %1420 = vmatmul.f32.gmra.mxu0 %v15
  %v1421 = vpop.f32.mrf.mxu0
  %v1422 = vadd.f32 %v1402, %v1421
  %1423 = vdwg.mxu0
  %1424 = vmatpush.msra.mxu0 %v219
  %1425 = vmatpush.msra.mxu0 %v215
  %1426 = vmatpush.msra.mxu0 %v211
  %1427 = vmatpush.msra.mxu0 %v207
  %1428 = vmatpush.msra.mxu0 %v203
  %1429 = vmatpush.msra.mxu0 %v199
  %1430 = vmatpush.msra.mxu0 %v195
  %1431 = vmatpush.msra.mxu0 %v191
  %1432 = vmatpush.msra.mxu0 %v187
  %1433 = vmatpush.msra.mxu0 %v183
  %1434 = vmatpush.msra.mxu0 %v179
  %1435 = vmatpush.msra.mxu0 %v175
  %1436 = vmatpush.msra.mxu0 %v171
  %1437 = vmatpush.msra.mxu0 %v167
  %1438 = vmatpush.msra.mxu0 %v163
  %1439 = vmatpush.msra.mxu0 %v159
  %1440 = vmatmul.f32.gmra.mxu0 %v16
  %v1441 = vpop.f32.mrf.mxu0
  %v1442 = vadd.f32 %v1422, %v1441
  %1443 = vdwg.mxu0
  %1444 = vmatpush.msra.mxu0 %v283
  %1445 = vmatpush.msra.mxu0 %v279
  %1446 = vmatpush.msra.mxu0 %v275
  %1447 = vmatpush.msra.mxu0 %v271
  %1448 = vmatpush.msra.mxu0 %v267
  %1449 = vmatpush.msra.mxu0 %v263
  %1450 = vmatpush.msra.mxu0 %v259
  %1451 = vmatpush.msra.mxu0 %v255
  %1452 = vmatpush.msra.mxu0 %v251
  %1453 = vmatpush.msra.mxu0 %v247
  %1454 = vmatpush.msra.mxu0 %v243
  %1455 = vmatpush.msra.mxu0 %v239
  %1456 = vmatpush.msra.mxu0 %v235
  %1457 = vmatpush.msra.mxu0 %v231
  %1458 = vmatpush.msra.mxu0 %v227
  %1459 = vmatpush.msra.mxu0 %v223
  %1460 = vmatmul.f32.gmra.mxu0 %v17
  %v1461 = vpop.f32.mrf.mxu0
  %v1462 = vadd.f32 %v1442, %v1461
  %1463 = vdwg.mxu0
  %1464 = vmatpush.msra.mxu0 %v347
  %1465 = vmatpush.msra.mxu0 %v343
  %1466 = vmatpush.msra.mxu0 %v339
  %1467 = vmatpush.msra.mxu0 %v335
  %1468 = vmatpush.msra.mxu0 %v331
  %1469 = vmatpush.msra.mxu0 %v327
  %1470 = vmatpush.msra.mxu0 %v323
  %1471 = vmatpush.msra.mxu0 %v319
  %1472 = vmatpush.msra.mxu0 %v315
  %1473 = vmatpush.msra.mxu0 %v311
  %1474 = vmatpush.msra.mxu0 %v307
  %1475 = vmatpush.msra.mxu0 %v303
  %1476 = vmatpush.msra.mxu0 %v299
  %1477 = vmatpush.msra.mxu0 %v295
  %1478 = vmatpush.msra.mxu0 %v291
  %1479 = vmatpush.msra.mxu0 %v287
  %1480 = vmatmul.f32.gmra.mxu0 %v18
  %v1481 = vpop.f32.mrf.mxu0
  %v1482 = vadd.f32 %v1462, %v1481
  %1483 = vdwg.mxu0
  %1484 = vmatpush.msra.mxu0 %v411
  %1485 = vmatpush.msra.mxu0 %v407
  %1486 = vmatpush.msra.mxu0 %v403
  %1487 = vmatpush.msra.mxu0 %v399
  %1488 = vmatpush.msra.mxu0 %v395
  %1489 = vmatpush.msra.mxu0 %v391
  %1490 = vmatpush.msra.mxu0 %v387
  %1491 = vmatpush.msra.mxu0 %v383
  %1492 = vmatpush.msra.mxu0 %v379
  %1493 = vmatpush.msra.mxu0 %v375
  %1494 = vmatpush.msra.mxu0 %v371
  %1495 = vmatpush.msra.mxu0 %v367
  %1496 = vmatpush.msra.mxu0 %v363
  %1497 = vmatpush.msra.mxu0 %v359
  %1498 = vmatpush.msra.mxu0 %v355
  %1499 = vmatpush.msra.mxu0 %v351
  %1500 = vmatmul.f32.gmra.mxu0 %v19
  %v1501 = vpop.f32.mrf.mxu0
  %v1502 = vadd.f32 %v1482, %v1501
  %1503 = vdwg.mxu0
  %1504 = vmatpush.msra.mxu0 %v475
  %1505 = vmatpush.msra.mxu0 %v471
  %1506 = vmatpush.msra.mxu0 %v467
  %1507 = vmatpush.msra.mxu0 %v463
  %1508 = vmatpush.msra.mxu0 %v459
  %1509 = vmatpush.msra.mxu0 %v455
  %1510 = vmatpush.msra.mxu0 %v451
  %1511 = vmatpush.msra.mxu0 %v447
  %1512 = vmatpush.msra.mxu0 %v443
  %1513 = vmatpush.msra.mxu0 %v439
  %1514 = vmatpush.msra.mxu0 %v435
  %1515 = vmatpush.msra.mxu0 %v431
  %1516 = vmatpush.msra.mxu0 %v427
  %1517 = vmatpush.msra.mxu0 %v423
  %1518 = vmatpush.msra.mxu0 %v419
  %1519 = vmatpush.msra.mxu0 %v415
  %1520 = vmatmul.f32.gmra.mxu0 %v20
  %v1521 = vpop.f32.mrf.mxu0
  %v1522 = vadd.f32 %v1502, %v1521
  %1523 = vdwg.mxu0
  %1524 = vmatpush.msra.mxu0 %v539
  %1525 = vmatpush.msra.mxu0 %v535
  %1526 = vmatpush.msra.mxu0 %v531
  %1527 = vmatpush.msra.mxu0 %v527
  %1528 = vmatpush.msra.mxu0 %v523
  %1529 = vmatpush.msra.mxu0 %v519
  %1530 = vmatpush.msra.mxu0 %v515
  %1531 = vmatpush.msra.mxu0 %v511
  %1532 = vmatpush.msra.mxu0 %v507
  %1533 = vmatpush.msra.mxu0 %v503
  %1534 = vmatpush.msra.mxu0 %v499
  %1535 = vmatpush.msra.mxu0 %v495
  %1536 = vmatpush.msra.mxu0 %v491
  %1537 = vmatpush.msra.mxu0 %v487
  %1538 = vmatpush.msra.mxu0 %v483
  %1539 = vmatpush.msra.mxu0 %v479
  %1540 = vmatmul.f32.gmra.mxu0 %v21
  %v1541 = vpop.f32.mrf.mxu0
  %v1542 = vadd.f32 %v1522, %v1541
  %1543 = vdwg.mxu0
  %1544 = vmatpush.msra.mxu0 %v603
  %1545 = vmatpush.msra.mxu0 %v599
  %1546 = vmatpush.msra.mxu0 %v595
  %1547 = vmatpush.msra.mxu0 %v591
  %1548 = vmatpush.msra.mxu0 %v587
  %1549 = vmatpush.msra.mxu0 %v583
  %1550 = vmatpush.msra.mxu0 %v579
  %1551 = vmatpush.msra.mxu0 %v575
  %1552 = vmatpush.msra.mxu0 %v571
  %1553 = vmatpush.msra.mxu0 %v567
  %1554 = vmatpush.msra.mxu0 %v563
  %1555 = vmatpush.msra.mxu0 %v559
  %1556 = vmatpush.msra.mxu0 %v555
  %1557 = vmatpush.msra.mxu0 %v551
  %1558 = vmatpush.msra.mxu0 %v547
  %1559 = vmatpush.msra.mxu0 %v543
  %1560 = vmatmul.f32.gmra.mxu0 %v22
  %v1561 = vpop.f32.mrf.mxu0
  %v1562 = vadd.f32 %v1542, %v1561
  %1563 = vdwg.mxu0
  %1564 = vmatpush.msra.mxu0 %v667
  %1565 = vmatpush.msra.mxu0 %v663
  %1566 = vmatpush.msra.mxu0 %v659
  %1567 = vmatpush.msra.mxu0 %v655
  %1568 = vmatpush.msra.mxu0 %v651
  %1569 = vmatpush.msra.mxu0 %v647
  %1570 = vmatpush.msra.mxu0 %v643
  %1571 = vmatpush.msra.mxu0 %v639
  %1572 = vmatpush.msra.mxu0 %v635
  %1573 = vmatpush.msra.mxu0 %v631
  %1574 = vmatpush.msra.mxu0 %v627
  %1575 = vmatpush.msra.mxu0 %v623
  %1576 = vmatpush.msra.mxu0 %v619
  %1577 = vmatpush.msra.mxu0 %v615
  %1578 = vmatpush.msra.mxu0 %v611
  %1579 = vmatpush.msra.mxu0 %v607
  %1580 = vmatmul.f32.gmra.mxu0 %v23
  %v1581 = vpop.f32.mrf.mxu0
  %v1582 = vadd.f32 %v1562, %v1581
  %1583 = vdwg.mxu0
  %1584 = vmatpush.msra.mxu0 %v731
  %1585 = vmatpush.msra.mxu0 %v727
  %1586 = vmatpush.msra.mxu0 %v723
  %1587 = vmatpush.msra.mxu0 %v719
  %1588 = vmatpush.msra.mxu0 %v715
  %1589 = vmatpush.msra.mxu0 %v711
  %1590 = vmatpush.msra.mxu0 %v707
  %1591 = vmatpush.msra.mxu0 %v703
  %1592 = vmatpush.msra.mxu0 %v699
  %1593 = vmatpush.msra.mxu0 %v695
  %1594 = vmatpush.msra.mxu0 %v691
  %1595 = vmatpush.msra.mxu0 %v687
  %1596 = vmatpush.msra.mxu0 %v683
  %1597 = vmatpush.msra.mxu0 %v679
  %1598 = vmatpush.msra.mxu0 %v675
  %1599 = vmatpush.msra.mxu0 %v671
  %1600 = vmatmul.f32.gmra.mxu0 %v24
  %v1601 = vpop.f32.mrf.mxu0
  %v1602 = vadd.f32 %v1582, %v1601
  %1603 = vdwg.mxu0
  %1604 = vmatpush.msra.mxu0 %v795
  %1605 = vmatpush.msra.mxu0 %v791
  %1606 = vmatpush.msra.mxu0 %v787
  %1607 = vmatpush.msra.mxu0 %v783
  %1608 = vmatpush.msra.mxu0 %v779
  %1609 = vmatpush.msra.mxu0 %v775
  %1610 = vmatpush.msra.mxu0 %v771
  %1611 = vmatpush.msra.mxu0 %v767
  %1612 = vmatpush.msra.mxu0 %v763
  %1613 = vmatpush.msra.mxu0 %v759
  %1614 = vmatpush.msra.mxu0 %v755
  %1615 = vmatpush.msra.mxu0 %v751
  %1616 = vmatpush.msra.mxu0 %v747
  %1617 = vmatpush.msra.mxu0 %v743
  %1618 = vmatpush.msra.mxu0 %v739
  %1619 = vmatpush.msra.mxu0 %v735
  %1620 = vmatmul.f32.gmra.mxu0 %v25
  %v1621 = vpop.f32.mrf.mxu0
  %v1622 = vadd.f32 %v1602, %v1621
  %1623 = vdwg.mxu0
  %1624 = vmatpush.msra.mxu0 %v859
  %1625 = vmatpush.msra.mxu0 %v855
  %1626 = vmatpush.msra.mxu0 %v851
  %1627 = vmatpush.msra.mxu0 %v847
  %1628 = vmatpush.msra.mxu0 %v843
  %1629 = vmatpush.msra.mxu0 %v839
  %1630 = vmatpush.msra.mxu0 %v835
  %1631 = vmatpush.msra.mxu0 %v831
  %1632 = vmatpush.msra.mxu0 %v827
  %1633 = vmatpush.msra.mxu0 %v823
  %1634 = vmatpush.msra.mxu0 %v819
  %1635 = vmatpush.msra.mxu0 %v815
  %1636 = vmatpush.msra.mxu0 %v811
  %1637 = vmatpush.msra.mxu0 %v807
  %1638 = vmatpush.msra.mxu0 %v803
  %1639 = vmatpush.msra.mxu0 %v799
  %1640 = vmatmul.f32.gmra.mxu0 %v26
  %v1641 = vpop.f32.mrf.mxu0
  %v1642 = vadd.f32 %v1622, %v1641
  %1643 = vdwg.mxu0
  %1644 = vmatpush.msra.mxu0 %v923
  %1645 = vmatpush.msra.mxu0 %v919
  %1646 = vmatpush.msra.mxu0 %v915
  %1647 = vmatpush.msra.mxu0 %v911
  %1648 = vmatpush.msra.mxu0 %v907
  %1649 = vmatpush.msra.mxu0 %v903
  %1650 = vmatpush.msra.mxu0 %v899
  %1651 = vmatpush.msra.mxu0 %v895
  %1652 = vmatpush.msra.mxu0 %v891
  %1653 = vmatpush.msra.mxu0 %v887
  %1654 = vmatpush.msra.mxu0 %v883
  %1655 = vmatpush.msra.mxu0 %v879
  %1656 = vmatpush.msra.mxu0 %v875
  %1657 = vmatpush.msra.mxu0 %v871
  %1658 = vmatpush.msra.mxu0 %v867
  %1659 = vmatpush.msra.mxu0 %v863
  %1660 = vmatmul.f32.gmra.mxu0 %v27
  %v1661 = vpop.f32.mrf.mxu0
  %v1662 = vadd.f32 %v1642, %v1661
  %1663 = vdwg.mxu0
  %1664 = vmatpush.msra.mxu0 %v987
  %1665 = vmatpush.msra.mxu0 %v983
  %1666 = vmatpush.msra.mxu0 %v979
  %1667 = vmatpush.msra.mxu0 %v975
  %1668 = vmatpush.msra.mxu0 %v971
  %1669 = vmatpush.msra.mxu0 %v967
  %1670 = vmatpush.msra.mxu0 %v963
  %1671 = vmatpush.msra.mxu0 %v959
  %1672 = vmatpush.msra.mxu0 %v955
  %1673 = vmatpush.msra.mxu0 %v951
  %1674 = vmatpush.msra.mxu0 %v947
  %1675 = vmatpush.msra.mxu0 %v943
  %1676 = vmatpush.msra.mxu0 %v939
  %1677 = vmatpush.msra.mxu0 %v935
  %1678 = vmatpush.msra.mxu0 %v931
  %1679 = vmatpush.msra.mxu0 %v927
  %1680 = vmatmul.f32.gmra.mxu0 %v28
  %v1681 = vpop.f32.mrf.mxu0
  %v1682 = vadd.f32 %v1662, %v1681
  %1683 = vdwg.mxu0
  %1684 = vmatpush.msra.mxu0 %v1051
  %1685 = vmatpush.msra.mxu0 %v1047
  %1686 = vmatpush.msra.mxu0 %v1043
  %1687 = vmatpush.msra.mxu0 %v1039
  %1688 = vmatpush.msra.mxu0 %v1035
  %1689 = vmatpush.msra.mxu0 %v1031
  %1690 = vmatpush.msra.mxu0 %v1027
  %1691 = vmatpush.msra.mxu0 %v1023
  %1692 = vmatpush.msra.mxu0 %v1019
  %1693 = vmatpush.msra.mxu0 %v1015
  %1694 = vmatpush.msra.mxu0 %v1011
  %1695 = vmatpush.msra.mxu0 %v1007
  %1696 = vmatpush.msra.mxu0 %v1003
  %1697 = vmatpush.msra.mxu0 %v999
  %1698 = vmatpush.msra.mxu0 %v995
  %1699 = vmatpush.msra.mxu0 %v991
  %1700 = vmatmul.f32.gmra.mxu0 %v29
  %v1701 = vpop.f32.mrf.mxu0
  %v1702 = vadd.f32 %v1682, %v1701
  %1703 = vdwg.mxu0
  %1704 = vmatpush.msra.mxu0 %v92
  %1705 = vmatpush.msra.mxu0 %v88
  %1706 = vmatpush.msra.mxu0 %v84
  %1707 = vmatpush.msra.mxu0 %v80
  %1708 = vmatpush.msra.mxu0 %v76
  %1709 = vmatpush.msra.mxu0 %v72
  %1710 = vmatpush.msra.mxu0 %v68
  %1711 = vmatpush.msra.mxu0 %v64
  %1712 = vmatpush.msra.mxu0 %v60
  %1713 = vmatpush.msra.mxu0 %v56
  %1714 = vmatpush.msra.mxu0 %v52
  %1715 = vmatpush.msra.mxu0 %v48
  %1716 = vmatpush.msra.mxu0 %v44
  %1717 = vmatpush.msra.mxu0 %v40
  %1718 = vmatpush.msra.mxu0 %v36
  %1719 = vmatpush.msra.mxu0 %v32
  %1720 = vmatmul.f32.gmra.mxu0 %v14
  %v1721 = vpop.f32.mrf.mxu0
  %v1722 = vadd.f32 %v1058, %v1721
  %1723 = vdwg.mxu0
  %1724 = vmatpush.msra.mxu0 %v156
  %1725 = vmatpush.msra.mxu0 %v152
  %1726 = vmatpush.msra.mxu0 %v148
  %1727 = vmatpush.msra.mxu0 %v144
  %1728 = vmatpush.msra.mxu0 %v140
  %1729 = vmatpush.msra.mxu0 %v136
  %1730 = vmatpush.msra.mxu0 %v132
  %1731 = vmatpush.msra.mxu0 %v128
  %1732 = vmatpush.msra.mxu0 %v124
  %1733 = vmatpush.msra.mxu0 %v120
  %1734 = vmatpush.msra.mxu0 %v116
  %1735 = vmatpush.msra.mxu0 %v112
  %1736 = vmatpush.msra.mxu0 %v108
  %1737 = vmatpush.msra.mxu0 %v104
  %1738 = vmatpush.msra.mxu0 %v100
  %1739 = vmatpush.msra.mxu0 %v96
  %1740 = vmatmul.f32.gmra.mxu0 %v15
  %v1741 = vpop.f32.mrf.mxu0
  %v1742 = vadd.f32 %v1722, %v1741
  %1743 = vdwg.mxu0
  %1744 = vmatpush.msra.mxu0 %v220
  %1745 = vmatpush.msra.mxu0 %v216
  %1746 = vmatpush.msra.mxu0 %v212
  %1747 = vmatpush.msra.mxu0 %v208
  %1748 = vmatpush.msra.mxu0 %v204
  %1749 = vmatpush.msra.mxu0 %v200
  %1750 = vmatpush.msra.mxu0 %v196
  %1751 = vmatpush.msra.mxu0 %v192
  %1752 = vmatpush.msra.mxu0 %v188
  %1753 = vmatpush.msra.mxu0 %v184
  %1754 = vmatpush.msra.mxu0 %v180
  %1755 = vmatpush.msra.mxu0 %v176
  %1756 = vmatpush.msra.mxu0 %v172
  %1757 = vmatpush.msra.mxu0 %v168
  %1758 = vmatpush.msra.mxu0 %v164
  %1759 = vmatpush.msra.mxu0 %v160
  %1760 = vmatmul.f32.gmra.mxu0 %v16
  %v1761 = vpop.f32.mrf.mxu0
  %v1762 = vadd.f32 %v1742, %v1761
  %1763 = vdwg.mxu0
  %1764 = vmatpush.msra.mxu0 %v284
  %1765 = vmatpush.msra.mxu0 %v280
  %1766 = vmatpush.msra.mxu0 %v276
  %1767 = vmatpush.msra.mxu0 %v272
  %1768 = vmatpush.msra.mxu0 %v268
  %1769 = vmatpush.msra.mxu0 %v264
  %1770 = vmatpush.msra.mxu0 %v260
  %1771 = vmatpush.msra.mxu0 %v256
  %1772 = vmatpush.msra.mxu0 %v252
  %1773 = vmatpush.msra.mxu0 %v248
  %1774 = vmatpush.msra.mxu0 %v244
  %1775 = vmatpush.msra.mxu0 %v240
  %1776 = vmatpush.msra.mxu0 %v236
  %1777 = vmatpush.msra.mxu0 %v232
  %1778 = vmatpush.msra.mxu0 %v228
  %1779 = vmatpush.msra.mxu0 %v224
  %1780 = vmatmul.f32.gmra.mxu0 %v17
  %v1781 = vpop.f32.mrf.mxu0
  %v1782 = vadd.f32 %v1762, %v1781
  %1783 = vdwg.mxu0
  %1784 = vmatpush.msra.mxu0 %v348
  %1785 = vmatpush.msra.mxu0 %v344
  %1786 = vmatpush.msra.mxu0 %v340
  %1787 = vmatpush.msra.mxu0 %v336
  %1788 = vmatpush.msra.mxu0 %v332
  %1789 = vmatpush.msra.mxu0 %v328
  %1790 = vmatpush.msra.mxu0 %v324
  %1791 = vmatpush.msra.mxu0 %v320
  %1792 = vmatpush.msra.mxu0 %v316
  %1793 = vmatpush.msra.mxu0 %v312
  %1794 = vmatpush.msra.mxu0 %v308
  %1795 = vmatpush.msra.mxu0 %v304
  %1796 = vmatpush.msra.mxu0 %v300
  %1797 = vmatpush.msra.mxu0 %v296
  %1798 = vmatpush.msra.mxu0 %v292
  %1799 = vmatpush.msra.mxu0 %v288
  %1800 = vmatmul.f32.gmra.mxu0 %v18
  %v1801 = vpop.f32.mrf.mxu0
  %v1802 = vadd.f32 %v1782, %v1801
  %1803 = vdwg.mxu0
  %1804 = vmatpush.msra.mxu0 %v412
  %1805 = vmatpush.msra.mxu0 %v408
  %1806 = vmatpush.msra.mxu0 %v404
  %1807 = vmatpush.msra.mxu0 %v400
  %1808 = vmatpush.msra.mxu0 %v396
  %1809 = vmatpush.msra.mxu0 %v392
  %1810 = vmatpush.msra.mxu0 %v388
  %1811 = vmatpush.msra.mxu0 %v384
  %1812 = vmatpush.msra.mxu0 %v380
  %1813 = vmatpush.msra.mxu0 %v376
  %1814 = vmatpush.msra.mxu0 %v372
  %1815 = vmatpush.msra.mxu0 %v368
  %1816 = vmatpush.msra.mxu0 %v364
  %1817 = vmatpush.msra.mxu0 %v360
  %1818 = vmatpush.msra.mxu0 %v356
  %1819 = vmatpush.msra.mxu0 %v352
  %1820 = vmatmul.f32.gmra.mxu0 %v19
  %v1821 = vpop.f32.mrf.mxu0
  %v1822 = vadd.f32 %v1802, %v1821
  %1823 = vdwg.mxu0
  %1824 = vmatpush.msra.mxu0 %v476
  %1825 = vmatpush.msra.mxu0 %v472
  %1826 = vmatpush.msra.mxu0 %v468
  %1827 = vmatpush.msra.mxu0 %v464
  %1828 = vmatpush.msra.mxu0 %v460
  %1829 = vmatpush.msra.mxu0 %v456
  %1830 = vmatpush.msra.mxu0 %v452
  %1831 = vmatpush.msra.mxu0 %v448
  %1832 = vmatpush.msra.mxu0 %v444
  %1833 = vmatpush.msra.mxu0 %v440
  %1834 = vmatpush.msra.mxu0 %v436
  %1835 = vmatpush.msra.mxu0 %v432
  %1836 = vmatpush.msra.mxu0 %v428
  %1837 = vmatpush.msra.mxu0 %v424
  %1838 = vmatpush.msra.mxu0 %v420
  %1839 = vmatpush.msra.mxu0 %v416
  %1840 = vmatmul.f32.gmra.mxu0 %v20
  %v1841 = vpop.f32.mrf.mxu0
  %v1842 = vadd.f32 %v1822, %v1841
  %1843 = vdwg.mxu0
  %1844 = vmatpush.msra.mxu0 %v540
  %1845 = vmatpush.msra.mxu0 %v536
  %1846 = vmatpush.msra.mxu0 %v532
  %1847 = vmatpush.msra.mxu0 %v528
  %1848 = vmatpush.msra.mxu0 %v524
  %1849 = vmatpush.msra.mxu0 %v520
  %1850 = vmatpush.msra.mxu0 %v516
  %1851 = vmatpush.msra.mxu0 %v512
  %1852 = vmatpush.msra.mxu0 %v508
  %1853 = vmatpush.msra.mxu0 %v504
  %1854 = vmatpush.msra.mxu0 %v500
  %1855 = vmatpush.msra.mxu0 %v496
  %1856 = vmatpush.msra.mxu0 %v492
  %1857 = vmatpush.msra.mxu0 %v488
  %1858 = vmatpush.msra.mxu0 %v484
  %1859 = vmatpush.msra.mxu0 %v480
  %1860 = vmatmul.f32.gmra.mxu0 %v21
  %v1861 = vpop.f32.mrf.mxu0
  %v1862 = vadd.f32 %v1842, %v1861
  %1863 = vdwg.mxu0
  %1864 = vmatpush.msra.mxu0 %v604
  %1865 = vmatpush.msra.mxu0 %v600
  %1866 = vmatpush.msra.mxu0 %v596
  %1867 = vmatpush.msra.mxu0 %v592
  %1868 = vmatpush.msra.mxu0 %v588
  %1869 = vmatpush.msra.mxu0 %v584
  %1870 = vmatpush.msra.mxu0 %v580
  %1871 = vmatpush.msra.mxu0 %v576
  %1872 = vmatpush.msra.mxu0 %v572
  %1873 = vmatpush.msra.mxu0 %v568
  %1874 = vmatpush.msra.mxu0 %v564
  %1875 = vmatpush.msra.mxu0 %v560
  %1876 = vmatpush.msra.mxu0 %v556
  %1877 = vmatpush.msra.mxu0 %v552
  %1878 = vmatpush.msra.mxu0 %v548
  %1879 = vmatpush.msra.mxu0 %v544
  %1880 = vmatmul.f32.gmra.mxu0 %v22
  %v1881 = vpop.f32.mrf.mxu0
  %v1882 = vadd.f32 %v1862, %v1881
  %1883 = vdwg.mxu0
  %1884 = vmatpush.msra.mxu0 %v668
  %1885 = vmatpush.msra.mxu0 %v664
  %1886 = vmatpush.msra.mxu0 %v660
  %1887 = vmatpush.msra.mxu0 %v656
  %1888 = vmatpush.msra.mxu0 %v652
  %1889 = vmatpush.msra.mxu0 %v648
  %1890 = vmatpush.msra.mxu0 %v644
  %1891 = vmatpush.msra.mxu0 %v640
  %1892 = vmatpush.msra.mxu0 %v636
  %1893 = vmatpush.msra.mxu0 %v632
  %1894 = vmatpush.msra.mxu0 %v628
  %1895 = vmatpush.msra.mxu0 %v624
  %1896 = vmatpush.msra.mxu0 %v620
  %1897 = vmatpush.msra.mxu0 %v616
  %1898 = vmatpush.msra.mxu0 %v612
  %1899 = vmatpush.msra.mxu0 %v608
  %1900 = vmatmul.f32.gmra.mxu0 %v23
  %v1901 = vpop.f32.mrf.mxu0
  %v1902 = vadd.f32 %v1882, %v1901
  %1903 = vdwg.mxu0
  %1904 = vmatpush.msra.mxu0 %v732
  %1905 = vmatpush.msra.mxu0 %v728
  %1906 = vmatpush.msra.mxu0 %v724
  %1907 = vmatpush.msra.mxu0 %v720
  %1908 = vmatpush.msra.mxu0 %v716
  %1909 = vmatpush.msra.mxu0 %v712
  %1910 = vmatpush.msra.mxu0 %v708
  %1911 = vmatpush.msra.mxu0 %v704
  %1912 = vmatpush.msra.mxu0 %v700
  %1913 = vmatpush.msra.mxu0 %v696
  %1914 = vmatpush.msra.mxu0 %v692
  %1915 = vmatpush.msra.mxu0 %v688
  %1916 = vmatpush.msra.mxu0 %v684
  %1917 = vmatpush.msra.mxu0 %v680
  %1918 = vmatpush.msra.mxu0 %v676
  %1919 = vmatpush.msra.mxu0 %v672
  %1920 = vmatmul.f32.gmra.mxu0 %v24
  %v1921 = vpop.f32.mrf.mxu0
  %v1922 = vadd.f32 %v1902, %v1921
  %1923 = vdwg.mxu0
  %1924 = vmatpush.msra.mxu0 %v796
  %1925 = vmatpush.msra.mxu0 %v792
  %1926 = vmatpush.msra.mxu0 %v788
  %1927 = vmatpush.msra.mxu0 %v784
  %1928 = vmatpush.msra.mxu0 %v780
  %1929 = vmatpush.msra.mxu0 %v776
  %1930 = vmatpush.msra.mxu0 %v772
  %1931 = vmatpush.msra.mxu0 %v768
  %1932 = vmatpush.msra.mxu0 %v764
  %1933 = vmatpush.msra.mxu0 %v760
  %1934 = vmatpush.msra.mxu0 %v756
  %1935 = vmatpush.msra.mxu0 %v752
  %1936 = vmatpush.msra.mxu0 %v748
  %1937 = vmatpush.msra.mxu0 %v744
  %1938 = vmatpush.msra.mxu0 %v740
  %1939 = vmatpush.msra.mxu0 %v736
  %1940 = vmatmul.f32.gmra.mxu0 %v25
  %v1941 = vpop.f32.mrf.mxu0
  %v1942 = vadd.f32 %v1922, %v1941
  %1943 = vdwg.mxu0
  %1944 = vmatpush.msra.mxu0 %v860
  %1945 = vmatpush.msra.mxu0 %v856
  %1946 = vmatpush.msra.mxu0 %v852
  %1947 = vmatpush.msra.mxu0 %v848
  %1948 = vmatpush.msra.mxu0 %v844
  %1949 = vmatpush.msra.mxu0 %v840
  %1950 = vmatpush.msra.mxu0 %v836
  %1951 = vmatpush.msra.mxu0 %v832
  %1952 = vmatpush.msra.mxu0 %v828
  %1953 = vmatpush.msra.mxu0 %v824
  %1954 = vmatpush.msra.mxu0 %v820
  %1955 = vmatpush.msra.mxu0 %v816
  %1956 = vmatpush.msra.mxu0 %v812
  %1957 = vmatpush.msra.mxu0 %v808
  %1958 = vmatpush.msra.mxu0 %v804
  %1959 = vmatpush.msra.mxu0 %v800
  %1960 = vmatmul.f32.gmra.mxu0 %v26
  %v1961 = vpop.f32.mrf.mxu0
  %v1962 = vadd.f32 %v1942, %v1961
  %1963 = vdwg.mxu0
  %1964 = vmatpush.msra.mxu0 %v924
  %1965 = vmatpush.msra.mxu0 %v920
  %1966 = vmatpush.msra.mxu0 %v916
  %1967 = vmatpush.msra.mxu0 %v912
  %1968 = vmatpush.msra.mxu0 %v908
  %1969 = vmatpush.msra.mxu0 %v904
  %1970 = vmatpush.msra.mxu0 %v900
  %1971 = vmatpush.msra.mxu0 %v896
  %1972 = vmatpush.msra.mxu0 %v892
  %1973 = vmatpush.msra.mxu0 %v888
  %1974 = vmatpush.msra.mxu0 %v884
  %1975 = vmatpush.msra.mxu0 %v880
  %1976 = vmatpush.msra.mxu0 %v876
  %1977 = vmatpush.msra.mxu0 %v872
  %1978 = vmatpush.msra.mxu0 %v868
  %1979 = vmatpush.msra.mxu0 %v864
  %1980 = vmatmul.f32.gmra.mxu0 %v27
  %v1981 = vpop.f32.mrf.mxu0
  %v1982 = vadd.f32 %v1962, %v1981
  %1983 = vdwg.mxu0
  %1984 = vmatpush.msra.mxu0 %v988
  %1985 = vmatpush.msra.mxu0 %v984
  %1986 = vmatpush.msra.mxu0 %v980
  %1987 = vmatpush.msra.mxu0 %v976
  %1988 = vmatpush.msra.mxu0 %v972
  %1989 = vmatpush.msra.mxu0 %v968
  %1990 = vmatpush.msra.mxu0 %v964
  %1991 = vmatpush.msra.mxu0 %v960
  %1992 = vmatpush.msra.mxu0 %v956
  %1993 = vmatpush.msra.mxu0 %v952
  %1994 = vmatpush.msra.mxu0 %v948
  %1995 = vmatpush.msra.mxu0 %v944
  %1996 = vmatpush.msra.mxu0 %v940
  %1997 = vmatpush.msra.mxu0 %v936
  %1998 = vmatpush.msra.mxu0 %v932
  %1999 = vmatpush.msra.mxu0 %v928
  %2000 = vmatmul.f32.gmra.mxu0 %v28
  %v2001 = vpop.f32.mrf.mxu0
  %v2002 = vadd.f32 %v1982, %v2001
  %2003 = vdwg.mxu0
  %2004 = vmatpush.msra.mxu0 %v1052
  %2005 = vmatpush.msra.mxu0 %v1048
  %2006 = vmatpush.msra.mxu0 %v1044
  %2007 = vmatpush.msra.mxu0 %v1040
  %2008 = vmatpush.msra.mxu0 %v1036
  %2009 = vmatpush.msra.mxu0 %v1032
  %2010 = vmatpush.msra.mxu0 %v1028
  %2011 = vmatpush.msra.mxu0 %v1024
  %2012 = vmatpush.msra.mxu0 %v1020
  %2013 = vmatpush.msra.mxu0 %v1016
  %2014 = vmatpush.msra.mxu0 %v1012
  %2015 = vmatpush.msra.mxu0 %v1008
  %2016 = vmatpush.msra.mxu0 %v1004
  %2017 = vmatpush.msra.mxu0 %v1000
  %2018 = vmatpush.msra.mxu0 %v996
  %2019 = vmatpush.msra.mxu0 %v992
  %2020 = vmatmul.f32.gmra.mxu0 %v29
  %v2021 = vpop.f32.mrf.mxu0
  %v2022 = vadd.f32 %v2002, %v2021
  %2023 = vdwg.mxu0
  %2024 = vmatpush.msra.mxu0 %v93
  %2025 = vmatpush.msra.mxu0 %v89
  %2026 = vmatpush.msra.mxu0 %v85
  %2027 = vmatpush.msra.mxu0 %v81
  %2028 = vmatpush.msra.mxu0 %v77
  %2029 = vmatpush.msra.mxu0 %v73
  %2030 = vmatpush.msra.mxu0 %v69
  %2031 = vmatpush.msra.mxu0 %v65
  %2032 = vmatpush.msra.mxu0 %v61
  %2033 = vmatpush.msra.mxu0 %v57
  %2034 = vmatpush.msra.mxu0 %v53
  %2035 = vmatpush.msra.mxu0 %v49
  %2036 = vmatpush.msra.mxu0 %v45
  %2037 = vmatpush.msra.mxu0 %v41
  %2038 = vmatpush.msra.mxu0 %v37
  %2039 = vmatpush.msra.mxu0 %v33
  %2040 = vmatmul.f32.gmra.mxu0 %v14
  %v2041 = vpop.f32.mrf.mxu0
  %v2042 = vadd.f32 %v1059, %v2041
  %2043 = vdwg.mxu0
  %2044 = vmatpush.msra.mxu0 %v157
  %2045 = vmatpush.msra.mxu0 %v153
  %2046 = vmatpush.msra.mxu0 %v149
  %2047 = vmatpush.msra.mxu0 %v145
  %2048 = vmatpush.msra.mxu0 %v141
  %2049 = vmatpush.msra.mxu0 %v137
  %2050 = vmatpush.msra.mxu0 %v133
  %2051 = vmatpush.msra.mxu0 %v129
  %2052 = vmatpush.msra.mxu0 %v125
  %2053 = vmatpush.msra.mxu0 %v121
  %2054 = vmatpush.msra.mxu0 %v117
  %2055 = vmatpush.msra.mxu0 %v113
  %2056 = vmatpush.msra.mxu0 %v109
  %2057 = vmatpush.msra.mxu0 %v105
  %2058 = vmatpush.msra.mxu0 %v101
  %2059 = vmatpush.msra.mxu0 %v97
  %2060 = vmatmul.f32.gmra.mxu0 %v15
  %v2061 = vpop.f32.mrf.mxu0
  %v2062 = vadd.f32 %v2042, %v2061
  %2063 = vdwg.mxu0
  %2064 = vmatpush.msra.mxu0 %v221
  %2065 = vmatpush.msra.mxu0 %v217
  %2066 = vmatpush.msra.mxu0 %v213
  %2067 = vmatpush.msra.mxu0 %v209
  %2068 = vmatpush.msra.mxu0 %v205
  %2069 = vmatpush.msra.mxu0 %v201
  %2070 = vmatpush.msra.mxu0 %v197
  %2071 = vmatpush.msra.mxu0 %v193
  %2072 = vmatpush.msra.mxu0 %v189
  %2073 = vmatpush.msra.mxu0 %v185
  %2074 = vmatpush.msra.mxu0 %v181
  %2075 = vmatpush.msra.mxu0 %v177
  %2076 = vmatpush.msra.mxu0 %v173
  %2077 = vmatpush.msra.mxu0 %v169
  %2078 = vmatpush.msra.mxu0 %v165
  %2079 = vmatpush.msra.mxu0 %v161
  %2080 = vmatmul.f32.gmra.mxu0 %v16
  %v2081 = vpop.f32.mrf.mxu0
  %v2082 = vadd.f32 %v2062, %v2081
  %2083 = vdwg.mxu0
  %2084 = vmatpush.msra.mxu0 %v285
  %2085 = vmatpush.msra.mxu0 %v281
  %2086 = vmatpush.msra.mxu0 %v277
  %2087 = vmatpush.msra.mxu0 %v273
  %2088 = vmatpush.msra.mxu0 %v269
  %2089 = vmatpush.msra.mxu0 %v265
  %2090 = vmatpush.msra.mxu0 %v261
  %2091 = vmatpush.msra.mxu0 %v257
  %2092 = vmatpush.msra.mxu0 %v253
  %2093 = vmatpush.msra.mxu0 %v249
  %2094 = vmatpush.msra.mxu0 %v245
  %2095 = vmatpush.msra.mxu0 %v241
  %2096 = vmatpush.msra.mxu0 %v237
  %2097 = vmatpush.msra.mxu0 %v233
  %2098 = vmatpush.msra.mxu0 %v229
  %2099 = vmatpush.msra.mxu0 %v225
  %2100 = vmatmul.f32.gmra.mxu0 %v17
  %v2101 = vpop.f32.mrf.mxu0
  %v2102 = vadd.f32 %v2082, %v2101
  %2103 = vdwg.mxu0
  %2104 = vmatpush.msra.mxu0 %v349
  %2105 = vmatpush.msra.mxu0 %v345
  %2106 = vmatpush.msra.mxu0 %v341
  %2107 = vmatpush.msra.mxu0 %v337
  %2108 = vmatpush.msra.mxu0 %v333
  %2109 = vmatpush.msra.mxu0 %v329
  %2110 = vmatpush.msra.mxu0 %v325
  %2111 = vmatpush.msra.mxu0 %v321
  %2112 = vmatpush.msra.mxu0 %v317
  %2113 = vmatpush.msra.mxu0 %v313
  %2114 = vmatpush.msra.mxu0 %v309
  %2115 = vmatpush.msra.mxu0 %v305
  %2116 = vmatpush.msra.mxu0 %v301
  %2117 = vmatpush.msra.mxu0 %v297
  %2118 = vmatpush.msra.mxu0 %v293
  %2119 = vmatpush.msra.mxu0 %v289
  %2120 = vmatmul.f32.gmra.mxu0 %v18
  %v2121 = vpop.f32.mrf.mxu0
  %v2122 = vadd.f32 %v2102, %v2121
  %2123 = vdwg.mxu0
  %2124 = vmatpush.msra.mxu0 %v413
  %2125 = vmatpush.msra.mxu0 %v409
  %2126 = vmatpush.msra.mxu0 %v405
  %2127 = vmatpush.msra.mxu0 %v401
  %2128 = vmatpush.msra.mxu0 %v397
  %2129 = vmatpush.msra.mxu0 %v393
  %2130 = vmatpush.msra.mxu0 %v389
  %2131 = vmatpush.msra.mxu0 %v385
  %2132 = vmatpush.msra.mxu0 %v381
  %2133 = vmatpush.msra.mxu0 %v377
  %2134 = vmatpush.msra.mxu0 %v373
  %2135 = vmatpush.msra.mxu0 %v369
  %2136 = vmatpush.msra.mxu0 %v365
  %2137 = vmatpush.msra.mxu0 %v361
  %2138 = vmatpush.msra.mxu0 %v357
  %2139 = vmatpush.msra.mxu0 %v353
  %2140 = vmatmul.f32.gmra.mxu0 %v19
  %v2141 = vpop.f32.mrf.mxu0
  %v2142 = vadd.f32 %v2122, %v2141
  %2143 = vdwg.mxu0
  %2144 = vmatpush.msra.mxu0 %v477
  %2145 = vmatpush.msra.mxu0 %v473
  %2146 = vmatpush.msra.mxu0 %v469
  %2147 = vmatpush.msra.mxu0 %v465
  %2148 = vmatpush.msra.mxu0 %v461
  %2149 = vmatpush.msra.mxu0 %v457
  %2150 = vmatpush.msra.mxu0 %v453
  %2151 = vmatpush.msra.mxu0 %v449
  %2152 = vmatpush.msra.mxu0 %v445
  %2153 = vmatpush.msra.mxu0 %v441
  %2154 = vmatpush.msra.mxu0 %v437
  %2155 = vmatpush.msra.mxu0 %v433
  %2156 = vmatpush.msra.mxu0 %v429
  %2157 = vmatpush.msra.mxu0 %v425
  %2158 = vmatpush.msra.mxu0 %v421
  %2159 = vmatpush.msra.mxu0 %v417
  %2160 = vmatmul.f32.gmra.mxu0 %v20
  %v2161 = vpop.f32.mrf.mxu0
  %v2162 = vadd.f32 %v2142, %v2161
  %2163 = vdwg.mxu0
  %2164 = vmatpush.msra.mxu0 %v541
  %2165 = vmatpush.msra.mxu0 %v537
  %2166 = vmatpush.msra.mxu0 %v533
  %2167 = vmatpush.msra.mxu0 %v529
  %2168 = vmatpush.msra.mxu0 %v525
  %2169 = vmatpush.msra.mxu0 %v521
  %2170 = vmatpush.msra.mxu0 %v517
  %2171 = vmatpush.msra.mxu0 %v513
  %2172 = vmatpush.msra.mxu0 %v509
  %2173 = vmatpush.msra.mxu0 %v505
  %2174 = vmatpush.msra.mxu0 %v501
  %2175 = vmatpush.msra.mxu0 %v497
  %2176 = vmatpush.msra.mxu0 %v493
  %2177 = vmatpush.msra.mxu0 %v489
  %2178 = vmatpush.msra.mxu0 %v485
  %2179 = vmatpush.msra.mxu0 %v481
  %2180 = vmatmul.f32.gmra.mxu0 %v21
  %v2181 = vpop.f32.mrf.mxu0
  %v2182 = vadd.f32 %v2162, %v2181
  %2183 = vdwg.mxu0
  %2184 = vmatpush.msra.mxu0 %v605
  %2185 = vmatpush.msra.mxu0 %v601
  %2186 = vmatpush.msra.mxu0 %v597
  %2187 = vmatpush.msra.mxu0 %v593
  %2188 = vmatpush.msra.mxu0 %v589
  %2189 = vmatpush.msra.mxu0 %v585
  %2190 = vmatpush.msra.mxu0 %v581
  %2191 = vmatpush.msra.mxu0 %v577
  %2192 = vmatpush.msra.mxu0 %v573
  %2193 = vmatpush.msra.mxu0 %v569
  %2194 = vmatpush.msra.mxu0 %v565
  %2195 = vmatpush.msra.mxu0 %v561
  %2196 = vmatpush.msra.mxu0 %v557
  %2197 = vmatpush.msra.mxu0 %v553
  %2198 = vmatpush.msra.mxu0 %v549
  %2199 = vmatpush.msra.mxu0 %v545
  %2200 = vmatmul.f32.gmra.mxu0 %v22
  %v2201 = vpop.f32.mrf.mxu0
  %v2202 = vadd.f32 %v2182, %v2201
  %2203 = vdwg.mxu0
  %2204 = vmatpush.msra.mxu0 %v669
  %2205 = vmatpush.msra.mxu0 %v665
  %2206 = vmatpush.msra.mxu0 %v661
  %2207 = vmatpush.msra.mxu0 %v657
  %2208 = vmatpush.msra.mxu0 %v653
  %2209 = vmatpush.msra.mxu0 %v649
  %2210 = vmatpush.msra.mxu0 %v645
  %2211 = vmatpush.msra.mxu0 %v641
  %2212 = vmatpush.msra.mxu0 %v637
  %2213 = vmatpush.msra.mxu0 %v633
  %2214 = vmatpush.msra.mxu0 %v629
  %2215 = vmatpush.msra.mxu0 %v625
  %2216 = vmatpush.msra.mxu0 %v621
  %2217 = vmatpush.msra.mxu0 %v617
  %2218 = vmatpush.msra.mxu0 %v613
  %2219 = vmatpush.msra.mxu0 %v609
  %2220 = vmatmul.f32.gmra.mxu0 %v23
  %v2221 = vpop.f32.mrf.mxu0
  %v2222 = vadd.f32 %v2202, %v2221
  %2223 = vdwg.mxu0
  %2224 = vmatpush.msra.mxu0 %v733
  %2225 = vmatpush.msra.mxu0 %v729
  %2226 = vmatpush.msra.mxu0 %v725
  %2227 = vmatpush.msra.mxu0 %v721
  %2228 = vmatpush.msra.mxu0 %v717
  %2229 = vmatpush.msra.mxu0 %v713
  %2230 = vmatpush.msra.mxu0 %v709
  %2231 = vmatpush.msra.mxu0 %v705
  %2232 = vmatpush.msra.mxu0 %v701
  %2233 = vmatpush.msra.mxu0 %v697
  %2234 = vmatpush.msra.mxu0 %v693
  %2235 = vmatpush.msra.mxu0 %v689
  %2236 = vmatpush.msra.mxu0 %v685
  %2237 = vmatpush.msra.mxu0 %v681
  %2238 = vmatpush.msra.mxu0 %v677
  %2239 = vmatpush.msra.mxu0 %v673
  %2240 = vmatmul.f32.gmra.mxu0 %v24
  %v2241 = vpop.f32.mrf.mxu0
  %v2242 = vadd.f32 %v2222, %v2241
  %2243 = vdwg.mxu0
  %2244 = vmatpush.msra.mxu0 %v797
  %2245 = vmatpush.msra.mxu0 %v793
  %2246 = vmatpush.msra.mxu0 %v789
  %2247 = vmatpush.msra.mxu0 %v785
  %2248 = vmatpush.msra.mxu0 %v781
  %2249 = vmatpush.msra.mxu0 %v777
  %2250 = vmatpush.msra.mxu0 %v773
  %2251 = vmatpush.msra.mxu0 %v769
  %2252 = vmatpush.msra.mxu0 %v765
  %2253 = vmatpush.msra.mxu0 %v761
  %2254 = vmatpush.msra.mxu0 %v757
  %2255 = vmatpush.msra.mxu0 %v753
  %2256 = vmatpush.msra.mxu0 %v749
  %2257 = vmatpush.msra.mxu0 %v745
  %2258 = vmatpush.msra.mxu0 %v741
  %2259 = vmatpush.msra.mxu0 %v737
  %2260 = vmatmul.f32.gmra.mxu0 %v25
  %v2261 = vpop.f32.mrf.mxu0
  %v2262 = vadd.f32 %v2242, %v2261
  %2263 = vdwg.mxu0
  %2264 = vmatpush.msra.mxu0 %v861
  %2265 = vmatpush.msra.mxu0 %v857
  %2266 = vmatpush.msra.mxu0 %v853
  %2267 = vmatpush.msra.mxu0 %v849
  %2268 = vmatpush.msra.mxu0 %v845
  %2269 = vmatpush.msra.mxu0 %v841
  %2270 = vmatpush.msra.mxu0 %v837
  %2271 = vmatpush.msra.mxu0 %v833
  %2272 = vmatpush.msra.mxu0 %v829
  %2273 = vmatpush.msra.mxu0 %v825
  %2274 = vmatpush.msra.mxu0 %v821
  %2275 = vmatpush.msra.mxu0 %v817
  %2276 = vmatpush.msra.mxu0 %v813
  %2277 = vmatpush.msra.mxu0 %v809
  %2278 = vmatpush.msra.mxu0 %v805
  %2279 = vmatpush.msra.mxu0 %v801
  %2280 = vmatmul.f32.gmra.mxu0 %v26
  %v2281 = vpop.f32.mrf.mxu0
  %v2282 = vadd.f32 %v2262, %v2281
  %2283 = vdwg.mxu0
  %2284 = vmatpush.msra.mxu0 %v925
  %2285 = vmatpush.msra.mxu0 %v921
  %2286 = vmatpush.msra.mxu0 %v917
  %2287 = vmatpush.msra.mxu0 %v913
  %2288 = vmatpush.msra.mxu0 %v909
  %2289 = vmatpush.msra.mxu0 %v905
  %2290 = vmatpush.msra.mxu0 %v901
  %2291 = vmatpush.msra.mxu0 %v897
  %2292 = vmatpush.msra.mxu0 %v893
  %2293 = vmatpush.msra.mxu0 %v889
  %2294 = vmatpush.msra.mxu0 %v885
  %2295 = vmatpush.msra.mxu0 %v881
  %2296 = vmatpush.msra.mxu0 %v877
  %2297 = vmatpush.msra.mxu0 %v873
  %2298 = vmatpush.msra.mxu0 %v869
  %2299 = vmatpush.msra.mxu0 %v865
  %2300 = vmatmul.f32.gmra.mxu0 %v27
  %v2301 = vpop.f32.mrf.mxu0
  %v2302 = vadd.f32 %v2282, %v2301
  %2303 = vdwg.mxu0
  %2304 = vmatpush.msra.mxu0 %v989
  %2305 = vmatpush.msra.mxu0 %v985
  %2306 = vmatpush.msra.mxu0 %v981
  %2307 = vmatpush.msra.mxu0 %v977
  %2308 = vmatpush.msra.mxu0 %v973
  %2309 = vmatpush.msra.mxu0 %v969
  %2310 = vmatpush.msra.mxu0 %v965
  %2311 = vmatpush.msra.mxu0 %v961
  %2312 = vmatpush.msra.mxu0 %v957
  %2313 = vmatpush.msra.mxu0 %v953
  %2314 = vmatpush.msra.mxu0 %v949
  %2315 = vmatpush.msra.mxu0 %v945
  %2316 = vmatpush.msra.mxu0 %v941
  %2317 = vmatpush.msra.mxu0 %v937
  %2318 = vmatpush.msra.mxu0 %v933
  %2319 = vmatpush.msra.mxu0 %v929
  %2320 = vmatmul.f32.gmra.mxu0 %v28
  %v2321 = vpop.f32.mrf.mxu0
  %v2322 = vadd.f32 %v2302, %v2321
  %2323 = vdwg.mxu0
  %2324 = vmatpush.msra.mxu0 %v1053
  %2325 = vmatpush.msra.mxu0 %v1049
  %2326 = vmatpush.msra.mxu0 %v1045
  %2327 = vmatpush.msra.mxu0 %v1041
  %2328 = vmatpush.msra.mxu0 %v1037
  %2329 = vmatpush.msra.mxu0 %v1033
  %2330 = vmatpush.msra.mxu0 %v1029
  %2331 = vmatpush.msra.mxu0 %v1025
  %2332 = vmatpush.msra.mxu0 %v1021
  %2333 = vmatpush.msra.mxu0 %v1017
  %2334 = vmatpush.msra.mxu0 %v1013
  %2335 = vmatpush.msra.mxu0 %v1009
  %2336 = vmatpush.msra.mxu0 %v1005
  %2337 = vmatpush.msra.mxu0 %v1001
  %2338 = vmatpush.msra.mxu0 %v997
  %2339 = vmatpush.msra.mxu0 %v993
  %2340 = vmatmul.f32.gmra.mxu0 %v29
  %v2341 = vpop.f32.mrf.mxu0
  %v2342 = vadd.f32 %v2322, %v2341
  %2343 = vdwg.mxu0
  %v2344 = vmax.f32 %v1382, 0.0
  %v2345 = vmax.f32 %v1702, 0.0
  %v2346 = vmax.f32 %v2022, 0.0
  %v2347 = vmax.f32 %v2342, 0.0
  %2348 = vst [vmem:[%s3] sm:$0xff] %v2344
  %2349 = vst [vmem:[%s3 + $0x8] sm:$0xff] %v2345
  %2350 = vst [vmem:[%s3 + $0x10] sm:$0xff] %v2346
  %2351 = vst [vmem:[%s3 + $0x18] sm:$0xff] %v2347
  // Predicated region
  $region14: #{cnn_forward.6} parent=0 // pred_check
    _
  $region15: #{cnn_forward.6} parent=0 // pred_check_branch
    %2353 = sbr.rel (0) target = $region17
  $region16: #{cnn_forward.6} parent=0 // pred_region
    _
  $region17: #{cnn_forward.6} parent=0 // pred_fallthru
    _
  // Predicated region
  $region18: #{cnn_forward.6} parent=0 // pred_check
    _
  $region19: #{cnn_forward.6} parent=0 // pred_check_branch
    %2355 = sbr.rel (0) target = $region21
  $region20: #{cnn_forward.6} parent=0 // pred_region
    _
  $region21: #{cnn_forward.6} parent=0 // pred_fallthru
    _

</llo_original>
